<compile_context>
chip_gen: v6e
topology: v6e:2x2x1
jax: 0.10.0
libtpu: 0.0.40
codegen_flags: <defaults>
</compile_context>

<pallas_src>
import functools

import jax
import jax.numpy as jnp
from jax import lax
from jax.experimental import pallas as pl
from jax.experimental.pallas import tpu as pltpu


def recovery_net_kernel(x_ref, w_ih_ref, w_hh_ref, b_ih_ref, b_hh_ref,
                        w_out_ref, b_out_ref, y_ref, h_out_ref, hrelu_ref):
    """GRU recurrence + ReLU + Linear head, all in VMEM.

    x_ref:     (T, B, I)      time-major input (B padded to a multiple of 8)
    w_ih_ref:  (3, I, H)      input->gate weights, gate order r, z, n (right-mult)
    w_hh_ref:  (3, H, H)      hidden->gate weights (right-mult)
    b_ih_ref:  (3, 1, H)
    b_hh_ref:  (3, 1, H)
    w_out_ref: (H, O_pad)     output Linear weight (right-mult, lane-padded)
    b_out_ref: (1, O_pad)
    y_ref:     (T, B, O_pad)  output_layer(relu(rnnout))
    h_out_ref: (B, H)         final hidden state
    hrelu_ref: (T, B, H)      VMEM scratch staging relu(h_t)
    """
    T, B, _I = x_ref.shape
    H = w_hh_ref.shape[1]

    # --- load gate weights once (aligned per-gate tiles, no lane-offset slicing)
    w_ih_r, w_ih_z, w_ih_n = w_ih_ref[0], w_ih_ref[1], w_ih_ref[2]
    w_hh_r, w_hh_z, w_hh_n = w_hh_ref[0], w_hh_ref[1], w_hh_ref[2]

    # --- fold biases once (r/z gates: b_ih + b_hh can be merged; n gate cannot,
    #     because b_hh_n sits inside the r * (.) term in the PyTorch GRU).
    b_r = b_ih_ref[0] + b_hh_ref[0]                       # (1, H)
    b_z = b_ih_ref[1] + b_hh_ref[1]                       # (1, H)
    b_in = b_ih_ref[2]                                    # (1, H)
    b_hn = jnp.broadcast_to(b_hh_ref[2], (B, H))          # hoisted broadcast

    # --- hoisted input projection: one batched matmul per gate, off the serial path
    x_flat = x_ref[...].reshape(T * B, _I)                # (T*B, I)
    gi_r = (jnp.dot(x_flat, w_ih_r, preferred_element_type=jnp.float32)
            + b_r).reshape(T, B, H)
    gi_z = (jnp.dot(x_flat, w_ih_z, preferred_element_type=jnp.float32)
            + b_z).reshape(T, B, H)
    gi_n = (jnp.dot(x_flat, w_ih_n, preferred_element_type=jnp.float32)
            + b_in).reshape(T, B, H)

    # --- recurrence: only h @ W_hh per gate stays on the serial critical path.
    #     T is static & small -> fully unrolled static loop.
    h = jnp.zeros((B, H), dtype=jnp.float32)
    for t in range(T):
        gh_r = jnp.dot(h, w_hh_r, preferred_element_type=jnp.float32)
        gh_z = jnp.dot(h, w_hh_z, preferred_element_type=jnp.float32)
        gh_n = jnp.dot(h, w_hh_n, preferred_element_type=jnp.float32) + b_hn
        r = jax.nn.sigmoid(gi_r[t] + gh_r)
        z = jax.nn.sigmoid(gi_z[t] + gh_z)
        n = jnp.tanh(gi_n[t] + r * gh_n)
        h = (1.0 - z) * n + z * h
        hrelu_ref[t] = jax.nn.relu(h)                     # stage for the output head

    h_out_ref[...] = h

    # --- output head: one big matmul + one lane-dense bulk store
    hr = hrelu_ref[...].reshape(T * B, H)                 # (T*B, H)
    y = (jnp.dot(hr, w_out_ref[...], preferred_element_type=jnp.float32)
         + b_out_ref[...])                                # (T*B, O_pad)
    y_ref[...] = y.reshape(T, B, w_out_ref.shape[1])


def _round_up(v, m):
    return ((v + m - 1) // m) * m


@jax.jit
def recovery_net_forward(x, params):
    """x: (batch, input_size, time_steps)  ->  (y, hidden)

    y:      (batch, time_steps, num_outputs)
    hidden: (1, batch, state_size)          (PyTorch GRU hidden convention)
    """
    B, I, T = x.shape
    H = params["w_hh"].shape[1]       # (3H, H) -> H
    O = params["w_out"].shape[0]      # (O, H)  -> O

    B_pad = _round_up(B, 8)           # sublane granularity
    O_pad = _round_up(O, 128)         # lane-dense output slab

    # glue: layout / padding of inputs and parameters (one-time, outside the kernel)
    x_tbi = jnp.transpose(x, (2, 0, 1)).astype(jnp.float32)            # (T, B, I)
    x_pad = jnp.pad(x_tbi, ((0, 0), (0, B_pad - B), (0, 0)))           # (T, Bp, I)

    # (3H, I) -> (3, H, I) -> (3, I, H)   gate order r, z, n (PyTorch GRU)
    w_ih_g = jnp.transpose(params["w_ih"].reshape(3, H, I), (0, 2, 1)).astype(jnp.float32)
    w_hh_g = jnp.transpose(params["w_hh"].reshape(3, H, H), (0, 2, 1)).astype(jnp.float32)
    b_ih_g = params["b_ih"].reshape(3, 1, H).astype(jnp.float32)
    b_hh_g = params["b_hh"].reshape(3, 1, H).astype(jnp.float32)

    w_out_t = jnp.transpose(params["w_out"]).astype(jnp.float32)        # (H, O)
    w_out_p = jnp.pad(w_out_t, ((0, 0), (0, O_pad - O)))                # (H, O_pad)
    b_out_p = jnp.pad(params["b_out"].astype(jnp.float32),
                      ((0, O_pad - O),)).reshape(1, O_pad)

    flops = (2 * T * B_pad * I * 3 * H        # hoisted input projections
             + 2 * T * B_pad * H * 3 * H      # recurrence matmuls
             + 2 * T * B_pad * H * O_pad)     # output head
    transcendentals = 3 * T * B_pad * H
    bytes_accessed = 4 * (x_pad.size + w_ih_g.size + w_hh_g.size + b_ih_g.size
                          + b_hh_g.size + w_out_p.size + b_out_p.size
                          + T * B_pad * O_pad + B_pad * H)

    y_tbo, h_final = pl.pallas_call(
        recovery_net_kernel,
        out_shape=(
            jax.ShapeDtypeStruct((T, B_pad, O_pad), jnp.float32),
            jax.ShapeDtypeStruct((B_pad, H), jnp.float32),
        ),
        in_specs=[pl.BlockSpec(memory_space=pltpu.MemorySpace.VMEM)] * 7,
        out_specs=(
            pl.BlockSpec(memory_space=pltpu.MemorySpace.VMEM),
            pl.BlockSpec(memory_space=pltpu.MemorySpace.VMEM),
        ),
        scratch_shapes=[pltpu.VMEM((T, B_pad, H), jnp.float32)],
        cost_estimate=pl.CostEstimate(flops=flops,
                                      transcendentals=transcendentals,
                                      bytes_accessed=bytes_accessed),
    )(x_pad, w_ih_g, w_hh_g, b_ih_g, b_hh_g, w_out_p, b_out_p)

    y = jnp.transpose(y_tbo, (1, 0, 2))[:B, :, :O]        # (B, T, O)
    hidden = h_final[None, :B, :]                         # (1, B, H)
    return y, hidden


def reference_forward(x, params):
    """Pure-JAX reference matching torch.nn.GRU(batch_first=True) + Linear."""
    B, I, T = x.shape
    H = params["w_hh"].shape[1]
    w_ih, w_hh = params["w_ih"], params["w_hh"]
    b_ih, b_hh = params["b_ih"], params["b_hh"]
    x_tbi = jnp.transpose(x, (2, 0, 1)).astype(jnp.float32)

    def step(h, x_t):
        gi = x_t @ w_ih.T + b_ih
        gh = h @ w_hh.T + b_hh
        r = jax.nn.sigmoid(gi[:, :H] + gh[:, :H])
        z = jax.nn.sigmoid(gi[:, H:2 * H] + gh[:, H:2 * H])
        n = jnp.tanh(gi[:, 2 * H:] + r * gh[:, 2 * H:])
        h_new = (1.0 - z) * n + z * h
        return h_new, h_new

    h0 = jnp.zeros((B, H), jnp.float32)
    h_final, hs = lax.scan(step, h0, x_tbi)
    rnnout = jnp.transpose(hs, (1, 0, 2))                 # (B, T, H)
    y = jax.nn.relu(rnnout) @ params["w_out"].T + params["b_out"]
    return y, h_final[None]


def init_params(key, input_size, state_size, num_outputs):
    """Deterministic synthetic parameters matching nn.GRU / nn.Linear shapes."""
    k1, k2, k3, k4, k5, k6 = jax.random.split(key, 6)
    gru_bound = 1.0 / jnp.sqrt(jnp.float32(state_size))
    lin_bound = 1.0 / jnp.sqrt(jnp.float32(state_size))
    u = lambda k, shape, b: jax.random.uniform(k, shape, jnp.float32, -b, b)
    return {
        "w_ih": u(k1, (3 * state_size, input_size), gru_bound),   # weight_ih_l0
        "w_hh": u(k2, (3 * state_size, state_size), gru_bound),   # weight_hh_l0
        "b_ih": u(k3, (3 * state_size,), gru_bound),              # bias_ih_l0
        "b_hh": u(k4, (3 * state_size,), gru_bound),              # bias_hh_l0
        "w_out": u(k5, (num_outputs, state_size), lin_bound),     # Linear.weight
        "b_out": u(k6, (num_outputs,), lin_bound),                # Linear.bias
    }


if __name__ == "__main__":
    # x: (batch, input_size, time_steps) — matches RecoveryNet.forward's input.
    batch, input_size, state_size, num_outputs, time_steps = 2, 4, 32, 4, 8

    root = jax.random.PRNGKey(0)
    kx, kp = jax.random.split(root)
    x = jax.random.normal(kx, (batch, input_size, time_steps), dtype=jnp.float32)
    params = init_params(kp, input_size, state_size, num_outputs)

    y, hidden = recovery_net_forward(x, params)
    jax.block_until_ready((y, hidden))

    assert y.shape == (batch, time_steps, num_outputs)
    assert hidden.shape == (1, batch, state_size)

    # correctness check against a pure-JAX reference of the same GRU math
    y_ref, h_ref = reference_forward(x, params)
    assert jnp.allclose(y, y_ref, atol=1e-5, rtol=1e-5)
    assert jnp.allclose(hidden, h_ref, atol=1e-5, rtol=1e-5)

    print("KERNEL_OK")
</pallas_src>

<mosaic_0001>
module attributes {stable_mosaic.version = 11 : i64} {
  func.func @recovery_net_kernel(%arg0: memref<8x8x4xf32, #tpu.memory_space<vmem>>, %arg1: memref<3x4x32xf32, #tpu.memory_space<vmem>>, %arg2: memref<3x32x32xf32, #tpu.memory_space<vmem>>, %arg3: memref<3x1x32xf32, #tpu.memory_space<vmem>>, %arg4: memref<3x1x32xf32, #tpu.memory_space<vmem>>, %arg5: memref<32x128xf32, #tpu.memory_space<vmem>>, %arg6: memref<1x128xf32, #tpu.memory_space<vmem>>, %arg7: memref<8x8x128xf32, #tpu.memory_space<vmem>>, %arg8: memref<8x32xf32, #tpu.memory_space<vmem>>, %arg9: memref<8x8x32xf32, #tpu.memory_space<vmem>>) attributes {dimension_semantics = [], scalar_prefetch = 0 : i64, scratch_operands = 1 : i64, tpu.core_type = #tpu.core_type<tc>} {
    %c0 = arith.constant 0 : index
    %c0_0 = arith.constant 0 : index
    %c0_1 = arith.constant 0 : index
    %0 = vector.load %arg1[%c0, %c0_0, %c0_1] : memref<3x4x32xf32, #tpu.memory_space<vmem>>, vector<1x4x32xf32>
    %1 = vector.shape_cast %0 : vector<1x4x32xf32> to vector<4x32xf32>
    %c1 = arith.constant 1 : index
    %c0_2 = arith.constant 0 : index
    %c0_3 = arith.constant 0 : index
    %2 = vector.load %arg1[%c1, %c0_2, %c0_3] : memref<3x4x32xf32, #tpu.memory_space<vmem>>, vector<1x4x32xf32>
    %3 = vector.shape_cast %2 : vector<1x4x32xf32> to vector<4x32xf32>
    %c2 = arith.constant 2 : index
    %c0_4 = arith.constant 0 : index
    %c0_5 = arith.constant 0 : index
    %4 = vector.load %arg1[%c2, %c0_4, %c0_5] : memref<3x4x32xf32, #tpu.memory_space<vmem>>, vector<1x4x32xf32>
    %5 = vector.shape_cast %4 : vector<1x4x32xf32> to vector<4x32xf32>
    %c0_6 = arith.constant 0 : index
    %c0_7 = arith.constant 0 : index
    %c0_8 = arith.constant 0 : index
    %6 = vector.load %arg2[%c0_6, %c0_7, %c0_8] : memref<3x32x32xf32, #tpu.memory_space<vmem>>, vector<1x32x32xf32>
    %7 = vector.shape_cast %6 : vector<1x32x32xf32> to vector<32x32xf32>
    %c1_9 = arith.constant 1 : index
    %c0_10 = arith.constant 0 : index
    %c0_11 = arith.constant 0 : index
    %8 = vector.load %arg2[%c1_9, %c0_10, %c0_11] : memref<3x32x32xf32, #tpu.memory_space<vmem>>, vector<1x32x32xf32>
    %9 = vector.shape_cast %8 : vector<1x32x32xf32> to vector<32x32xf32>
    %c2_12 = arith.constant 2 : index
    %c0_13 = arith.constant 0 : index
    %c0_14 = arith.constant 0 : index
    %10 = vector.load %arg2[%c2_12, %c0_13, %c0_14] : memref<3x32x32xf32, #tpu.memory_space<vmem>>, vector<1x32x32xf32>
    %11 = vector.shape_cast %10 : vector<1x32x32xf32> to vector<32x32xf32>
    %c0_15 = arith.constant 0 : index
    %c0_16 = arith.constant 0 : index
    %c0_17 = arith.constant 0 : index
    %12 = vector.load %arg3[%c0_15, %c0_16, %c0_17] : memref<3x1x32xf32, #tpu.memory_space<vmem>>, vector<1x1x32xf32>
    %13 = vector.shape_cast %12 : vector<1x1x32xf32> to vector<1x32xf32>
    %c0_18 = arith.constant 0 : index
    %c0_19 = arith.constant 0 : index
    %c0_20 = arith.constant 0 : index
    %14 = vector.load %arg4[%c0_18, %c0_19, %c0_20] : memref<3x1x32xf32, #tpu.memory_space<vmem>>, vector<1x1x32xf32>
    %15 = vector.shape_cast %14 : vector<1x1x32xf32> to vector<1x32xf32>
    %16 = arith.addf %13, %15 : vector<1x32xf32>
    %c1_21 = arith.constant 1 : index
    %c0_22 = arith.constant 0 : index
    %c0_23 = arith.constant 0 : index
    %17 = vector.load %arg3[%c1_21, %c0_22, %c0_23] : memref<3x1x32xf32, #tpu.memory_space<vmem>>, vector<1x1x32xf32>
    %18 = vector.shape_cast %17 : vector<1x1x32xf32> to vector<1x32xf32>
    %c1_24 = arith.constant 1 : index
    %c0_25 = arith.constant 0 : index
    %c0_26 = arith.constant 0 : index
    %19 = vector.load %arg4[%c1_24, %c0_25, %c0_26] : memref<3x1x32xf32, #tpu.memory_space<vmem>>, vector<1x1x32xf32>
    %20 = vector.shape_cast %19 : vector<1x1x32xf32> to vector<1x32xf32>
    %21 = arith.addf %18, %20 : vector<1x32xf32>
    %c2_27 = arith.constant 2 : index
    %c0_28 = arith.constant 0 : index
    %c0_29 = arith.constant 0 : index
    %22 = vector.load %arg3[%c2_27, %c0_28, %c0_29] : memref<3x1x32xf32, #tpu.memory_space<vmem>>, vector<1x1x32xf32>
    %23 = vector.shape_cast %22 : vector<1x1x32xf32> to vector<1x32xf32>
    %c2_30 = arith.constant 2 : index
    %c0_31 = arith.constant 0 : index
    %c0_32 = arith.constant 0 : index
    %24 = vector.load %arg4[%c2_30, %c0_31, %c0_32] : memref<3x1x32xf32, #tpu.memory_space<vmem>>, vector<1x1x32xf32>
    %25 = vector.shape_cast %24 : vector<1x1x32xf32> to vector<1x32xf32>
    %26 = vector.shape_cast %25 : vector<1x32xf32> to vector<1x32xf32>
    %27 = vector.broadcast %26 : vector<1x32xf32> to vector<8x32xf32>
    %c0_33 = arith.constant 0 : index
    %c0_34 = arith.constant 0 : index
    %c0_35 = arith.constant 0 : index
    %28 = vector.load %arg0[%c0_33, %c0_34, %c0_35] : memref<8x8x4xf32, #tpu.memory_space<vmem>>, vector<8x8x4xf32>
    %29 = vector.shape_cast %28 : vector<8x8x4xf32> to vector<64x4xf32>
    %cst = arith.constant dense<0.000000e+00> : vector<64x32xf32>
    %30 = tpu.matmul %29, %1, %cst {dimension_numbers = #tpu.dot_dimension_numbers<[1], [0], [0], [1], [0, 0, 1, 1], [], []>} : vector<64x4xf32>, vector<4x32xf32>, vector<64x32xf32> -> vector<64x32xf32>
    %31 = vector.broadcast %16 : vector<1x32xf32> to vector<64x32xf32>
    %32 = arith.addf %30, %31 : vector<64x32xf32>
    %33 = vector.shape_cast %32 : vector<64x32xf32> to vector<8x8x32xf32>
    %cst_36 = arith.constant dense<0.000000e+00> : vector<64x32xf32>
    %34 = tpu.matmul %29, %3, %cst_36 {dimension_numbers = #tpu.dot_dimension_numbers<[1], [0], [0], [1], [0, 0, 1, 1], [], []>} : vector<64x4xf32>, vector<4x32xf32>, vector<64x32xf32> -> vector<64x32xf32>
    %35 = vector.broadcast %21 : vector<1x32xf32> to vector<64x32xf32>
    %36 = arith.addf %34, %35 : vector<64x32xf32>
    %37 = vector.shape_cast %36 : vector<64x32xf32> to vector<8x8x32xf32>
    %cst_37 = arith.constant dense<0.000000e+00> : vector<64x32xf32>
    %38 = tpu.matmul %29, %5, %cst_37 {dimension_numbers = #tpu.dot_dimension_numbers<[1], [0], [0], [1], [0, 0, 1, 1], [], []>} : vector<64x4xf32>, vector<4x32xf32>, vector<64x32xf32> -> vector<64x32xf32>
    %39 = vector.broadcast %23 : vector<1x32xf32> to vector<64x32xf32>
    %40 = arith.addf %38, %39 : vector<64x32xf32>
    %41 = vector.shape_cast %40 : vector<64x32xf32> to vector<8x8x32xf32>
    %cst_38 = arith.constant 0.000000e+00 : f32
    %42 = vector.broadcast %cst_38 : f32 to vector<8x32xf32>
    %cst_39 = arith.constant dense<0.000000e+00> : vector<8x32xf32>
    %43 = tpu.matmul %42, %7, %cst_39 {dimension_numbers = #tpu.dot_dimension_numbers<[1], [0], [0], [1], [0, 0, 1, 1], [], []>} : vector<8x32xf32>, vector<32x32xf32>, vector<8x32xf32> -> vector<8x32xf32>
    %cst_40 = arith.constant dense<0.000000e+00> : vector<8x32xf32>
    %44 = tpu.matmul %42, %9, %cst_40 {dimension_numbers = #tpu.dot_dimension_numbers<[1], [0], [0], [1], [0, 0, 1, 1], [], []>} : vector<8x32xf32>, vector<32x32xf32>, vector<8x32xf32> -> vector<8x32xf32>
    %cst_41 = arith.constant dense<0.000000e+00> : vector<8x32xf32>
    %45 = tpu.matmul %42, %11, %cst_41 {dimension_numbers = #tpu.dot_dimension_numbers<[1], [0], [0], [1], [0, 0, 1, 1], [], []>} : vector<8x32xf32>, vector<32x32xf32>, vector<8x32xf32> -> vector<8x32xf32>
    %46 = arith.addf %45, %27 : vector<8x32xf32>
    %47 = vector.extract_strided_slice %33 {offsets = [0, 0, 0], sizes = [1, 8, 32], strides = [1, 1, 1]} : vector<8x8x32xf32> to vector<1x8x32xf32>
    %48 = vector.shape_cast %47 : vector<1x8x32xf32> to vector<8x32xf32>
    %49 = arith.addf %48, %43 : vector<8x32xf32>
    %50 = arith.negf %49 : vector<8x32xf32>
    %51 = math.exp %50 : vector<8x32xf32>
    %cst_42 = arith.constant 1.000000e+00 : f32
    %52 = vector.broadcast %cst_42 : f32 to vector<8x32xf32>
    %53 = arith.addf %52, %51 : vector<8x32xf32>
    %54 = arith.divf %52, %53 : vector<8x32xf32>
    %55 = vector.extract_strided_slice %37 {offsets = [0, 0, 0], sizes = [1, 8, 32], strides = [1, 1, 1]} : vector<8x8x32xf32> to vector<1x8x32xf32>
    %56 = vector.shape_cast %55 : vector<1x8x32xf32> to vector<8x32xf32>
    %57 = arith.addf %56, %44 : vector<8x32xf32>
    %58 = arith.negf %57 : vector<8x32xf32>
    %59 = math.exp %58 : vector<8x32xf32>
    %cst_43 = arith.constant 1.000000e+00 : f32
    %60 = vector.broadcast %cst_43 : f32 to vector<8x32xf32>
    %61 = arith.addf %60, %59 : vector<8x32xf32>
    %62 = arith.divf %60, %61 : vector<8x32xf32>
    %63 = vector.extract_strided_slice %41 {offsets = [0, 0, 0], sizes = [1, 8, 32], strides = [1, 1, 1]} : vector<8x8x32xf32> to vector<1x8x32xf32>
    %64 = vector.shape_cast %63 : vector<1x8x32xf32> to vector<8x32xf32>
    %65 = arith.mulf %54, %46 : vector<8x32xf32>
    %66 = arith.addf %64, %65 : vector<8x32xf32>
    %67 = math.tanh %66 : vector<8x32xf32>
    %cst_44 = arith.constant 1.000000e+00 : f32
    %68 = vector.broadcast %cst_44 : f32 to vector<8x32xf32>
    %69 = arith.subf %68, %62 : vector<8x32xf32>
    %70 = arith.mulf %69, %67 : vector<8x32xf32>
    %71 = arith.mulf %62, %42 : vector<8x32xf32>
    %72 = arith.addf %70, %71 : vector<8x32xf32>
    %cst_45 = arith.constant 0.000000e+00 : f32
    %73 = vector.broadcast %cst_45 : f32 to vector<8x32xf32>
    %74 = arith.maximumf %72, %73 : vector<8x32xf32>
    %c0_46 = arith.constant 0 : index
    %c0_47 = arith.constant 0 : index
    %c0_48 = arith.constant 0 : index
    %75 = vector.load %arg9[%c0_46, %c0_47, %c0_48] : memref<8x8x32xf32, #tpu.memory_space<vmem>>, vector<1x8x32xf32>
    %76 = vector.shape_cast %75 : vector<1x8x32xf32> to vector<8x32xf32>
    %77 = vector.shape_cast %74 : vector<8x32xf32> to vector<1x8x32xf32>
    tpu.vector_store %arg9[%c0_46, %c0_47, %c0_48], %77 {strides = array<i32>} : memref<8x8x32xf32, #tpu.memory_space<vmem>>, vector<1x8x32xf32>,
    %cst_49 = arith.constant dense<0.000000e+00> : vector<8x32xf32>
    %78 = tpu.matmul %72, %7, %cst_49 {dimension_numbers = #tpu.dot_dimension_numbers<[1], [0], [0], [1], [0, 0, 1, 1], [], []>} : vector<8x32xf32>, vector<32x32xf32>, vector<8x32xf32> -> vector<8x32xf32>
    %cst_50 = arith.constant dense<0.000000e+00> : vector<8x32xf32>
    %79 = tpu.matmul %72, %9, %cst_50 {dimension_numbers = #tpu.dot_dimension_numbers<[1], [0], [0], [1], [0, 0, 1, 1], [], []>} : vector<8x32xf32>, vector<32x32xf32>, vector<8x32xf32> -> vector<8x32xf32>
    %cst_51 = arith.constant dense<0.000000e+00> : vector<8x32xf32>
    %80 = tpu.matmul %72, %11, %cst_51 {dimension_numbers = #tpu.dot_dimension_numbers<[1], [0], [0], [1], [0, 0, 1, 1], [], []>} : vector<8x32xf32>, vector<32x32xf32>, vector<8x32xf32> -> vector<8x32xf32>
    %81 = arith.addf %80, %27 : vector<8x32xf32>
    %82 = vector.extract_strided_slice %33 {offsets = [1, 0, 0], sizes = [1, 8, 32], strides = [1, 1, 1]} : vector<8x8x32xf32> to vector<1x8x32xf32>
    %83 = vector.shape_cast %82 : vector<1x8x32xf32> to vector<8x32xf32>
    %84 = arith.addf %83, %78 : vector<8x32xf32>
    %85 = arith.negf %84 : vector<8x32xf32>
    %86 = math.exp %85 : vector<8x32xf32>
    %cst_52 = arith.constant 1.000000e+00 : f32
    %87 = vector.broadcast %cst_52 : f32 to vector<8x32xf32>
    %88 = arith.addf %87, %86 : vector<8x32xf32>
    %89 = arith.divf %87, %88 : vector<8x32xf32>
    %90 = vector.extract_strided_slice %37 {offsets = [1, 0, 0], sizes = [1, 8, 32], strides = [1, 1, 1]} : vector<8x8x32xf32> to vector<1x8x32xf32>
    %91 = vector.shape_cast %90 : vector<1x8x32xf32> to vector<8x32xf32>
    %92 = arith.addf %91, %79 : vector<8x32xf32>
    %93 = arith.negf %92 : vector<8x32xf32>
    %94 = math.exp %93 : vector<8x32xf32>
    %cst_53 = arith.constant 1.000000e+00 : f32
    %95 = vector.broadcast %cst_53 : f32 to vector<8x32xf32>
    %96 = arith.addf %95, %94 : vector<8x32xf32>
    %97 = arith.divf %95, %96 : vector<8x32xf32>
    %98 = vector.extract_strided_slice %41 {offsets = [1, 0, 0], sizes = [1, 8, 32], strides = [1, 1, 1]} : vector<8x8x32xf32> to vector<1x8x32xf32>
    %99 = vector.shape_cast %98 : vector<1x8x32xf32> to vector<8x32xf32>
    %100 = arith.mulf %89, %81 : vector<8x32xf32>
    %101 = arith.addf %99, %100 : vector<8x32xf32>
    %102 = math.tanh %101 : vector<8x32xf32>
    %cst_54 = arith.constant 1.000000e+00 : f32
    %103 = vector.broadcast %cst_54 : f32 to vector<8x32xf32>
    %104 = arith.subf %103, %97 : vector<8x32xf32>
    %105 = arith.mulf %104, %102 : vector<8x32xf32>
    %106 = arith.mulf %97, %72 : vector<8x32xf32>
    %107 = arith.addf %105, %106 : vector<8x32xf32>
    %cst_55 = arith.constant 0.000000e+00 : f32
    %108 = vector.broadcast %cst_55 : f32 to vector<8x32xf32>
    %109 = arith.maximumf %107, %108 : vector<8x32xf32>
    %c1_56 = arith.constant 1 : index
    %c0_57 = arith.constant 0 : index
    %c0_58 = arith.constant 0 : index
    %110 = vector.load %arg9[%c1_56, %c0_57, %c0_58] : memref<8x8x32xf32, #tpu.memory_space<vmem>>, vector<1x8x32xf32>
    %111 = vector.shape_cast %110 : vector<1x8x32xf32> to vector<8x32xf32>
    %112 = vector.shape_cast %109 : vector<8x32xf32> to vector<1x8x32xf32>
    tpu.vector_store %arg9[%c1_56, %c0_57, %c0_58], %112 {strides = array<i32>} : memref<8x8x32xf32, #tpu.memory_space<vmem>>, vector<1x8x32xf32>,
    %cst_59 = arith.constant dense<0.000000e+00> : vector<8x32xf32>
    %113 = tpu.matmul %107, %7, %cst_59 {dimension_numbers = #tpu.dot_dimension_numbers<[1], [0], [0], [1], [0, 0, 1, 1], [], []>} : vector<8x32xf32>, vector<32x32xf32>, vector<8x32xf32> -> vector<8x32xf32>
    %cst_60 = arith.constant dense<0.000000e+00> : vector<8x32xf32>
    %114 = tpu.matmul %107, %9, %cst_60 {dimension_numbers = #tpu.dot_dimension_numbers<[1], [0], [0], [1], [0, 0, 1, 1], [], []>} : vector<8x32xf32>, vector<32x32xf32>, vector<8x32xf32> -> vector<8x32xf32>
    %cst_61 = arith.constant dense<0.000000e+00> : vector<8x32xf32>
    %115 = tpu.matmul %107, %11, %cst_61 {dimension_numbers = #tpu.dot_dimension_numbers<[1], [0], [0], [1], [0, 0, 1, 1], [], []>} : vector<8x32xf32>, vector<32x32xf32>, vector<8x32xf32> -> vector<8x32xf32>
    %116 = arith.addf %115, %27 : vector<8x32xf32>
    %117 = vector.extract_strided_slice %33 {offsets = [2, 0, 0], sizes = [1, 8, 32], strides = [1, 1, 1]} : vector<8x8x32xf32> to vector<1x8x32xf32>
    %118 = vector.shape_cast %117 : vector<1x8x32xf32> to vector<8x32xf32>
    %119 = arith.addf %118, %113 : vector<8x32xf32>
    %120 = arith.negf %119 : vector<8x32xf32>
    %121 = math.exp %120 : vector<8x32xf32>
    %cst_62 = arith.constant 1.000000e+00 : f32
    %122 = vector.broadcast %cst_62 : f32 to vector<8x32xf32>
    %123 = arith.addf %122, %121 : vector<8x32xf32>
    %124 = arith.divf %122, %123 : vector<8x32xf32>
    %125 = vector.extract_strided_slice %37 {offsets = [2, 0, 0], sizes = [1, 8, 32], strides = [1, 1, 1]} : vector<8x8x32xf32> to vector<1x8x32xf32>
    %126 = vector.shape_cast %125 : vector<1x8x32xf32> to vector<8x32xf32>
    %127 = arith.addf %126, %114 : vector<8x32xf32>
    %128 = arith.negf %127 : vector<8x32xf32>
    %129 = math.exp %128 : vector<8x32xf32>
    %cst_63 = arith.constant 1.000000e+00 : f32
    %130 = vector.broadcast %cst_63 : f32 to vector<8x32xf32>
    %131 = arith.addf %130, %129 : vector<8x32xf32>
    %132 = arith.divf %130, %131 : vector<8x32xf32>
    %133 = vector.extract_strided_slice %41 {offsets = [2, 0, 0], sizes = [1, 8, 32], strides = [1, 1, 1]} : vector<8x8x32xf32> to vector<1x8x32xf32>
    %134 = vector.shape_cast %133 : vector<1x8x32xf32> to vector<8x32xf32>
    %135 = arith.mulf %124, %116 : vector<8x32xf32>
    %136 = arith.addf %134, %135 : vector<8x32xf32>
    %137 = math.tanh %136 : vector<8x32xf32>
    %cst_64 = arith.constant 1.000000e+00 : f32
    %138 = vector.broadcast %cst_64 : f32 to vector<8x32xf32>
    %139 = arith.subf %138, %132 : vector<8x32xf32>
    %140 = arith.mulf %139, %137 : vector<8x32xf32>
    %141 = arith.mulf %132, %107 : vector<8x32xf32>
    %142 = arith.addf %140, %141 : vector<8x32xf32>
    %cst_65 = arith.constant 0.000000e+00 : f32
    %143 = vector.broadcast %cst_65 : f32 to vector<8x32xf32>
    %144 = arith.maximumf %142, %143 : vector<8x32xf32>
    %c2_66 = arith.constant 2 : index
    %c0_67 = arith.constant 0 : index
    %c0_68 = arith.constant 0 : index
    %145 = vector.load %arg9[%c2_66, %c0_67, %c0_68] : memref<8x8x32xf32, #tpu.memory_space<vmem>>, vector<1x8x32xf32>
    %146 = vector.shape_cast %145 : vector<1x8x32xf32> to vector<8x32xf32>
    %147 = vector.shape_cast %144 : vector<8x32xf32> to vector<1x8x32xf32>
    tpu.vector_store %arg9[%c2_66, %c0_67, %c0_68], %147 {strides = array<i32>} : memref<8x8x32xf32, #tpu.memory_space<vmem>>, vector<1x8x32xf32>,
    %cst_69 = arith.constant dense<0.000000e+00> : vector<8x32xf32>
    %148 = tpu.matmul %142, %7, %cst_69 {dimension_numbers = #tpu.dot_dimension_numbers<[1], [0], [0], [1], [0, 0, 1, 1], [], []>} : vector<8x32xf32>, vector<32x32xf32>, vector<8x32xf32> -> vector<8x32xf32>
    %cst_70 = arith.constant dense<0.000000e+00> : vector<8x32xf32>
    %149 = tpu.matmul %142, %9, %cst_70 {dimension_numbers = #tpu.dot_dimension_numbers<[1], [0], [0], [1], [0, 0, 1, 1], [], []>} : vector<8x32xf32>, vector<32x32xf32>, vector<8x32xf32> -> vector<8x32xf32>
    %cst_71 = arith.constant dense<0.000000e+00> : vector<8x32xf32>
    %150 = tpu.matmul %142, %11, %cst_71 {dimension_numbers = #tpu.dot_dimension_numbers<[1], [0], [0], [1], [0, 0, 1, 1], [], []>} : vector<8x32xf32>, vector<32x32xf32>, vector<8x32xf32> -> vector<8x32xf32>
    %151 = arith.addf %150, %27 : vector<8x32xf32>
    %152 = vector.extract_strided_slice %33 {offsets = [3, 0, 0], sizes = [1, 8, 32], strides = [1, 1, 1]} : vector<8x8x32xf32> to vector<1x8x32xf32>
    %153 = vector.shape_cast %152 : vector<1x8x32xf32> to vector<8x32xf32>
    %154 = arith.addf %153, %148 : vector<8x32xf32>
    %155 = arith.negf %154 : vector<8x32xf32>
    %156 = math.exp %155 : vector<8x32xf32>
    %cst_72 = arith.constant 1.000000e+00 : f32
    %157 = vector.broadcast %cst_72 : f32 to vector<8x32xf32>
    %158 = arith.addf %157, %156 : vector<8x32xf32>
    %159 = arith.divf %157, %158 : vector<8x32xf32>
    %160 = vector.extract_strided_slice %37 {offsets = [3, 0, 0], sizes = [1, 8, 32], strides = [1, 1, 1]} : vector<8x8x32xf32> to vector<1x8x32xf32>
    %161 = vector.shape_cast %160 : vector<1x8x32xf32> to vector<8x32xf32>
    %162 = arith.addf %161, %149 : vector<8x32xf32>
    %163 = arith.negf %162 : vector<8x32xf32>
    %164 = math.exp %163 : vector<8x32xf32>
    %cst_73 = arith.constant 1.000000e+00 : f32
    %165 = vector.broadcast %cst_73 : f32 to vector<8x32xf32>
    %166 = arith.addf %165, %164 : vector<8x32xf32>
    %167 = arith.divf %165, %166 : vector<8x32xf32>
    %168 = vector.extract_strided_slice %41 {offsets = [3, 0, 0], sizes = [1, 8, 32], strides = [1, 1, 1]} : vector<8x8x32xf32> to vector<1x8x32xf32>
    %169 = vector.shape_cast %168 : vector<1x8x32xf32> to vector<8x32xf32>
    %170 = arith.mulf %159, %151 : vector<8x32xf32>
    %171 = arith.addf %169, %170 : vector<8x32xf32>
    %172 = math.tanh %171 : vector<8x32xf32>
    %cst_74 = arith.constant 1.000000e+00 : f32
    %173 = vector.broadcast %cst_74 : f32 to vector<8x32xf32>
    %174 = arith.subf %173, %167 : vector<8x32xf32>
    %175 = arith.mulf %174, %172 : vector<8x32xf32>
    %176 = arith.mulf %167, %142 : vector<8x32xf32>
    %177 = arith.addf %175, %176 : vector<8x32xf32>
    %cst_75 = arith.constant 0.000000e+00 : f32
    %178 = vector.broadcast %cst_75 : f32 to vector<8x32xf32>
    %179 = arith.maximumf %177, %178 : vector<8x32xf32>
    %c3 = arith.constant 3 : index
    %c0_76 = arith.constant 0 : index
    %c0_77 = arith.constant 0 : index
    %180 = vector.load %arg9[%c3, %c0_76, %c0_77] : memref<8x8x32xf32, #tpu.memory_space<vmem>>, vector<1x8x32xf32>
    %181 = vector.shape_cast %180 : vector<1x8x32xf32> to vector<8x32xf32>
    %182 = vector.shape_cast %179 : vector<8x32xf32> to vector<1x8x32xf32>
    tpu.vector_store %arg9[%c3, %c0_76, %c0_77], %182 {strides = array<i32>} : memref<8x8x32xf32, #tpu.memory_space<vmem>>, vector<1x8x32xf32>,
    %cst_78 = arith.constant dense<0.000000e+00> : vector<8x32xf32>
    %183 = tpu.matmul %177, %7, %cst_78 {dimension_numbers = #tpu.dot_dimension_numbers<[1], [0], [0], [1], [0, 0, 1, 1], [], []>} : vector<8x32xf32>, vector<32x32xf32>, vector<8x32xf32> -> vector<8x32xf32>
    %cst_79 = arith.constant dense<0.000000e+00> : vector<8x32xf32>
    %184 = tpu.matmul %177, %9, %cst_79 {dimension_numbers = #tpu.dot_dimension_numbers<[1], [0], [0], [1], [0, 0, 1, 1], [], []>} : vector<8x32xf32>, vector<32x32xf32>, vector<8x32xf32> -> vector<8x32xf32>
    %cst_80 = arith.constant dense<0.000000e+00> : vector<8x32xf32>
    %185 = tpu.matmul %177, %11, %cst_80 {dimension_numbers = #tpu.dot_dimension_numbers<[1], [0], [0], [1], [0, 0, 1, 1], [], []>} : vector<8x32xf32>, vector<32x32xf32>, vector<8x32xf32> -> vector<8x32xf32>
    %186 = arith.addf %185, %27 : vector<8x32xf32>
    %187 = vector.extract_strided_slice %33 {offsets = [4, 0, 0], sizes = [1, 8, 32], strides = [1, 1, 1]} : vector<8x8x32xf32> to vector<1x8x32xf32>
    %188 = vector.shape_cast %187 : vector<1x8x32xf32> to vector<8x32xf32>
    %189 = arith.addf %188, %183 : vector<8x32xf32>
    %190 = arith.negf %189 : vector<8x32xf32>
    %191 = math.exp %190 : vector<8x32xf32>
    %cst_81 = arith.constant 1.000000e+00 : f32
    %192 = vector.broadcast %cst_81 : f32 to vector<8x32xf32>
    %193 = arith.addf %192, %191 : vector<8x32xf32>
    %194 = arith.divf %192, %193 : vector<8x32xf32>
    %195 = vector.extract_strided_slice %37 {offsets = [4, 0, 0], sizes = [1, 8, 32], strides = [1, 1, 1]} : vector<8x8x32xf32> to vector<1x8x32xf32>
    %196 = vector.shape_cast %195 : vector<1x8x32xf32> to vector<8x32xf32>
    %197 = arith.addf %196, %184 : vector<8x32xf32>
    %198 = arith.negf %197 : vector<8x32xf32>
    %199 = math.exp %198 : vector<8x32xf32>
    %cst_82 = arith.constant 1.000000e+00 : f32
    %200 = vector.broadcast %cst_82 : f32 to vector<8x32xf32>
    %201 = arith.addf %200, %199 : vector<8x32xf32>
    %202 = arith.divf %200, %201 : vector<8x32xf32>
    %203 = vector.extract_strided_slice %41 {offsets = [4, 0, 0], sizes = [1, 8, 32], strides = [1, 1, 1]} : vector<8x8x32xf32> to vector<1x8x32xf32>
    %204 = vector.shape_cast %203 : vector<1x8x32xf32> to vector<8x32xf32>
    %205 = arith.mulf %194, %186 : vector<8x32xf32>
    %206 = arith.addf %204, %205 : vector<8x32xf32>
    %207 = math.tanh %206 : vector<8x32xf32>
    %cst_83 = arith.constant 1.000000e+00 : f32
    %208 = vector.broadcast %cst_83 : f32 to vector<8x32xf32>
    %209 = arith.subf %208, %202 : vector<8x32xf32>
    %210 = arith.mulf %209, %207 : vector<8x32xf32>
    %211 = arith.mulf %202, %177 : vector<8x32xf32>
    %212 = arith.addf %210, %211 : vector<8x32xf32>
    %cst_84 = arith.constant 0.000000e+00 : f32
    %213 = vector.broadcast %cst_84 : f32 to vector<8x32xf32>
    %214 = arith.maximumf %212, %213 : vector<8x32xf32>
    %c4 = arith.constant 4 : index
    %c0_85 = arith.constant 0 : index
    %c0_86 = arith.constant 0 : index
    %215 = vector.load %arg9[%c4, %c0_85, %c0_86] : memref<8x8x32xf32, #tpu.memory_space<vmem>>, vector<1x8x32xf32>
    %216 = vector.shape_cast %215 : vector<1x8x32xf32> to vector<8x32xf32>
    %217 = vector.shape_cast %214 : vector<8x32xf32> to vector<1x8x32xf32>
    tpu.vector_store %arg9[%c4, %c0_85, %c0_86], %217 {strides = array<i32>} : memref<8x8x32xf32, #tpu.memory_space<vmem>>, vector<1x8x32xf32>,
    %cst_87 = arith.constant dense<0.000000e+00> : vector<8x32xf32>
    %218 = tpu.matmul %212, %7, %cst_87 {dimension_numbers = #tpu.dot_dimension_numbers<[1], [0], [0], [1], [0, 0, 1, 1], [], []>} : vector<8x32xf32>, vector<32x32xf32>, vector<8x32xf32> -> vector<8x32xf32>
    %cst_88 = arith.constant dense<0.000000e+00> : vector<8x32xf32>
    %219 = tpu.matmul %212, %9, %cst_88 {dimension_numbers = #tpu.dot_dimension_numbers<[1], [0], [0], [1], [0, 0, 1, 1], [], []>} : vector<8x32xf32>, vector<32x32xf32>, vector<8x32xf32> -> vector<8x32xf32>
    %cst_89 = arith.constant dense<0.000000e+00> : vector<8x32xf32>
    %220 = tpu.matmul %212, %11, %cst_89 {dimension_numbers = #tpu.dot_dimension_numbers<[1], [0], [0], [1], [0, 0, 1, 1], [], []>} : vector<8x32xf32>, vector<32x32xf32>, vector<8x32xf32> -> vector<8x32xf32>
    %221 = arith.addf %220, %27 : vector<8x32xf32>
    %222 = vector.extract_strided_slice %33 {offsets = [5, 0, 0], sizes = [1, 8, 32], strides = [1, 1, 1]} : vector<8x8x32xf32> to vector<1x8x32xf32>
    %223 = vector.shape_cast %222 : vector<1x8x32xf32> to vector<8x32xf32>
    %224 = arith.addf %223, %218 : vector<8x32xf32>
    %225 = arith.negf %224 : vector<8x32xf32>
    %226 = math.exp %225 : vector<8x32xf32>
    %cst_90 = arith.constant 1.000000e+00 : f32
    %227 = vector.broadcast %cst_90 : f32 to vector<8x32xf32>
    %228 = arith.addf %227, %226 : vector<8x32xf32>
    %229 = arith.divf %227, %228 : vector<8x32xf32>
    %230 = vector.extract_strided_slice %37 {offsets = [5, 0, 0], sizes = [1, 8, 32], strides = [1, 1, 1]} : vector<8x8x32xf32> to vector<1x8x32xf32>
    %231 = vector.shape_cast %230 : vector<1x8x32xf32> to vector<8x32xf32>
    %232 = arith.addf %231, %219 : vector<8x32xf32>
    %233 = arith.negf %232 : vector<8x32xf32>
    %234 = math.exp %233 : vector<8x32xf32>
    %cst_91 = arith.constant 1.000000e+00 : f32
    %235 = vector.broadcast %cst_91 : f32 to vector<8x32xf32>
    %236 = arith.addf %235, %234 : vector<8x32xf32>
    %237 = arith.divf %235, %236 : vector<8x32xf32>
    %238 = vector.extract_strided_slice %41 {offsets = [5, 0, 0], sizes = [1, 8, 32], strides = [1, 1, 1]} : vector<8x8x32xf32> to vector<1x8x32xf32>
    %239 = vector.shape_cast %238 : vector<1x8x32xf32> to vector<8x32xf32>
    %240 = arith.mulf %229, %221 : vector<8x32xf32>
    %241 = arith.addf %239, %240 : vector<8x32xf32>
    %242 = math.tanh %241 : vector<8x32xf32>
    %cst_92 = arith.constant 1.000000e+00 : f32
    %243 = vector.broadcast %cst_92 : f32 to vector<8x32xf32>
    %244 = arith.subf %243, %237 : vector<8x32xf32>
    %245 = arith.mulf %244, %242 : vector<8x32xf32>
    %246 = arith.mulf %237, %212 : vector<8x32xf32>
    %247 = arith.addf %245, %246 : vector<8x32xf32>
    %cst_93 = arith.constant 0.000000e+00 : f32
    %248 = vector.broadcast %cst_93 : f32 to vector<8x32xf32>
    %249 = arith.maximumf %247, %248 : vector<8x32xf32>
    %c5 = arith.constant 5 : index
    %c0_94 = arith.constant 0 : index
    %c0_95 = arith.constant 0 : index
    %250 = vector.load %arg9[%c5, %c0_94, %c0_95] : memref<8x8x32xf32, #tpu.memory_space<vmem>>, vector<1x8x32xf32>
    %251 = vector.shape_cast %250 : vector<1x8x32xf32> to vector<8x32xf32>
    %252 = vector.shape_cast %249 : vector<8x32xf32> to vector<1x8x32xf32>
    tpu.vector_store %arg9[%c5, %c0_94, %c0_95], %252 {strides = array<i32>} : memref<8x8x32xf32, #tpu.memory_space<vmem>>, vector<1x8x32xf32>,
    %cst_96 = arith.constant dense<0.000000e+00> : vector<8x32xf32>
    %253 = tpu.matmul %247, %7, %cst_96 {dimension_numbers = #tpu.dot_dimension_numbers<[1], [0], [0], [1], [0, 0, 1, 1], [], []>} : vector<8x32xf32>, vector<32x32xf32>, vector<8x32xf32> -> vector<8x32xf32>
    %cst_97 = arith.constant dense<0.000000e+00> : vector<8x32xf32>
    %254 = tpu.matmul %247, %9, %cst_97 {dimension_numbers = #tpu.dot_dimension_numbers<[1], [0], [0], [1], [0, 0, 1, 1], [], []>} : vector<8x32xf32>, vector<32x32xf32>, vector<8x32xf32> -> vector<8x32xf32>
    %cst_98 = arith.constant dense<0.000000e+00> : vector<8x32xf32>
    %255 = tpu.matmul %247, %11, %cst_98 {dimension_numbers = #tpu.dot_dimension_numbers<[1], [0], [0], [1], [0, 0, 1, 1], [], []>} : vector<8x32xf32>, vector<32x32xf32>, vector<8x32xf32> -> vector<8x32xf32>
    %256 = arith.addf %255, %27 : vector<8x32xf32>
    %257 = vector.extract_strided_slice %33 {offsets = [6, 0, 0], sizes = [1, 8, 32], strides = [1, 1, 1]} : vector<8x8x32xf32> to vector<1x8x32xf32>
    %258 = vector.shape_cast %257 : vector<1x8x32xf32> to vector<8x32xf32>
    %259 = arith.addf %258, %253 : vector<8x32xf32>
    %260 = arith.negf %259 : vector<8x32xf32>
    %261 = math.exp %260 : vector<8x32xf32>
    %cst_99 = arith.constant 1.000000e+00 : f32
    %262 = vector.broadcast %cst_99 : f32 to vector<8x32xf32>
    %263 = arith.addf %262, %261 : vector<8x32xf32>
    %264 = arith.divf %262, %263 : vector<8x32xf32>
    %265 = vector.extract_strided_slice %37 {offsets = [6, 0, 0], sizes = [1, 8, 32], strides = [1, 1, 1]} : vector<8x8x32xf32> to vector<1x8x32xf32>
    %266 = vector.shape_cast %265 : vector<1x8x32xf32> to vector<8x32xf32>
    %267 = arith.addf %266, %254 : vector<8x32xf32>
    %268 = arith.negf %267 : vector<8x32xf32>
    %269 = math.exp %268 : vector<8x32xf32>
    %cst_100 = arith.constant 1.000000e+00 : f32
    %270 = vector.broadcast %cst_100 : f32 to vector<8x32xf32>
    %271 = arith.addf %270, %269 : vector<8x32xf32>
    %272 = arith.divf %270, %271 : vector<8x32xf32>
    %273 = vector.extract_strided_slice %41 {offsets = [6, 0, 0], sizes = [1, 8, 32], strides = [1, 1, 1]} : vector<8x8x32xf32> to vector<1x8x32xf32>
    %274 = vector.shape_cast %273 : vector<1x8x32xf32> to vector<8x32xf32>
    %275 = arith.mulf %264, %256 : vector<8x32xf32>
    %276 = arith.addf %274, %275 : vector<8x32xf32>
    %277 = math.tanh %276 : vector<8x32xf32>
    %cst_101 = arith.constant 1.000000e+00 : f32
    %278 = vector.broadcast %cst_101 : f32 to vector<8x32xf32>
    %279 = arith.subf %278, %272 : vector<8x32xf32>
    %280 = arith.mulf %279, %277 : vector<8x32xf32>
    %281 = arith.mulf %272, %247 : vector<8x32xf32>
    %282 = arith.addf %280, %281 : vector<8x32xf32>
    %cst_102 = arith.constant 0.000000e+00 : f32
    %283 = vector.broadcast %cst_102 : f32 to vector<8x32xf32>
    %284 = arith.maximumf %282, %283 : vector<8x32xf32>
    %c6 = arith.constant 6 : index
    %c0_103 = arith.constant 0 : index
    %c0_104 = arith.constant 0 : index
    %285 = vector.load %arg9[%c6, %c0_103, %c0_104] : memref<8x8x32xf32, #tpu.memory_space<vmem>>, vector<1x8x32xf32>
    %286 = vector.shape_cast %285 : vector<1x8x32xf32> to vector<8x32xf32>
    %287 = vector.shape_cast %284 : vector<8x32xf32> to vector<1x8x32xf32>
    tpu.vector_store %arg9[%c6, %c0_103, %c0_104], %287 {strides = array<i32>} : memref<8x8x32xf32, #tpu.memory_space<vmem>>, vector<1x8x32xf32>,
    %cst_105 = arith.constant dense<0.000000e+00> : vector<8x32xf32>
    %288 = tpu.matmul %282, %7, %cst_105 {dimension_numbers = #tpu.dot_dimension_numbers<[1], [0], [0], [1], [0, 0, 1, 1], [], []>} : vector<8x32xf32>, vector<32x32xf32>, vector<8x32xf32> -> vector<8x32xf32>
    %cst_106 = arith.constant dense<0.000000e+00> : vector<8x32xf32>
    %289 = tpu.matmul %282, %9, %cst_106 {dimension_numbers = #tpu.dot_dimension_numbers<[1], [0], [0], [1], [0, 0, 1, 1], [], []>} : vector<8x32xf32>, vector<32x32xf32>, vector<8x32xf32> -> vector<8x32xf32>
    %cst_107 = arith.constant dense<0.000000e+00> : vector<8x32xf32>
    %290 = tpu.matmul %282, %11, %cst_107 {dimension_numbers = #tpu.dot_dimension_numbers<[1], [0], [0], [1], [0, 0, 1, 1], [], []>} : vector<8x32xf32>, vector<32x32xf32>, vector<8x32xf32> -> vector<8x32xf32>
    %291 = arith.addf %290, %27 : vector<8x32xf32>
    %292 = vector.extract_strided_slice %33 {offsets = [7, 0, 0], sizes = [1, 8, 32], strides = [1, 1, 1]} : vector<8x8x32xf32> to vector<1x8x32xf32>
    %293 = vector.shape_cast %292 : vector<1x8x32xf32> to vector<8x32xf32>
    %294 = arith.addf %293, %288 : vector<8x32xf32>
    %295 = arith.negf %294 : vector<8x32xf32>
    %296 = math.exp %295 : vector<8x32xf32>
    %cst_108 = arith.constant 1.000000e+00 : f32
    %297 = vector.broadcast %cst_108 : f32 to vector<8x32xf32>
    %298 = arith.addf %297, %296 : vector<8x32xf32>
    %299 = arith.divf %297, %298 : vector<8x32xf32>
    %300 = vector.extract_strided_slice %37 {offsets = [7, 0, 0], sizes = [1, 8, 32], strides = [1, 1, 1]} : vector<8x8x32xf32> to vector<1x8x32xf32>
    %301 = vector.shape_cast %300 : vector<1x8x32xf32> to vector<8x32xf32>
    %302 = arith.addf %301, %289 : vector<8x32xf32>
    %303 = arith.negf %302 : vector<8x32xf32>
    %304 = math.exp %303 : vector<8x32xf32>
    %cst_109 = arith.constant 1.000000e+00 : f32
    %305 = vector.broadcast %cst_109 : f32 to vector<8x32xf32>
    %306 = arith.addf %305, %304 : vector<8x32xf32>
    %307 = arith.divf %305, %306 : vector<8x32xf32>
    %308 = vector.extract_strided_slice %41 {offsets = [7, 0, 0], sizes = [1, 8, 32], strides = [1, 1, 1]} : vector<8x8x32xf32> to vector<1x8x32xf32>
    %309 = vector.shape_cast %308 : vector<1x8x32xf32> to vector<8x32xf32>
    %310 = arith.mulf %299, %291 : vector<8x32xf32>
    %311 = arith.addf %309, %310 : vector<8x32xf32>
    %312 = math.tanh %311 : vector<8x32xf32>
    %cst_110 = arith.constant 1.000000e+00 : f32
    %313 = vector.broadcast %cst_110 : f32 to vector<8x32xf32>
    %314 = arith.subf %313, %307 : vector<8x32xf32>
    %315 = arith.mulf %314, %312 : vector<8x32xf32>
    %316 = arith.mulf %307, %282 : vector<8x32xf32>
    %317 = arith.addf %315, %316 : vector<8x32xf32>
    %cst_111 = arith.constant 0.000000e+00 : f32
    %318 = vector.broadcast %cst_111 : f32 to vector<8x32xf32>
    %319 = arith.maximumf %317, %318 : vector<8x32xf32>
    %c7 = arith.constant 7 : index
    %c0_112 = arith.constant 0 : index
    %c0_113 = arith.constant 0 : index
    %320 = vector.load %arg9[%c7, %c0_112, %c0_113] : memref<8x8x32xf32, #tpu.memory_space<vmem>>, vector<1x8x32xf32>
    %321 = vector.shape_cast %320 : vector<1x8x32xf32> to vector<8x32xf32>
    %322 = vector.shape_cast %319 : vector<8x32xf32> to vector<1x8x32xf32>
    tpu.vector_store %arg9[%c7, %c0_112, %c0_113], %322 {strides = array<i32>} : memref<8x8x32xf32, #tpu.memory_space<vmem>>, vector<1x8x32xf32>,
    %c0_114 = arith.constant 0 : index
    %c0_115 = arith.constant 0 : index
    %323 = vector.load %arg8[%c0_114, %c0_115] : memref<8x32xf32, #tpu.memory_space<vmem>>, vector<8x32xf32>
    tpu.vector_store %arg8[%c0_114, %c0_115], %317 {strides = array<i32>} : memref<8x32xf32, #tpu.memory_space<vmem>>, vector<8x32xf32>,
    %c0_116 = arith.constant 0 : index
    %c0_117 = arith.constant 0 : index
    %c0_118 = arith.constant 0 : index
    %324 = vector.load %arg9[%c0_116, %c0_117, %c0_118] : memref<8x8x32xf32, #tpu.memory_space<vmem>>, vector<8x8x32xf32>
    %325 = vector.shape_cast %324 : vector<8x8x32xf32> to vector<64x32xf32>
    %c0_119 = arith.constant 0 : index
    %c0_120 = arith.constant 0 : index
    %326 = vector.load %arg5[%c0_119, %c0_120] : memref<32x128xf32, #tpu.memory_space<vmem>>, vector<32x128xf32>
    %cst_121 = arith.constant dense<0.000000e+00> : vector<64x128xf32>
    %327 = tpu.matmul %325, %326, %cst_121 {dimension_numbers = #tpu.dot_dimension_numbers<[1], [0], [0], [1], [0, 0, 1, 1], [], []>} : vector<64x32xf32>, vector<32x128xf32>, vector<64x128xf32> -> vector<64x128xf32>
    %c0_122 = arith.constant 0 : index
    %c0_123 = arith.constant 0 : index
    %328 = vector.load %arg6[%c0_122, %c0_123] : memref<1x128xf32, #tpu.memory_space<vmem>>, vector<1x128xf32>
    %329 = vector.broadcast %328 : vector<1x128xf32> to vector<64x128xf32>
    %330 = arith.addf %327, %329 : vector<64x128xf32>
    %331 = vector.shape_cast %330 : vector<64x128xf32> to vector<8x8x128xf32>
    %c0_124 = arith.constant 0 : index
    %c0_125 = arith.constant 0 : index
    %c0_126 = arith.constant 0 : index
    %332 = vector.load %arg7[%c0_124, %c0_125, %c0_126] : memref<8x8x128xf32, #tpu.memory_space<vmem>>, vector<8x8x128xf32>
    tpu.vector_store %arg7[%c0_124, %c0_125, %c0_126], %331 {strides = array<i32>} : memref<8x8x128xf32, #tpu.memory_space<vmem>>, vector<8x8x128xf32>,
    return
  }
}

</mosaic_0001>

<llo_original>
// kernel: recovery_net_forward.1
$region0: #{recovery_net_forward.1}
  #allocation0 [shape = 'u32[]', space=smem, size = 0x4, offset = 0x4, fixed_abs, tag = 'smem constant byte address 0x4 - core index']
  #allocation1 [shape = 'u32[144,128]{1,0:T(1,128)}', space=vmem, size = 0x12000, scoped, tag = 'internal scratch']
  #allocation2 [shape = 'f32[8,8,32]{2,1,0:T(8,128)}', space=vmem, size = 0x8000, scoped, tag = 'scratch operand']
  %s0 = inlined_call_operand.vmem [shape: f32[8,8,4], index: 0, kind: input, shape index: {}]
  %s1 = inlined_call_operand.vmem [shape: f32[3,4,32], index: 1, kind: input, shape index: {}]
  %s2 = inlined_call_operand.vmem [shape: f32[3,32,32], index: 2, kind: input, shape index: {}]
  %s3 = inlined_call_operand.vmem [shape: f32[3,1,32], index: 3, kind: input, shape index: {}]
  %s4 = inlined_call_operand.vmem [shape: f32[3,1,32], index: 4, kind: input, shape index: {}]
  %s5 = inlined_call_operand.vmem [shape: f32[32,128], index: 5, kind: input, shape index: {}]
  %s6 = inlined_call_operand.vmem [shape: f32[1,128], index: 6, kind: input, shape index: {}]
  %s7 = inlined_call_operand.vmem [shape: f32[8,8,128], index: 7, kind: output, shape index: {0}]
  %s8 = inlined_call_operand.vmem [shape: f32[8,32], index: 8, kind: output, shape index: {1}]
  %9 = xla_tuple %s7, %s8
  %s10 = sld [smem:[#allocation0]]
  $region46: #{recovery_net_forward.1} parent=0
    _
  %s12 = ssub.s32 1, %s10
  %s13 = scalar_select 0, %s12, %s10
  // Predicated region
  $region2: #{recovery_net_forward.1} parent=0 // pred_check
    _
  $region3: #{recovery_net_forward.1} parent=0 // pred_check_branch
    %15 = sbr.rel (0) target = $region5
  $region4: #{recovery_net_forward.1} parent=0 // pred_region
    _
  $region5: #{recovery_net_forward.1} parent=0 // pred_fallthru
    _
  // Predicated region
  $region6: #{recovery_net_forward.1} parent=0 // pred_check
    _
  $region7: #{recovery_net_forward.1} parent=0 // pred_check_branch
    %17 = sbr.rel (0) target = $region9
  $region8: #{recovery_net_forward.1} parent=0 // pred_region
    _
  $region9: #{recovery_net_forward.1} parent=0 // pred_fallthru
    _
  // Predicated region
  $region10: #{recovery_net_forward.1} parent=0 // pred_check
    _
  $region11: #{recovery_net_forward.1} parent=0 // pred_check_branch
    %19 = sbr.rel (0) target = $region13
  $region12: #{recovery_net_forward.1} parent=0 // pred_region
    _
  $region13: #{recovery_net_forward.1} parent=0 // pred_fallthru
    _
  // Predicated region
  $region14: #{recovery_net_forward.1} parent=0 // pred_check
    _
  $region15: #{recovery_net_forward.1} parent=0 // pred_check_branch
    %21 = sbr.rel (0) target = $region17
  $region16: #{recovery_net_forward.1} parent=0 // pred_region
    _
  $region17: #{recovery_net_forward.1} parent=0 // pred_fallthru
    _
  // Predicated region
  $region18: #{recovery_net_forward.1} parent=0 // pred_check
    _
  $region19: #{recovery_net_forward.1} parent=0 // pred_check_branch
    %23 = sbr.rel (0) target = $region21
  $region20: #{recovery_net_forward.1} parent=0 // pred_region
    _
  $region21: #{recovery_net_forward.1} parent=0 // pred_fallthru
    _
  // Predicated region
  $region22: #{recovery_net_forward.1} parent=0 // pred_check
    _
  $region23: #{recovery_net_forward.1} parent=0 // pred_check_branch
    %25 = sbr.rel (0) target = $region25
  $region24: #{recovery_net_forward.1} parent=0 // pred_region
    _
  $region25: #{recovery_net_forward.1} parent=0 // pred_fallthru
    _
  // Predicated region
  $region26: #{recovery_net_forward.1} parent=0 // pred_check
    _
  $region27: #{recovery_net_forward.1} parent=0 // pred_check_branch
    %27 = sbr.rel (0) target = $region29
  $region28: #{recovery_net_forward.1} parent=0 // pred_region
    _
  $region29: #{recovery_net_forward.1} parent=0 // pred_fallthru
    _
  %v28 = vld [vmem:[%s1] sm:$0xf]
  %s29 = scalar_lea.vmem %s1, 4
  %v30 = vld [vmem:[%s29] sm:$0xf]
  %s31 = scalar_lea.vmem %s1, 8
  %v32 = vld [vmem:[%s31] sm:$0xf]
  %v33 = vld [vmem:[%s2] sm:$0xff]
  %v34 = vld [vmem:[%s2 + $0x8] sm:$0xff]
  %v35 = vld [vmem:[%s2 + $0x10] sm:$0xff]
  %v36 = vld [vmem:[%s2 + $0x18] sm:$0xff]
  %s37 = scalar_lea.vmem %s2, 32
  %v38 = vld [vmem:[%s37] sm:$0xff]
  %v39 = vld [vmem:[%s37 + $0x8] sm:$0xff]
  %v40 = vld [vmem:[%s37 + $0x10] sm:$0xff]
  %v41 = vld [vmem:[%s37 + $0x18] sm:$0xff]
  %s42 = scalar_lea.vmem %s2, 64
  %v43 = vld [vmem:[%s42] sm:$0xff]
  %v44 = vld [vmem:[%s42 + $0x8] sm:$0xff]
  %v45 = vld [vmem:[%s42 + $0x10] sm:$0xff]
  %v46 = vld [vmem:[%s42 + $0x18] sm:$0xff]
  %v47 = vld [vmem:[%s3] sm:$0x1]
  %v48 = vld [vmem:[%s4] sm:$0x1]
  %v49 = vadd.f32 %v47, %v48
  %s50 = scalar_lea.vmem %s3, 1
  %v51 = vld [vmem:[%s50] sm:$0x1]
  %s52 = scalar_lea.vmem %s4, 1
  %v53 = vld [vmem:[%s52] sm:$0x1]
  %v54 = vadd.f32 %v51, %v53
  %s55 = scalar_lea.vmem %s3, 2
  %v56 = vld [vmem:[%s55] sm:$0x1]
  %s57 = scalar_lea.vmem %s4, 2
  %v58 = vld [vmem:[%s57] sm:$0x1]
  %v60 = vlaneseq
  %v61 = vshrl.u32 %v60, 7
  %v62 = vsub.s32 0, %v61
  %v63 = vrot.slane %v58, %v62
  %v65 = vld [vmem:[%s0] sm:$0xff]
  %v66 = vld [vmem:[%s0 + $0x8] sm:$0xff]
  %v67 = vld [vmem:[%s0 + $0x10] sm:$0xff]
  %v68 = vld [vmem:[%s0 + $0x18] sm:$0xff]
  %v69 = vld [vmem:[%s0 + $0x20] sm:$0xff]
  %v70 = vld [vmem:[%s0 + $0x28] sm:$0xff]
  %v71 = vld [vmem:[%s0 + $0x30] sm:$0xff]
  %v72 = vld [vmem:[%s0 + $0x38] sm:$0xff]
  %v74 = vlaneseq
  %v75 = vshrl.u32 %v74, 7
  %v76 = vsub.s32 0, %v75
  %v77 = vrot.slane %v49, %v76
  %vm79 = vcmask 31744
  %v81 = vsel %vm79, %v65, 0
  %v84 = vsel %vm79, %v66, 0
  %v87 = vsel %vm79, %v67, 0
  %v90 = vsel %vm79, %v68, 0
  %v93 = vsel %vm79, %v69, 0
  %v96 = vsel %vm79, %v70, 0
  %v99 = vsel %vm79, %v71, 0
  %v102 = vsel %vm79, %v72, 0
  %vm104 = vcmask 1043456
  %v106 = vsel %vm104, %v28, 0
  %108 = vmatprep.subr.mxu0 0.0
  %109 = vmatpush1.msra.mxu0 0.0
  %110 = vmatprep.subr.mxu0 0.0
  %111 = vmatpush1.msra.mxu0 0.0
  %112 = vmatprep.subr.mxu0 0.0
  %113 = vmatpush1.msra.mxu0 0.0
  %114 = vmatprep.subr.mxu0 0.0
  %115 = vmatpush1.msra.mxu0 0.0
  %116 = vmatprep.subr.mxu0 0.0
  %117 = vmatpush1.msra.mxu0 0.0
  %118 = vmatprep.subr.mxu0 0.0
  %119 = vmatpush1.msra.mxu0 0.0
  %120 = vmatprep.subr.mxu0 0.0
  %121 = vmatpush1.msra.mxu0 0.0
  %122 = vmatprep.subr.mxu0 0.0
  %123 = vmatpush1.msra.mxu0 0.0
  %124 = vmatprep.subr.mxu0 0.0
  %125 = vmatpush1.msra.mxu0 0.0
  %126 = vmatprep.subr.mxu0 0.0
  %127 = vmatpush1.msra.mxu0 0.0
  %128 = vmatprep.subr.mxu0 0.0
  %129 = vmatpush1.msra.mxu0 0.0
  %130 = vmatprep.subr.mxu0 0.0
  %131 = vmatpush1.msra.mxu0 0.0
  %132 = vmatprep.subr.mxu0 0.0
  %133 = vmatpush1.msra.mxu0 0.0
  %134 = vmatprep.subr.mxu0 0.0
  %135 = vmatpush1.msra.mxu0 0.0
  %136 = vmatprep.subr.mxu0 0.0
  %137 = vmatpush1.msra.mxu0 0.0
  %138 = vmatprep.subr.mxu0 0.0
  %139 = vmatpush1.msra.mxu0 %v106
  %140 = vmatprep.subr.mxu0 0.0
  %141 = vmatpush2.msra.mxu0 0.0
  %142 = vmatprep.subr.mxu0 0.0
  %143 = vmatpush2.msra.mxu0 0.0
  %144 = vmatprep.subr.mxu0 0.0
  %145 = vmatpush2.msra.mxu0 0.0
  %146 = vmatprep.subr.mxu0 0.0
  %147 = vmatpush2.msra.mxu0 0.0
  %148 = vmatprep.subr.mxu0 0.0
  %149 = vmatpush2.msra.mxu0 0.0
  %150 = vmatprep.subr.mxu0 0.0
  %151 = vmatpush2.msra.mxu0 0.0
  %152 = vmatprep.subr.mxu0 0.0
  %153 = vmatpush2.msra.mxu0 0.0
  %154 = vmatprep.subr.mxu0 0.0
  %155 = vmatpush2.msra.mxu0 0.0
  %156 = vmatprep.subr.mxu0 0.0
  %157 = vmatpush2.msra.mxu0 0.0
  %158 = vmatprep.subr.mxu0 0.0
  %159 = vmatpush2.msra.mxu0 0.0
  %160 = vmatprep.subr.mxu0 0.0
  %161 = vmatpush2.msra.mxu0 0.0
  %162 = vmatprep.subr.mxu0 0.0
  %163 = vmatpush2.msra.mxu0 0.0
  %164 = vmatprep.subr.mxu0 0.0
  %165 = vmatpush2.msra.mxu0 0.0
  %166 = vmatprep.subr.mxu0 0.0
  %167 = vmatpush2.msra.mxu0 0.0
  %168 = vmatprep.subr.mxu0 0.0
  %169 = vmatpush2.msra.mxu0 0.0
  %170 = vmatprep.subr.mxu0 0.0
  %171 = vmatpush2.msra.mxu0 0.0
  %172 = vmatprep.mubr.f32.mxu0 0.0
  %173 = vmatmul.mubr.f32.gmra.mxu0 %v81
  %v174 = vpop.f32.mrf.mxu0
  %v175 = vadd.f32 %v77, %v174
  %v176 = vpop.f32.mrf.mxu0
  %177 = vmatprep.mubr.f32.mxu0 0.0
  %178 = vmatmul.mubr.f32.gmra.mxu0 %v84
  %v179 = vpop.f32.mrf.mxu0
  %v180 = vadd.f32 %v77, %v179
  %v181 = vpop.f32.mrf.mxu0
  %182 = vmatprep.mubr.f32.mxu0 0.0
  %183 = vmatmul.mubr.f32.gmra.mxu0 %v87
  %v184 = vpop.f32.mrf.mxu0
  %v185 = vadd.f32 %v77, %v184
  %v186 = vpop.f32.mrf.mxu0
  %187 = vmatprep.mubr.f32.mxu0 0.0
  %188 = vmatmul.mubr.f32.gmra.mxu0 %v90
  %v189 = vpop.f32.mrf.mxu0
  %v190 = vadd.f32 %v77, %v189
  %v191 = vpop.f32.mrf.mxu0
  %192 = vmatprep.mubr.f32.mxu0 0.0
  %193 = vmatmul.mubr.f32.gmra.mxu0 %v93
  %v194 = vpop.f32.mrf.mxu0
  %v195 = vadd.f32 %v77, %v194
  %v196 = vpop.f32.mrf.mxu0
  %197 = vmatprep.mubr.f32.mxu0 0.0
  %198 = vmatmul.mubr.f32.gmra.mxu0 %v96
  %v199 = vpop.f32.mrf.mxu0
  %v200 = vadd.f32 %v77, %v199
  %v201 = vpop.f32.mrf.mxu0
  %202 = vmatprep.mubr.f32.mxu0 0.0
  %203 = vmatmul.mubr.f32.gmra.mxu0 %v99
  %v204 = vpop.f32.mrf.mxu0
  %v205 = vadd.f32 %v77, %v204
  %v206 = vpop.f32.mrf.mxu0
  %207 = vmatprep.mubr.f32.mxu0 0.0
  %208 = vmatmul.mubr.f32.gmra.mxu0 %v102
  %v209 = vpop.f32.mrf.mxu0
  %v210 = vadd.f32 %v77, %v209
  %v211 = vpop.f32.mrf.mxu0
  %212 = vdwg.mxu0
  %v214 = vlaneseq
  %v215 = vshrl.u32 %v214, 7
  %v216 = vsub.s32 0, %v215
  %v217 = vrot.slane %v54, %v216
  %v220 = vsel %vm104, %v30, 0
  %222 = vmatprep.subr.mxu0 0.0
  %223 = vmatpush1.msra.mxu0 0.0
  %224 = vmatprep.subr.mxu0 0.0
  %225 = vmatpush1.msra.mxu0 0.0
  %226 = vmatprep.subr.mxu0 0.0
  %227 = vmatpush1.msra.mxu0 0.0
  %228 = vmatprep.subr.mxu0 0.0
  %229 = vmatpush1.msra.mxu0 0.0
  %230 = vmatprep.subr.mxu0 0.0
  %231 = vmatpush1.msra.mxu0 0.0
  %232 = vmatprep.subr.mxu0 0.0
  %233 = vmatpush1.msra.mxu0 0.0
  %234 = vmatprep.subr.mxu0 0.0
  %235 = vmatpush1.msra.mxu0 0.0
  %236 = vmatprep.subr.mxu0 0.0
  %237 = vmatpush1.msra.mxu0 0.0
  %238 = vmatprep.subr.mxu0 0.0
  %239 = vmatpush1.msra.mxu0 0.0
  %240 = vmatprep.subr.mxu0 0.0
  %241 = vmatpush1.msra.mxu0 0.0
  %242 = vmatprep.subr.mxu0 0.0
  %243 = vmatpush1.msra.mxu0 0.0
  %244 = vmatprep.subr.mxu0 0.0
  %245 = vmatpush1.msra.mxu0 0.0
  %246 = vmatprep.subr.mxu0 0.0
  %247 = vmatpush1.msra.mxu0 0.0
  %248 = vmatprep.subr.mxu0 0.0
  %249 = vmatpush1.msra.mxu0 0.0
  %250 = vmatprep.subr.mxu0 0.0
  %251 = vmatpush1.msra.mxu0 0.0
  %252 = vmatprep.subr.mxu0 0.0
  %253 = vmatpush1.msra.mxu0 %v220
  %254 = vmatprep.subr.mxu0 0.0
  %255 = vmatpush2.msra.mxu0 0.0
  %256 = vmatprep.subr.mxu0 0.0
  %257 = vmatpush2.msra.mxu0 0.0
  %258 = vmatprep.subr.mxu0 0.0
  %259 = vmatpush2.msra.mxu0 0.0
  %260 = vmatprep.subr.mxu0 0.0
  %261 = vmatpush2.msra.mxu0 0.0
  %262 = vmatprep.subr.mxu0 0.0
  %263 = vmatpush2.msra.mxu0 0.0
  %264 = vmatprep.subr.mxu0 0.0
  %265 = vmatpush2.msra.mxu0 0.0
  %266 = vmatprep.subr.mxu0 0.0
  %267 = vmatpush2.msra.mxu0 0.0
  %268 = vmatprep.subr.mxu0 0.0
  %269 = vmatpush2.msra.mxu0 0.0
  %270 = vmatprep.subr.mxu0 0.0
  %271 = vmatpush2.msra.mxu0 0.0
  %272 = vmatprep.subr.mxu0 0.0
  %273 = vmatpush2.msra.mxu0 0.0
  %274 = vmatprep.subr.mxu0 0.0
  %275 = vmatpush2.msra.mxu0 0.0
  %276 = vmatprep.subr.mxu0 0.0
  %277 = vmatpush2.msra.mxu0 0.0
  %278 = vmatprep.subr.mxu0 0.0
  %279 = vmatpush2.msra.mxu0 0.0
  %280 = vmatprep.subr.mxu0 0.0
  %281 = vmatpush2.msra.mxu0 0.0
  %282 = vmatprep.subr.mxu0 0.0
  %283 = vmatpush2.msra.mxu0 0.0
  %284 = vmatprep.subr.mxu0 0.0
  %285 = vmatpush2.msra.mxu0 0.0
  %286 = vmatprep.mubr.f32.mxu0 0.0
  %287 = vmatmul.mubr.f32.gmra.mxu0 %v81
  %v288 = vpop.f32.mrf.mxu0
  %v289 = vadd.f32 %v217, %v288
  %v290 = vpop.f32.mrf.mxu0
  %291 = vmatprep.mubr.f32.mxu0 0.0
  %292 = vmatmul.mubr.f32.gmra.mxu0 %v84
  %v293 = vpop.f32.mrf.mxu0
  %v294 = vadd.f32 %v217, %v293
  %v295 = vpop.f32.mrf.mxu0
  %296 = vmatprep.mubr.f32.mxu0 0.0
  %297 = vmatmul.mubr.f32.gmra.mxu0 %v87
  %v298 = vpop.f32.mrf.mxu0
  %v299 = vadd.f32 %v217, %v298
  %v300 = vpop.f32.mrf.mxu0
  %301 = vmatprep.mubr.f32.mxu0 0.0
  %302 = vmatmul.mubr.f32.gmra.mxu0 %v90
  %v303 = vpop.f32.mrf.mxu0
  %v304 = vadd.f32 %v217, %v303
  %v305 = vpop.f32.mrf.mxu0
  %306 = vmatprep.mubr.f32.mxu0 0.0
  %307 = vmatmul.mubr.f32.gmra.mxu0 %v93
  %v308 = vpop.f32.mrf.mxu0
  %v309 = vadd.f32 %v217, %v308
  %v310 = vpop.f32.mrf.mxu0
  %311 = vmatprep.mubr.f32.mxu0 0.0
  %312 = vmatmul.mubr.f32.gmra.mxu0 %v96
  %v313 = vpop.f32.mrf.mxu0
  %v314 = vadd.f32 %v217, %v313
  %v315 = vpop.f32.mrf.mxu0
  %316 = vmatprep.mubr.f32.mxu0 0.0
  %317 = vmatmul.mubr.f32.gmra.mxu0 %v99
  %v318 = vpop.f32.mrf.mxu0
  %v319 = vadd.f32 %v217, %v318
  %v320 = vpop.f32.mrf.mxu0
  %321 = vmatprep.mubr.f32.mxu0 0.0
  %322 = vmatmul.mubr.f32.gmra.mxu0 %v102
  %v323 = vpop.f32.mrf.mxu0
  %v324 = vadd.f32 %v217, %v323
  %v325 = vpop.f32.mrf.mxu0
  %326 = vdwg.mxu0
  %v328 = vlaneseq
  %v329 = vshrl.u32 %v328, 7
  %v330 = vsub.s32 0, %v329
  %v331 = vrot.slane %v56, %v330
  %v334 = vsel %vm104, %v32, 0
  %336 = vmatprep.subr.mxu0 0.0
  %337 = vmatpush1.msra.mxu0 0.0
  %338 = vmatprep.subr.mxu0 0.0
  %339 = vmatpush1.msra.mxu0 0.0
  %340 = vmatprep.subr.mxu0 0.0
  %341 = vmatpush1.msra.mxu0 0.0
  %342 = vmatprep.subr.mxu0 0.0
  %343 = vmatpush1.msra.mxu0 0.0
  %344 = vmatprep.subr.mxu0 0.0
  %345 = vmatpush1.msra.mxu0 0.0
  %346 = vmatprep.subr.mxu0 0.0
  %347 = vmatpush1.msra.mxu0 0.0
  %348 = vmatprep.subr.mxu0 0.0
  %349 = vmatpush1.msra.mxu0 0.0
  %350 = vmatprep.subr.mxu0 0.0
  %351 = vmatpush1.msra.mxu0 0.0
  %352 = vmatprep.subr.mxu0 0.0
  %353 = vmatpush1.msra.mxu0 0.0
  %354 = vmatprep.subr.mxu0 0.0
  %355 = vmatpush1.msra.mxu0 0.0
  %356 = vmatprep.subr.mxu0 0.0
  %357 = vmatpush1.msra.mxu0 0.0
  %358 = vmatprep.subr.mxu0 0.0
  %359 = vmatpush1.msra.mxu0 0.0
  %360 = vmatprep.subr.mxu0 0.0
  %361 = vmatpush1.msra.mxu0 0.0
  %362 = vmatprep.subr.mxu0 0.0
  %363 = vmatpush1.msra.mxu0 0.0
  %364 = vmatprep.subr.mxu0 0.0
  %365 = vmatpush1.msra.mxu0 0.0
  %366 = vmatprep.subr.mxu0 0.0
  %367 = vmatpush1.msra.mxu0 %v334
  %368 = vmatprep.subr.mxu0 0.0
  %369 = vmatpush2.msra.mxu0 0.0
  %370 = vmatprep.subr.mxu0 0.0
  %371 = vmatpush2.msra.mxu0 0.0
  %372 = vmatprep.subr.mxu0 0.0
  %373 = vmatpush2.msra.mxu0 0.0
  %374 = vmatprep.subr.mxu0 0.0
  %375 = vmatpush2.msra.mxu0 0.0
  %376 = vmatprep.subr.mxu0 0.0
  %377 = vmatpush2.msra.mxu0 0.0
  %378 = vmatprep.subr.mxu0 0.0
  %379 = vmatpush2.msra.mxu0 0.0
  %380 = vmatprep.subr.mxu0 0.0
  %381 = vmatpush2.msra.mxu0 0.0
  %382 = vmatprep.subr.mxu0 0.0
  %383 = vmatpush2.msra.mxu0 0.0
  %384 = vmatprep.subr.mxu0 0.0
  %385 = vmatpush2.msra.mxu0 0.0
  %386 = vmatprep.subr.mxu0 0.0
  %387 = vmatpush2.msra.mxu0 0.0
  %388 = vmatprep.subr.mxu0 0.0
  %389 = vmatpush2.msra.mxu0 0.0
  %390 = vmatprep.subr.mxu0 0.0
  %391 = vmatpush2.msra.mxu0 0.0
  %392 = vmatprep.subr.mxu0 0.0
  %393 = vmatpush2.msra.mxu0 0.0
  %394 = vmatprep.subr.mxu0 0.0
  %395 = vmatpush2.msra.mxu0 0.0
  %396 = vmatprep.subr.mxu0 0.0
  %397 = vmatpush2.msra.mxu0 0.0
  %398 = vmatprep.subr.mxu0 0.0
  %399 = vmatpush2.msra.mxu0 0.0
  %400 = vmatprep.mubr.f32.mxu0 0.0
  %401 = vmatmul.mubr.f32.gmra.mxu0 %v81
  %v402 = vpop.f32.mrf.mxu0
  %v403 = vadd.f32 %v331, %v402
  %v404 = vpop.f32.mrf.mxu0
  %405 = vmatprep.mubr.f32.mxu0 0.0
  %406 = vmatmul.mubr.f32.gmra.mxu0 %v84
  %v407 = vpop.f32.mrf.mxu0
  %v408 = vadd.f32 %v331, %v407
  %v409 = vpop.f32.mrf.mxu0
  %410 = vmatprep.mubr.f32.mxu0 0.0
  %411 = vmatmul.mubr.f32.gmra.mxu0 %v87
  %v412 = vpop.f32.mrf.mxu0
  %v413 = vadd.f32 %v331, %v412
  %v414 = vpop.f32.mrf.mxu0
  %415 = vmatprep.mubr.f32.mxu0 0.0
  %416 = vmatmul.mubr.f32.gmra.mxu0 %v90
  %v417 = vpop.f32.mrf.mxu0
  %v418 = vadd.f32 %v331, %v417
  %v419 = vpop.f32.mrf.mxu0
  %420 = vmatprep.mubr.f32.mxu0 0.0
  %421 = vmatmul.mubr.f32.gmra.mxu0 %v93
  %v422 = vpop.f32.mrf.mxu0
  %v423 = vadd.f32 %v331, %v422
  %v424 = vpop.f32.mrf.mxu0
  %425 = vmatprep.mubr.f32.mxu0 0.0
  %426 = vmatmul.mubr.f32.gmra.mxu0 %v96
  %v427 = vpop.f32.mrf.mxu0
  %v428 = vadd.f32 %v331, %v427
  %v429 = vpop.f32.mrf.mxu0
  %430 = vmatprep.mubr.f32.mxu0 0.0
  %431 = vmatmul.mubr.f32.gmra.mxu0 %v99
  %v432 = vpop.f32.mrf.mxu0
  %v433 = vadd.f32 %v331, %v432
  %v434 = vpop.f32.mrf.mxu0
  %435 = vmatprep.mubr.f32.mxu0 0.0
  %436 = vmatmul.mubr.f32.gmra.mxu0 %v102
  %v437 = vpop.f32.mrf.mxu0
  %v438 = vadd.f32 %v331, %v437
  %v439 = vpop.f32.mrf.mxu0
  %440 = vdwg.mxu0
  %vm441 = vcmask 261120
  %v443 = vsel %vm441, 0.0, 0
  %445 = vmatprep.subr.mxu0 0.0
  %446 = vmatpush1.msra.mxu0 0.0
  %447 = vmatprep.subr.mxu0 0.0
  %448 = vmatpush1.msra.mxu0 0.0
  %449 = vmatprep.subr.mxu0 0.0
  %450 = vmatpush1.msra.mxu0 0.0
  %451 = vmatprep.subr.mxu0 0.0
  %452 = vmatpush1.msra.mxu0 0.0
  %453 = vmatprep.subr.mxu0 0.0
  %454 = vmatpush1.msra.mxu0 0.0
  %455 = vmatprep.subr.mxu0 0.0
  %456 = vmatpush1.msra.mxu0 0.0
  %457 = vmatprep.subr.mxu0 0.0
  %458 = vmatpush1.msra.mxu0 0.0
  %459 = vmatprep.subr.mxu0 0.0
  %460 = vmatpush1.msra.mxu0 0.0
  %461 = vmatprep.subr.mxu0 0.0
  %462 = vmatpush1.msra.mxu0 0.0
  %463 = vmatprep.subr.mxu0 0.0
  %464 = vmatpush1.msra.mxu0 0.0
  %465 = vmatprep.subr.mxu0 0.0
  %466 = vmatpush1.msra.mxu0 0.0
  %467 = vmatprep.subr.mxu0 0.0
  %468 = vmatpush1.msra.mxu0 0.0
  %469 = vmatprep.subr.mxu0 0.0
  %470 = vmatpush1.msra.mxu0 %v36
  %471 = vmatprep.subr.mxu0 0.0
  %472 = vmatpush1.msra.mxu0 %v35
  %473 = vmatprep.subr.mxu0 0.0
  %474 = vmatpush1.msra.mxu0 %v34
  %475 = vmatprep.subr.mxu0 0.0
  %476 = vmatpush1.msra.mxu0 %v33
  %477 = vmatprep.subr.mxu0 0.0
  %478 = vmatpush2.msra.mxu0 0.0
  %479 = vmatprep.subr.mxu0 0.0
  %480 = vmatpush2.msra.mxu0 0.0
  %481 = vmatprep.subr.mxu0 0.0
  %482 = vmatpush2.msra.mxu0 0.0
  %483 = vmatprep.subr.mxu0 0.0
  %484 = vmatpush2.msra.mxu0 0.0
  %485 = vmatprep.subr.mxu0 0.0
  %486 = vmatpush2.msra.mxu0 0.0
  %487 = vmatprep.subr.mxu0 0.0
  %488 = vmatpush2.msra.mxu0 0.0
  %489 = vmatprep.subr.mxu0 0.0
  %490 = vmatpush2.msra.mxu0 0.0
  %491 = vmatprep.subr.mxu0 0.0
  %492 = vmatpush2.msra.mxu0 0.0
  %493 = vmatprep.subr.mxu0 0.0
  %494 = vmatpush2.msra.mxu0 0.0
  %495 = vmatprep.subr.mxu0 0.0
  %496 = vmatpush2.msra.mxu0 0.0
  %497 = vmatprep.subr.mxu0 0.0
  %498 = vmatpush2.msra.mxu0 0.0
  %499 = vmatprep.subr.mxu0 0.0
  %500 = vmatpush2.msra.mxu0 0.0
  %501 = vmatprep.subr.mxu0 0.0
  %502 = vmatpush2.msra.mxu0 0.0
  %503 = vmatprep.subr.mxu0 0.0
  %504 = vmatpush2.msra.mxu0 0.0
  %505 = vmatprep.subr.mxu0 0.0
  %506 = vmatpush2.msra.mxu0 0.0
  %507 = vmatprep.subr.mxu0 0.0
  %508 = vmatpush2.msra.mxu0 0.0
  %509 = vmatprep.mubr.f32.mxu0 0.0
  %510 = vmatmul.mubr.f32.gmra.mxu0 %v443
  %v511 = vpop.f32.mrf.mxu0
  %v512 = vadd.f32 0.0, %v511
  %v513 = vpop.f32.mrf.mxu0
  %514 = vdwg.mxu0
  %515 = vmatprep.subr.mxu0 0.0
  %516 = vmatpush1.msra.mxu0 0.0
  %517 = vmatprep.subr.mxu0 0.0
  %518 = vmatpush1.msra.mxu0 0.0
  %519 = vmatprep.subr.mxu0 0.0
  %520 = vmatpush1.msra.mxu0 0.0
  %521 = vmatprep.subr.mxu0 0.0
  %522 = vmatpush1.msra.mxu0 0.0
  %523 = vmatprep.subr.mxu0 0.0
  %524 = vmatpush1.msra.mxu0 0.0
  %525 = vmatprep.subr.mxu0 0.0
  %526 = vmatpush1.msra.mxu0 0.0
  %527 = vmatprep.subr.mxu0 0.0
  %528 = vmatpush1.msra.mxu0 0.0
  %529 = vmatprep.subr.mxu0 0.0
  %530 = vmatpush1.msra.mxu0 0.0
  %531 = vmatprep.subr.mxu0 0.0
  %532 = vmatpush1.msra.mxu0 0.0
  %533 = vmatprep.subr.mxu0 0.0
  %534 = vmatpush1.msra.mxu0 0.0
  %535 = vmatprep.subr.mxu0 0.0
  %536 = vmatpush1.msra.mxu0 0.0
  %537 = vmatprep.subr.mxu0 0.0
  %538 = vmatpush1.msra.mxu0 0.0
  %539 = vmatprep.subr.mxu0 0.0
  %540 = vmatpush1.msra.mxu0 %v41
  %541 = vmatprep.subr.mxu0 0.0
  %542 = vmatpush1.msra.mxu0 %v40
  %543 = vmatprep.subr.mxu0 0.0
  %544 = vmatpush1.msra.mxu0 %v39
  %545 = vmatprep.subr.mxu0 0.0
  %546 = vmatpush1.msra.mxu0 %v38
  %547 = vmatprep.subr.mxu0 0.0
  %548 = vmatpush2.msra.mxu0 0.0
  %549 = vmatprep.subr.mxu0 0.0
  %550 = vmatpush2.msra.mxu0 0.0
  %551 = vmatprep.subr.mxu0 0.0
  %552 = vmatpush2.msra.mxu0 0.0
  %553 = vmatprep.subr.mxu0 0.0
  %554 = vmatpush2.msra.mxu0 0.0
  %555 = vmatprep.subr.mxu0 0.0
  %556 = vmatpush2.msra.mxu0 0.0
  %557 = vmatprep.subr.mxu0 0.0
  %558 = vmatpush2.msra.mxu0 0.0
  %559 = vmatprep.subr.mxu0 0.0
  %560 = vmatpush2.msra.mxu0 0.0
  %561 = vmatprep.subr.mxu0 0.0
  %562 = vmatpush2.msra.mxu0 0.0
  %563 = vmatprep.subr.mxu0 0.0
  %564 = vmatpush2.msra.mxu0 0.0
  %565 = vmatprep.subr.mxu0 0.0
  %566 = vmatpush2.msra.mxu0 0.0
  %567 = vmatprep.subr.mxu0 0.0
  %568 = vmatpush2.msra.mxu0 0.0
  %569 = vmatprep.subr.mxu0 0.0
  %570 = vmatpush2.msra.mxu0 0.0
  %571 = vmatprep.subr.mxu0 0.0
  %572 = vmatpush2.msra.mxu0 0.0
  %573 = vmatprep.subr.mxu0 0.0
  %574 = vmatpush2.msra.mxu0 0.0
  %575 = vmatprep.subr.mxu0 0.0
  %576 = vmatpush2.msra.mxu0 0.0
  %577 = vmatprep.subr.mxu0 0.0
  %578 = vmatpush2.msra.mxu0 0.0
  %579 = vmatprep.mubr.f32.mxu0 0.0
  %580 = vmatmul.mubr.f32.gmra.mxu0 %v443
  %v581 = vpop.f32.mrf.mxu0
  %v582 = vadd.f32 0.0, %v581
  %v583 = vpop.f32.mrf.mxu0
  %584 = vdwg.mxu0
  %585 = vmatprep.subr.mxu0 0.0
  %586 = vmatpush1.msra.mxu0 0.0
  %587 = vmatprep.subr.mxu0 0.0
  %588 = vmatpush1.msra.mxu0 0.0
  %589 = vmatprep.subr.mxu0 0.0
  %590 = vmatpush1.msra.mxu0 0.0
  %591 = vmatprep.subr.mxu0 0.0
  %592 = vmatpush1.msra.mxu0 0.0
  %593 = vmatprep.subr.mxu0 0.0
  %594 = vmatpush1.msra.mxu0 0.0
  %595 = vmatprep.subr.mxu0 0.0
  %596 = vmatpush1.msra.mxu0 0.0
  %597 = vmatprep.subr.mxu0 0.0
  %598 = vmatpush1.msra.mxu0 0.0
  %599 = vmatprep.subr.mxu0 0.0
  %600 = vmatpush1.msra.mxu0 0.0
  %601 = vmatprep.subr.mxu0 0.0
  %602 = vmatpush1.msra.mxu0 0.0
  %603 = vmatprep.subr.mxu0 0.0
  %604 = vmatpush1.msra.mxu0 0.0
  %605 = vmatprep.subr.mxu0 0.0
  %606 = vmatpush1.msra.mxu0 0.0
  %607 = vmatprep.subr.mxu0 0.0
  %608 = vmatpush1.msra.mxu0 0.0
  %609 = vmatprep.subr.mxu0 0.0
  %610 = vmatpush1.msra.mxu0 %v46
  %611 = vmatprep.subr.mxu0 0.0
  %612 = vmatpush1.msra.mxu0 %v45
  %613 = vmatprep.subr.mxu0 0.0
  %614 = vmatpush1.msra.mxu0 %v44
  %615 = vmatprep.subr.mxu0 0.0
  %616 = vmatpush1.msra.mxu0 %v43
  %617 = vmatprep.subr.mxu0 0.0
  %618 = vmatpush2.msra.mxu0 0.0
  %619 = vmatprep.subr.mxu0 0.0
  %620 = vmatpush2.msra.mxu0 0.0
  %621 = vmatprep.subr.mxu0 0.0
  %622 = vmatpush2.msra.mxu0 0.0
  %623 = vmatprep.subr.mxu0 0.0
  %624 = vmatpush2.msra.mxu0 0.0
  %625 = vmatprep.subr.mxu0 0.0
  %626 = vmatpush2.msra.mxu0 0.0
  %627 = vmatprep.subr.mxu0 0.0
  %628 = vmatpush2.msra.mxu0 0.0
  %629 = vmatprep.subr.mxu0 0.0
  %630 = vmatpush2.msra.mxu0 0.0
  %631 = vmatprep.subr.mxu0 0.0
  %632 = vmatpush2.msra.mxu0 0.0
  %633 = vmatprep.subr.mxu0 0.0
  %634 = vmatpush2.msra.mxu0 0.0
  %635 = vmatprep.subr.mxu0 0.0
  %636 = vmatpush2.msra.mxu0 0.0
  %637 = vmatprep.subr.mxu0 0.0
  %638 = vmatpush2.msra.mxu0 0.0
  %639 = vmatprep.subr.mxu0 0.0
  %640 = vmatpush2.msra.mxu0 0.0
  %641 = vmatprep.subr.mxu0 0.0
  %642 = vmatpush2.msra.mxu0 0.0
  %643 = vmatprep.subr.mxu0 0.0
  %644 = vmatpush2.msra.mxu0 0.0
  %645 = vmatprep.subr.mxu0 0.0
  %646 = vmatpush2.msra.mxu0 0.0
  %647 = vmatprep.subr.mxu0 0.0
  %648 = vmatpush2.msra.mxu0 0.0
  %649 = vmatprep.mubr.f32.mxu0 0.0
  %650 = vmatmul.mubr.f32.gmra.mxu0 %v443
  %v651 = vpop.f32.mrf.mxu0
  %v652 = vadd.f32 %v63, %v651
  %v653 = vpop.f32.mrf.mxu0
  %654 = vdwg.mxu0
  %v655 = vadd.f32 %v175, %v512
  %v656 = vxor.u32 %v655, 2147483648
  %v657 = vmul.f32 %v656, 1.442695
  %v658 = vpow.pop %v657
  %v659 = vadd.f32 %v658, 1.0
  %v660 = vrcp.pop %v659
  %v661 = vmul.f32 1.0, %v660
  %v662 = vadd.f32 %v289, %v582
  %v663 = vxor.u32 %v662, 2147483648
  %v664 = vmul.f32 %v663, 1.442695
  %v665 = vpow.pop %v664
  %v666 = vadd.f32 %v665, 1.0
  %v667 = vrcp.pop %v666
  %v668 = vmul.f32 1.0, %v667
  %v669 = vmul.f32 %v661, %v652
  %v670 = vadd.f32 %v403, %v669
  %v671 = vtanh.pop %v670
  %v672 = vsub.f32 1.0, %v668
  %v673 = vmul.f32 %v672, %v671
  %v674 = vmul.f32 %v668, 0.0
  %v675 = vadd.f32 %v673, %v674
  %v676 = vmax.f32 %v675, 0.0
  %677 = vst.msk [vmem:[#allocation2] sm:$0xff] %vm441, %v676
  %v679 = vsel %vm441, %v675, 0
  %681 = vmatprep.subr.mxu0 0.0
  %682 = vmatpush1.msra.mxu0 0.0
  %683 = vmatprep.subr.mxu0 0.0
  %684 = vmatpush1.msra.mxu0 0.0
  %685 = vmatprep.subr.mxu0 0.0
  %686 = vmatpush1.msra.mxu0 0.0
  %687 = vmatprep.subr.mxu0 0.0
  %688 = vmatpush1.msra.mxu0 0.0
  %689 = vmatprep.subr.mxu0 0.0
  %690 = vmatpush1.msra.mxu0 0.0
  %691 = vmatprep.subr.mxu0 0.0
  %692 = vmatpush1.msra.mxu0 0.0
  %693 = vmatprep.subr.mxu0 0.0
  %694 = vmatpush1.msra.mxu0 0.0
  %695 = vmatprep.subr.mxu0 0.0
  %696 = vmatpush1.msra.mxu0 0.0
  %697 = vmatprep.subr.mxu0 0.0
  %698 = vmatpush1.msra.mxu0 0.0
  %699 = vmatprep.subr.mxu0 0.0
  %700 = vmatpush1.msra.mxu0 0.0
  %701 = vmatprep.subr.mxu0 0.0
  %702 = vmatpush1.msra.mxu0 0.0
  %703 = vmatprep.subr.mxu0 0.0
  %704 = vmatpush1.msra.mxu0 0.0
  %705 = vmatprep.subr.mxu0 0.0
  %706 = vmatpush1.msra.mxu0 %v36
  %707 = vmatprep.subr.mxu0 0.0
  %708 = vmatpush1.msra.mxu0 %v35
  %709 = vmatprep.subr.mxu0 0.0
  %710 = vmatpush1.msra.mxu0 %v34
  %711 = vmatprep.subr.mxu0 0.0
  %712 = vmatpush1.msra.mxu0 %v33
  %713 = vmatprep.subr.mxu0 0.0
  %714 = vmatpush2.msra.mxu0 0.0
  %715 = vmatprep.subr.mxu0 0.0
  %716 = vmatpush2.msra.mxu0 0.0
  %717 = vmatprep.subr.mxu0 0.0
  %718 = vmatpush2.msra.mxu0 0.0
  %719 = vmatprep.subr.mxu0 0.0
  %720 = vmatpush2.msra.mxu0 0.0
  %721 = vmatprep.subr.mxu0 0.0
  %722 = vmatpush2.msra.mxu0 0.0
  %723 = vmatprep.subr.mxu0 0.0
  %724 = vmatpush2.msra.mxu0 0.0
  %725 = vmatprep.subr.mxu0 0.0
  %726 = vmatpush2.msra.mxu0 0.0
  %727 = vmatprep.subr.mxu0 0.0
  %728 = vmatpush2.msra.mxu0 0.0
  %729 = vmatprep.subr.mxu0 0.0
  %730 = vmatpush2.msra.mxu0 0.0
  %731 = vmatprep.subr.mxu0 0.0
  %732 = vmatpush2.msra.mxu0 0.0
  %733 = vmatprep.subr.mxu0 0.0
  %734 = vmatpush2.msra.mxu0 0.0
  %735 = vmatprep.subr.mxu0 0.0
  %736 = vmatpush2.msra.mxu0 0.0
  %737 = vmatprep.subr.mxu0 0.0
  %738 = vmatpush2.msra.mxu0 0.0
  %739 = vmatprep.subr.mxu0 0.0
  %740 = vmatpush2.msra.mxu0 0.0
  %741 = vmatprep.subr.mxu0 0.0
  %742 = vmatpush2.msra.mxu0 0.0
  %743 = vmatprep.subr.mxu0 0.0
  %744 = vmatpush2.msra.mxu0 0.0
  %745 = vmatprep.mubr.f32.mxu0 0.0
  %746 = vmatmul.mubr.f32.gmra.mxu0 %v679
  %v747 = vpop.f32.mrf.mxu0
  %v748 = vadd.f32 0.0, %v747
  %v749 = vpop.f32.mrf.mxu0
  %750 = vdwg.mxu0
  %751 = vmatprep.subr.mxu0 0.0
  %752 = vmatpush1.msra.mxu0 0.0
  %753 = vmatprep.subr.mxu0 0.0
  %754 = vmatpush1.msra.mxu0 0.0
  %755 = vmatprep.subr.mxu0 0.0
  %756 = vmatpush1.msra.mxu0 0.0
  %757 = vmatprep.subr.mxu0 0.0
  %758 = vmatpush1.msra.mxu0 0.0
  %759 = vmatprep.subr.mxu0 0.0
  %760 = vmatpush1.msra.mxu0 0.0
  %761 = vmatprep.subr.mxu0 0.0
  %762 = vmatpush1.msra.mxu0 0.0
  %763 = vmatprep.subr.mxu0 0.0
  %764 = vmatpush1.msra.mxu0 0.0
  %765 = vmatprep.subr.mxu0 0.0
  %766 = vmatpush1.msra.mxu0 0.0
  %767 = vmatprep.subr.mxu0 0.0
  %768 = vmatpush1.msra.mxu0 0.0
  %769 = vmatprep.subr.mxu0 0.0
  %770 = vmatpush1.msra.mxu0 0.0
  %771 = vmatprep.subr.mxu0 0.0
  %772 = vmatpush1.msra.mxu0 0.0
  %773 = vmatprep.subr.mxu0 0.0
  %774 = vmatpush1.msra.mxu0 0.0
  %775 = vmatprep.subr.mxu0 0.0
  %776 = vmatpush1.msra.mxu0 %v41
  %777 = vmatprep.subr.mxu0 0.0
  %778 = vmatpush1.msra.mxu0 %v40
  %779 = vmatprep.subr.mxu0 0.0
  %780 = vmatpush1.msra.mxu0 %v39
  %781 = vmatprep.subr.mxu0 0.0
  %782 = vmatpush1.msra.mxu0 %v38
  %783 = vmatprep.subr.mxu0 0.0
  %784 = vmatpush2.msra.mxu0 0.0
  %785 = vmatprep.subr.mxu0 0.0
  %786 = vmatpush2.msra.mxu0 0.0
  %787 = vmatprep.subr.mxu0 0.0
  %788 = vmatpush2.msra.mxu0 0.0
  %789 = vmatprep.subr.mxu0 0.0
  %790 = vmatpush2.msra.mxu0 0.0
  %791 = vmatprep.subr.mxu0 0.0
  %792 = vmatpush2.msra.mxu0 0.0
  %793 = vmatprep.subr.mxu0 0.0
  %794 = vmatpush2.msra.mxu0 0.0
  %795 = vmatprep.subr.mxu0 0.0
  %796 = vmatpush2.msra.mxu0 0.0
  %797 = vmatprep.subr.mxu0 0.0
  %798 = vmatpush2.msra.mxu0 0.0
  %799 = vmatprep.subr.mxu0 0.0
  %800 = vmatpush2.msra.mxu0 0.0
  %801 = vmatprep.subr.mxu0 0.0
  %802 = vmatpush2.msra.mxu0 0.0
  %803 = vmatprep.subr.mxu0 0.0
  %804 = vmatpush2.msra.mxu0 0.0
  %805 = vmatprep.subr.mxu0 0.0
  %806 = vmatpush2.msra.mxu0 0.0
  %807 = vmatprep.subr.mxu0 0.0
  %808 = vmatpush2.msra.mxu0 0.0
  %809 = vmatprep.subr.mxu0 0.0
  %810 = vmatpush2.msra.mxu0 0.0
  %811 = vmatprep.subr.mxu0 0.0
  %812 = vmatpush2.msra.mxu0 0.0
  %813 = vmatprep.subr.mxu0 0.0
  %814 = vmatpush2.msra.mxu0 0.0
  %815 = vmatprep.mubr.f32.mxu0 0.0
  %816 = vmatmul.mubr.f32.gmra.mxu0 %v679
  %v817 = vpop.f32.mrf.mxu0
  %v818 = vadd.f32 0.0, %v817
  %v819 = vpop.f32.mrf.mxu0
  %820 = vdwg.mxu0
  %821 = vmatprep.subr.mxu0 0.0
  %822 = vmatpush1.msra.mxu0 0.0
  %823 = vmatprep.subr.mxu0 0.0
  %824 = vmatpush1.msra.mxu0 0.0
  %825 = vmatprep.subr.mxu0 0.0
  %826 = vmatpush1.msra.mxu0 0.0
  %827 = vmatprep.subr.mxu0 0.0
  %828 = vmatpush1.msra.mxu0 0.0
  %829 = vmatprep.subr.mxu0 0.0
  %830 = vmatpush1.msra.mxu0 0.0
  %831 = vmatprep.subr.mxu0 0.0
  %832 = vmatpush1.msra.mxu0 0.0
  %833 = vmatprep.subr.mxu0 0.0
  %834 = vmatpush1.msra.mxu0 0.0
  %835 = vmatprep.subr.mxu0 0.0
  %836 = vmatpush1.msra.mxu0 0.0
  %837 = vmatprep.subr.mxu0 0.0
  %838 = vmatpush1.msra.mxu0 0.0
  %839 = vmatprep.subr.mxu0 0.0
  %840 = vmatpush1.msra.mxu0 0.0
  %841 = vmatprep.subr.mxu0 0.0
  %842 = vmatpush1.msra.mxu0 0.0
  %843 = vmatprep.subr.mxu0 0.0
  %844 = vmatpush1.msra.mxu0 0.0
  %845 = vmatprep.subr.mxu0 0.0
  %846 = vmatpush1.msra.mxu0 %v46
  %847 = vmatprep.subr.mxu0 0.0
  %848 = vmatpush1.msra.mxu0 %v45
  %849 = vmatprep.subr.mxu0 0.0
  %850 = vmatpush1.msra.mxu0 %v44
  %851 = vmatprep.subr.mxu0 0.0
  %852 = vmatpush1.msra.mxu0 %v43
  %853 = vmatprep.subr.mxu0 0.0
  %854 = vmatpush2.msra.mxu0 0.0
  %855 = vmatprep.subr.mxu0 0.0
  %856 = vmatpush2.msra.mxu0 0.0
  %857 = vmatprep.subr.mxu0 0.0
  %858 = vmatpush2.msra.mxu0 0.0
  %859 = vmatprep.subr.mxu0 0.0
  %860 = vmatpush2.msra.mxu0 0.0
  %861 = vmatprep.subr.mxu0 0.0
  %862 = vmatpush2.msra.mxu0 0.0
  %863 = vmatprep.subr.mxu0 0.0
  %864 = vmatpush2.msra.mxu0 0.0
  %865 = vmatprep.subr.mxu0 0.0
  %866 = vmatpush2.msra.mxu0 0.0
  %867 = vmatprep.subr.mxu0 0.0
  %868 = vmatpush2.msra.mxu0 0.0
  %869 = vmatprep.subr.mxu0 0.0
  %870 = vmatpush2.msra.mxu0 0.0
  %871 = vmatprep.subr.mxu0 0.0
  %872 = vmatpush2.msra.mxu0 0.0
  %873 = vmatprep.subr.mxu0 0.0
  %874 = vmatpush2.msra.mxu0 0.0
  %875 = vmatprep.subr.mxu0 0.0
  %876 = vmatpush2.msra.mxu0 0.0
  %877 = vmatprep.subr.mxu0 0.0
  %878 = vmatpush2.msra.mxu0 0.0
  %879 = vmatprep.subr.mxu0 0.0
  %880 = vmatpush2.msra.mxu0 0.0
  %881 = vmatprep.subr.mxu0 0.0
  %882 = vmatpush2.msra.mxu0 0.0
  %883 = vmatprep.subr.mxu0 0.0
  %884 = vmatpush2.msra.mxu0 0.0
  %885 = vmatprep.mubr.f32.mxu0 0.0
  %886 = vmatmul.mubr.f32.gmra.mxu0 %v679
  %v887 = vpop.f32.mrf.mxu0
  %v888 = vadd.f32 %v63, %v887
  %v889 = vpop.f32.mrf.mxu0
  %890 = vdwg.mxu0
  %v891 = vadd.f32 %v180, %v748
  %v892 = vxor.u32 %v891, 2147483648
  %v893 = vmul.f32 %v892, 1.442695
  %v894 = vpow.pop %v893
  %v895 = vadd.f32 %v894, 1.0
  %v896 = vrcp.pop %v895
  %v897 = vmul.f32 1.0, %v896
  %v898 = vadd.f32 %v294, %v818
  %v899 = vxor.u32 %v898, 2147483648
  %v900 = vmul.f32 %v899, 1.442695
  %v901 = vpow.pop %v900
  %v902 = vadd.f32 %v901, 1.0
  %v903 = vrcp.pop %v902
  %v904 = vmul.f32 1.0, %v903
  %v905 = vmul.f32 %v897, %v888
  %v906 = vadd.f32 %v408, %v905
  %v907 = vtanh.pop %v906
  %v908 = vsub.f32 1.0, %v904
  %v909 = vmul.f32 %v908, %v907
  %v910 = vmul.f32 %v904, %v675
  %v911 = vadd.f32 %v909, %v910
  %v912 = vmax.f32 %v911, 0.0
  %s913 = scalar_lea.vmem [#allocation2], 8
  %914 = vst.msk [vmem:[%s913] sm:$0xff] %vm441, %v912
  %v916 = vsel %vm441, %v911, 0
  %918 = vmatprep.subr.mxu0 0.0
  %919 = vmatpush1.msra.mxu0 0.0
  %920 = vmatprep.subr.mxu0 0.0
  %921 = vmatpush1.msra.mxu0 0.0
  %922 = vmatprep.subr.mxu0 0.0
  %923 = vmatpush1.msra.mxu0 0.0
  %924 = vmatprep.subr.mxu0 0.0
  %925 = vmatpush1.msra.mxu0 0.0
  %926 = vmatprep.subr.mxu0 0.0
  %927 = vmatpush1.msra.mxu0 0.0
  %928 = vmatprep.subr.mxu0 0.0
  %929 = vmatpush1.msra.mxu0 0.0
  %930 = vmatprep.subr.mxu0 0.0
  %931 = vmatpush1.msra.mxu0 0.0
  %932 = vmatprep.subr.mxu0 0.0
  %933 = vmatpush1.msra.mxu0 0.0
  %934 = vmatprep.subr.mxu0 0.0
  %935 = vmatpush1.msra.mxu0 0.0
  %936 = vmatprep.subr.mxu0 0.0
  %937 = vmatpush1.msra.mxu0 0.0
  %938 = vmatprep.subr.mxu0 0.0
  %939 = vmatpush1.msra.mxu0 0.0
  %940 = vmatprep.subr.mxu0 0.0
  %941 = vmatpush1.msra.mxu0 0.0
  %942 = vmatprep.subr.mxu0 0.0
  %943 = vmatpush1.msra.mxu0 %v36
  %944 = vmatprep.subr.mxu0 0.0
  %945 = vmatpush1.msra.mxu0 %v35
  %946 = vmatprep.subr.mxu0 0.0
  %947 = vmatpush1.msra.mxu0 %v34
  %948 = vmatprep.subr.mxu0 0.0
  %949 = vmatpush1.msra.mxu0 %v33
  %950 = vmatprep.subr.mxu0 0.0
  %951 = vmatpush2.msra.mxu0 0.0
  %952 = vmatprep.subr.mxu0 0.0
  %953 = vmatpush2.msra.mxu0 0.0
  %954 = vmatprep.subr.mxu0 0.0
  %955 = vmatpush2.msra.mxu0 0.0
  %956 = vmatprep.subr.mxu0 0.0
  %957 = vmatpush2.msra.mxu0 0.0
  %958 = vmatprep.subr.mxu0 0.0
  %959 = vmatpush2.msra.mxu0 0.0
  %960 = vmatprep.subr.mxu0 0.0
  %961 = vmatpush2.msra.mxu0 0.0
  %962 = vmatprep.subr.mxu0 0.0
  %963 = vmatpush2.msra.mxu0 0.0
  %964 = vmatprep.subr.mxu0 0.0
  %965 = vmatpush2.msra.mxu0 0.0
  %966 = vmatprep.subr.mxu0 0.0
  %967 = vmatpush2.msra.mxu0 0.0
  %968 = vmatprep.subr.mxu0 0.0
  %969 = vmatpush2.msra.mxu0 0.0
  %970 = vmatprep.subr.mxu0 0.0
  %971 = vmatpush2.msra.mxu0 0.0
  %972 = vmatprep.subr.mxu0 0.0
  %973 = vmatpush2.msra.mxu0 0.0
  %974 = vmatprep.subr.mxu0 0.0
  %975 = vmatpush2.msra.mxu0 0.0
  %976 = vmatprep.subr.mxu0 0.0
  %977 = vmatpush2.msra.mxu0 0.0
  %978 = vmatprep.subr.mxu0 0.0
  %979 = vmatpush2.msra.mxu0 0.0
  %980 = vmatprep.subr.mxu0 0.0
  %981 = vmatpush2.msra.mxu0 0.0
  %982 = vmatprep.mubr.f32.mxu0 0.0
  %983 = vmatmul.mubr.f32.gmra.mxu0 %v916
  %v984 = vpop.f32.mrf.mxu0
  %v985 = vadd.f32 0.0, %v984
  %v986 = vpop.f32.mrf.mxu0
  %987 = vdwg.mxu0
  %988 = vmatprep.subr.mxu0 0.0
  %989 = vmatpush1.msra.mxu0 0.0
  %990 = vmatprep.subr.mxu0 0.0
  %991 = vmatpush1.msra.mxu0 0.0
  %992 = vmatprep.subr.mxu0 0.0
  %993 = vmatpush1.msra.mxu0 0.0
  %994 = vmatprep.subr.mxu0 0.0
  %995 = vmatpush1.msra.mxu0 0.0
  %996 = vmatprep.subr.mxu0 0.0
  %997 = vmatpush1.msra.mxu0 0.0
  %998 = vmatprep.subr.mxu0 0.0
  %999 = vmatpush1.msra.mxu0 0.0
  %1000 = vmatprep.subr.mxu0 0.0
  %1001 = vmatpush1.msra.mxu0 0.0
  %1002 = vmatprep.subr.mxu0 0.0
  %1003 = vmatpush1.msra.mxu0 0.0
  %1004 = vmatprep.subr.mxu0 0.0
  %1005 = vmatpush1.msra.mxu0 0.0
  %1006 = vmatprep.subr.mxu0 0.0
  %1007 = vmatpush1.msra.mxu0 0.0
  %1008 = vmatprep.subr.mxu0 0.0
  %1009 = vmatpush1.msra.mxu0 0.0
  %1010 = vmatprep.subr.mxu0 0.0
  %1011 = vmatpush1.msra.mxu0 0.0
  %1012 = vmatprep.subr.mxu0 0.0
  %1013 = vmatpush1.msra.mxu0 %v41
  %1014 = vmatprep.subr.mxu0 0.0
  %1015 = vmatpush1.msra.mxu0 %v40
  %1016 = vmatprep.subr.mxu0 0.0
  %1017 = vmatpush1.msra.mxu0 %v39
  %1018 = vmatprep.subr.mxu0 0.0
  %1019 = vmatpush1.msra.mxu0 %v38
  %1020 = vmatprep.subr.mxu0 0.0
  %1021 = vmatpush2.msra.mxu0 0.0
  %1022 = vmatprep.subr.mxu0 0.0
  %1023 = vmatpush2.msra.mxu0 0.0
  %1024 = vmatprep.subr.mxu0 0.0
  %1025 = vmatpush2.msra.mxu0 0.0
  %1026 = vmatprep.subr.mxu0 0.0
  %1027 = vmatpush2.msra.mxu0 0.0
  %1028 = vmatprep.subr.mxu0 0.0
  %1029 = vmatpush2.msra.mxu0 0.0
  %1030 = vmatprep.subr.mxu0 0.0
  %1031 = vmatpush2.msra.mxu0 0.0
  %1032 = vmatprep.subr.mxu0 0.0
  %1033 = vmatpush2.msra.mxu0 0.0
  %1034 = vmatprep.subr.mxu0 0.0
  %1035 = vmatpush2.msra.mxu0 0.0
  %1036 = vmatprep.subr.mxu0 0.0
  %1037 = vmatpush2.msra.mxu0 0.0
  %1038 = vmatprep.subr.mxu0 0.0
  %1039 = vmatpush2.msra.mxu0 0.0
  %1040 = vmatprep.subr.mxu0 0.0
  %1041 = vmatpush2.msra.mxu0 0.0
  %1042 = vmatprep.subr.mxu0 0.0
  %1043 = vmatpush2.msra.mxu0 0.0
  %1044 = vmatprep.subr.mxu0 0.0
  %1045 = vmatpush2.msra.mxu0 0.0
  %1046 = vmatprep.subr.mxu0 0.0
  %1047 = vmatpush2.msra.mxu0 0.0
  %1048 = vmatprep.subr.mxu0 0.0
  %1049 = vmatpush2.msra.mxu0 0.0
  %1050 = vmatprep.subr.mxu0 0.0
  %1051 = vmatpush2.msra.mxu0 0.0
  %1052 = vmatprep.mubr.f32.mxu0 0.0
  %1053 = vmatmul.mubr.f32.gmra.mxu0 %v916
  %v1054 = vpop.f32.mrf.mxu0
  %v1055 = vadd.f32 0.0, %v1054
  %v1056 = vpop.f32.mrf.mxu0
  %1057 = vdwg.mxu0
  %1058 = vmatprep.subr.mxu0 0.0
  %1059 = vmatpush1.msra.mxu0 0.0
  %1060 = vmatprep.subr.mxu0 0.0
  %1061 = vmatpush1.msra.mxu0 0.0
  %1062 = vmatprep.subr.mxu0 0.0
  %1063 = vmatpush1.msra.mxu0 0.0
  %1064 = vmatprep.subr.mxu0 0.0
  %1065 = vmatpush1.msra.mxu0 0.0
  %1066 = vmatprep.subr.mxu0 0.0
  %1067 = vmatpush1.msra.mxu0 0.0
  %1068 = vmatprep.subr.mxu0 0.0
  %1069 = vmatpush1.msra.mxu0 0.0
  %1070 = vmatprep.subr.mxu0 0.0
  %1071 = vmatpush1.msra.mxu0 0.0
  %1072 = vmatprep.subr.mxu0 0.0
  %1073 = vmatpush1.msra.mxu0 0.0
  %1074 = vmatprep.subr.mxu0 0.0
  %1075 = vmatpush1.msra.mxu0 0.0
  %1076 = vmatprep.subr.mxu0 0.0
  %1077 = vmatpush1.msra.mxu0 0.0
  %1078 = vmatprep.subr.mxu0 0.0
  %1079 = vmatpush1.msra.mxu0 0.0
  %1080 = vmatprep.subr.mxu0 0.0
  %1081 = vmatpush1.msra.mxu0 0.0
  %1082 = vmatprep.subr.mxu0 0.0
  %1083 = vmatpush1.msra.mxu0 %v46
  %1084 = vmatprep.subr.mxu0 0.0
  %1085 = vmatpush1.msra.mxu0 %v45
  %1086 = vmatprep.subr.mxu0 0.0
  %1087 = vmatpush1.msra.mxu0 %v44
  %1088 = vmatprep.subr.mxu0 0.0
  %1089 = vmatpush1.msra.mxu0 %v43
  %1090 = vmatprep.subr.mxu0 0.0
  %1091 = vmatpush2.msra.mxu0 0.0
  %1092 = vmatprep.subr.mxu0 0.0
  %1093 = vmatpush2.msra.mxu0 0.0
  %1094 = vmatprep.subr.mxu0 0.0
  %1095 = vmatpush2.msra.mxu0 0.0
  %1096 = vmatprep.subr.mxu0 0.0
  %1097 = vmatpush2.msra.mxu0 0.0
  %1098 = vmatprep.subr.mxu0 0.0
  %1099 = vmatpush2.msra.mxu0 0.0
  %1100 = vmatprep.subr.mxu0 0.0
  %1101 = vmatpush2.msra.mxu0 0.0
  %1102 = vmatprep.subr.mxu0 0.0
  %1103 = vmatpush2.msra.mxu0 0.0
  %1104 = vmatprep.subr.mxu0 0.0
  %1105 = vmatpush2.msra.mxu0 0.0
  %1106 = vmatprep.subr.mxu0 0.0
  %1107 = vmatpush2.msra.mxu0 0.0
  %1108 = vmatprep.subr.mxu0 0.0
  %1109 = vmatpush2.msra.mxu0 0.0
  %1110 = vmatprep.subr.mxu0 0.0
  %1111 = vmatpush2.msra.mxu0 0.0
  %1112 = vmatprep.subr.mxu0 0.0
  %1113 = vmatpush2.msra.mxu0 0.0
  %1114 = vmatprep.subr.mxu0 0.0
  %1115 = vmatpush2.msra.mxu0 0.0
  %1116 = vmatprep.subr.mxu0 0.0
  %1117 = vmatpush2.msra.mxu0 0.0
  %1118 = vmatprep.subr.mxu0 0.0
  %1119 = vmatpush2.msra.mxu0 0.0
  %1120 = vmatprep.subr.mxu0 0.0
  %1121 = vmatpush2.msra.mxu0 0.0
  %1122 = vmatprep.mubr.f32.mxu0 0.0
  %1123 = vmatmul.mubr.f32.gmra.mxu0 %v916
  %v1124 = vpop.f32.mrf.mxu0
  %v1125 = vadd.f32 %v63, %v1124
  %v1126 = vpop.f32.mrf.mxu0
  %1127 = vdwg.mxu0
  %v1128 = vadd.f32 %v185, %v985
  %v1129 = vxor.u32 %v1128, 2147483648
  %v1130 = vmul.f32 %v1129, 1.442695
  %v1131 = vpow.pop %v1130
  %v1132 = vadd.f32 %v1131, 1.0
  %v1133 = vrcp.pop %v1132
  %v1134 = vmul.f32 1.0, %v1133
  %v1135 = vadd.f32 %v299, %v1055
  %v1136 = vxor.u32 %v1135, 2147483648
  %v1137 = vmul.f32 %v1136, 1.442695
  %v1138 = vpow.pop %v1137
  %v1139 = vadd.f32 %v1138, 1.0
  %v1140 = vrcp.pop %v1139
  %v1141 = vmul.f32 1.0, %v1140
  %v1142 = vmul.f32 %v1134, %v1125
  %v1143 = vadd.f32 %v413, %v1142
  %v1144 = vtanh.pop %v1143
  %v1145 = vsub.f32 1.0, %v1141
  %v1146 = vmul.f32 %v1145, %v1144
  %v1147 = vmul.f32 %v1141, %v911
  %v1148 = vadd.f32 %v1146, %v1147
  %v1149 = vmax.f32 %v1148, 0.0
  %s1150 = scalar_lea.vmem [#allocation2], 16
  %1151 = vst.msk [vmem:[%s1150] sm:$0xff] %vm441, %v1149
  %v1153 = vsel %vm441, %v1148, 0
  %1155 = vmatprep.subr.mxu0 0.0
  %1156 = vmatpush1.msra.mxu0 0.0
  %1157 = vmatprep.subr.mxu0 0.0
  %1158 = vmatpush1.msra.mxu0 0.0
  %1159 = vmatprep.subr.mxu0 0.0
  %1160 = vmatpush1.msra.mxu0 0.0
  %1161 = vmatprep.subr.mxu0 0.0
  %1162 = vmatpush1.msra.mxu0 0.0
  %1163 = vmatprep.subr.mxu0 0.0
  %1164 = vmatpush1.msra.mxu0 0.0
  %1165 = vmatprep.subr.mxu0 0.0
  %1166 = vmatpush1.msra.mxu0 0.0
  %1167 = vmatprep.subr.mxu0 0.0
  %1168 = vmatpush1.msra.mxu0 0.0
  %1169 = vmatprep.subr.mxu0 0.0
  %1170 = vmatpush1.msra.mxu0 0.0
  %1171 = vmatprep.subr.mxu0 0.0
  %1172 = vmatpush1.msra.mxu0 0.0
  %1173 = vmatprep.subr.mxu0 0.0
  %1174 = vmatpush1.msra.mxu0 0.0
  %1175 = vmatprep.subr.mxu0 0.0
  %1176 = vmatpush1.msra.mxu0 0.0
  %1177 = vmatprep.subr.mxu0 0.0
  %1178 = vmatpush1.msra.mxu0 0.0
  %1179 = vmatprep.subr.mxu0 0.0
  %1180 = vmatpush1.msra.mxu0 %v36
  %1181 = vmatprep.subr.mxu0 0.0
  %1182 = vmatpush1.msra.mxu0 %v35
  %1183 = vmatprep.subr.mxu0 0.0
  %1184 = vmatpush1.msra.mxu0 %v34
  %1185 = vmatprep.subr.mxu0 0.0
  %1186 = vmatpush1.msra.mxu0 %v33
  %1187 = vmatprep.subr.mxu0 0.0
  %1188 = vmatpush2.msra.mxu0 0.0
  %1189 = vmatprep.subr.mxu0 0.0
  %1190 = vmatpush2.msra.mxu0 0.0
  %1191 = vmatprep.subr.mxu0 0.0
  %1192 = vmatpush2.msra.mxu0 0.0
  %1193 = vmatprep.subr.mxu0 0.0
  %1194 = vmatpush2.msra.mxu0 0.0
  %1195 = vmatprep.subr.mxu0 0.0
  %1196 = vmatpush2.msra.mxu0 0.0
  %1197 = vmatprep.subr.mxu0 0.0
  %1198 = vmatpush2.msra.mxu0 0.0
  %1199 = vmatprep.subr.mxu0 0.0
  %1200 = vmatpush2.msra.mxu0 0.0
  %1201 = vmatprep.subr.mxu0 0.0
  %1202 = vmatpush2.msra.mxu0 0.0
  %1203 = vmatprep.subr.mxu0 0.0
  %1204 = vmatpush2.msra.mxu0 0.0
  %1205 = vmatprep.subr.mxu0 0.0
  %1206 = vmatpush2.msra.mxu0 0.0
  %1207 = vmatprep.subr.mxu0 0.0
  %1208 = vmatpush2.msra.mxu0 0.0
  %1209 = vmatprep.subr.mxu0 0.0
  %1210 = vmatpush2.msra.mxu0 0.0
  %1211 = vmatprep.subr.mxu0 0.0
  %1212 = vmatpush2.msra.mxu0 0.0
  %1213 = vmatprep.subr.mxu0 0.0
  %1214 = vmatpush2.msra.mxu0 0.0
  %1215 = vmatprep.subr.mxu0 0.0
  %1216 = vmatpush2.msra.mxu0 0.0
  %1217 = vmatprep.subr.mxu0 0.0
  %1218 = vmatpush2.msra.mxu0 0.0
  %1219 = vmatprep.mubr.f32.mxu0 0.0
  %1220 = vmatmul.mubr.f32.gmra.mxu0 %v1153
  %v1221 = vpop.f32.mrf.mxu0
  %v1222 = vadd.f32 0.0, %v1221
  %v1223 = vpop.f32.mrf.mxu0
  %1224 = vdwg.mxu0
  %1225 = vmatprep.subr.mxu0 0.0
  %1226 = vmatpush1.msra.mxu0 0.0
  %1227 = vmatprep.subr.mxu0 0.0
  %1228 = vmatpush1.msra.mxu0 0.0
  %1229 = vmatprep.subr.mxu0 0.0
  %1230 = vmatpush1.msra.mxu0 0.0
  %1231 = vmatprep.subr.mxu0 0.0
  %1232 = vmatpush1.msra.mxu0 0.0
  %1233 = vmatprep.subr.mxu0 0.0
  %1234 = vmatpush1.msra.mxu0 0.0
  %1235 = vmatprep.subr.mxu0 0.0
  %1236 = vmatpush1.msra.mxu0 0.0
  %1237 = vmatprep.subr.mxu0 0.0
  %1238 = vmatpush1.msra.mxu0 0.0
  %1239 = vmatprep.subr.mxu0 0.0
  %1240 = vmatpush1.msra.mxu0 0.0
  %1241 = vmatprep.subr.mxu0 0.0
  %1242 = vmatpush1.msra.mxu0 0.0
  %1243 = vmatprep.subr.mxu0 0.0
  %1244 = vmatpush1.msra.mxu0 0.0
  %1245 = vmatprep.subr.mxu0 0.0
  %1246 = vmatpush1.msra.mxu0 0.0
  %1247 = vmatprep.subr.mxu0 0.0
  %1248 = vmatpush1.msra.mxu0 0.0
  %1249 = vmatprep.subr.mxu0 0.0
  %1250 = vmatpush1.msra.mxu0 %v41
  %1251 = vmatprep.subr.mxu0 0.0
  %1252 = vmatpush1.msra.mxu0 %v40
  %1253 = vmatprep.subr.mxu0 0.0
  %1254 = vmatpush1.msra.mxu0 %v39
  %1255 = vmatprep.subr.mxu0 0.0
  %1256 = vmatpush1.msra.mxu0 %v38
  %1257 = vmatprep.subr.mxu0 0.0
  %1258 = vmatpush2.msra.mxu0 0.0
  %1259 = vmatprep.subr.mxu0 0.0
  %1260 = vmatpush2.msra.mxu0 0.0
  %1261 = vmatprep.subr.mxu0 0.0
  %1262 = vmatpush2.msra.mxu0 0.0
  %1263 = vmatprep.subr.mxu0 0.0
  %1264 = vmatpush2.msra.mxu0 0.0
  %1265 = vmatprep.subr.mxu0 0.0
  %1266 = vmatpush2.msra.mxu0 0.0
  %1267 = vmatprep.subr.mxu0 0.0
  %1268 = vmatpush2.msra.mxu0 0.0
  %1269 = vmatprep.subr.mxu0 0.0
  %1270 = vmatpush2.msra.mxu0 0.0
  %1271 = vmatprep.subr.mxu0 0.0
  %1272 = vmatpush2.msra.mxu0 0.0
  %1273 = vmatprep.subr.mxu0 0.0
  %1274 = vmatpush2.msra.mxu0 0.0
  %1275 = vmatprep.subr.mxu0 0.0
  %1276 = vmatpush2.msra.mxu0 0.0
  %1277 = vmatprep.subr.mxu0 0.0
  %1278 = vmatpush2.msra.mxu0 0.0
  %1279 = vmatprep.subr.mxu0 0.0
  %1280 = vmatpush2.msra.mxu0 0.0
  %1281 = vmatprep.subr.mxu0 0.0
  %1282 = vmatpush2.msra.mxu0 0.0
  %1283 = vmatprep.subr.mxu0 0.0
  %1284 = vmatpush2.msra.mxu0 0.0
  %1285 = vmatprep.subr.mxu0 0.0
  %1286 = vmatpush2.msra.mxu0 0.0
  %1287 = vmatprep.subr.mxu0 0.0
  %1288 = vmatpush2.msra.mxu0 0.0
  %1289 = vmatprep.mubr.f32.mxu0 0.0
  %1290 = vmatmul.mubr.f32.gmra.mxu0 %v1153
  %v1291 = vpop.f32.mrf.mxu0
  %v1292 = vadd.f32 0.0, %v1291
  %v1293 = vpop.f32.mrf.mxu0
  %1294 = vdwg.mxu0
  %1295 = vmatprep.subr.mxu0 0.0
  %1296 = vmatpush1.msra.mxu0 0.0
  %1297 = vmatprep.subr.mxu0 0.0
  %1298 = vmatpush1.msra.mxu0 0.0
  %1299 = vmatprep.subr.mxu0 0.0
  %1300 = vmatpush1.msra.mxu0 0.0
  %1301 = vmatprep.subr.mxu0 0.0
  %1302 = vmatpush1.msra.mxu0 0.0
  %1303 = vmatprep.subr.mxu0 0.0
  %1304 = vmatpush1.msra.mxu0 0.0
  %1305 = vmatprep.subr.mxu0 0.0
  %1306 = vmatpush1.msra.mxu0 0.0
  %1307 = vmatprep.subr.mxu0 0.0
  %1308 = vmatpush1.msra.mxu0 0.0
  %1309 = vmatprep.subr.mxu0 0.0
  %1310 = vmatpush1.msra.mxu0 0.0
  %1311 = vmatprep.subr.mxu0 0.0
  %1312 = vmatpush1.msra.mxu0 0.0
  %1313 = vmatprep.subr.mxu0 0.0
  %1314 = vmatpush1.msra.mxu0 0.0
  %1315 = vmatprep.subr.mxu0 0.0
  %1316 = vmatpush1.msra.mxu0 0.0
  %1317 = vmatprep.subr.mxu0 0.0
  %1318 = vmatpush1.msra.mxu0 0.0
  %1319 = vmatprep.subr.mxu0 0.0
  %1320 = vmatpush1.msra.mxu0 %v46
  %1321 = vmatprep.subr.mxu0 0.0
  %1322 = vmatpush1.msra.mxu0 %v45
  %1323 = vmatprep.subr.mxu0 0.0
  %1324 = vmatpush1.msra.mxu0 %v44
  %1325 = vmatprep.subr.mxu0 0.0
  %1326 = vmatpush1.msra.mxu0 %v43
  %1327 = vmatprep.subr.mxu0 0.0
  %1328 = vmatpush2.msra.mxu0 0.0
  %1329 = vmatprep.subr.mxu0 0.0
  %1330 = vmatpush2.msra.mxu0 0.0
  %1331 = vmatprep.subr.mxu0 0.0
  %1332 = vmatpush2.msra.mxu0 0.0
  %1333 = vmatprep.subr.mxu0 0.0
  %1334 = vmatpush2.msra.mxu0 0.0
  %1335 = vmatprep.subr.mxu0 0.0
  %1336 = vmatpush2.msra.mxu0 0.0
  %1337 = vmatprep.subr.mxu0 0.0
  %1338 = vmatpush2.msra.mxu0 0.0
  %1339 = vmatprep.subr.mxu0 0.0
  %1340 = vmatpush2.msra.mxu0 0.0
  %1341 = vmatprep.subr.mxu0 0.0
  %1342 = vmatpush2.msra.mxu0 0.0
  %1343 = vmatprep.subr.mxu0 0.0
  %1344 = vmatpush2.msra.mxu0 0.0
  %1345 = vmatprep.subr.mxu0 0.0
  %1346 = vmatpush2.msra.mxu0 0.0
  %1347 = vmatprep.subr.mxu0 0.0
  %1348 = vmatpush2.msra.mxu0 0.0
  %1349 = vmatprep.subr.mxu0 0.0
  %1350 = vmatpush2.msra.mxu0 0.0
  %1351 = vmatprep.subr.mxu0 0.0
  %1352 = vmatpush2.msra.mxu0 0.0
  %1353 = vmatprep.subr.mxu0 0.0
  %1354 = vmatpush2.msra.mxu0 0.0
  %1355 = vmatprep.subr.mxu0 0.0
  %1356 = vmatpush2.msra.mxu0 0.0
  %1357 = vmatprep.subr.mxu0 0.0
  %1358 = vmatpush2.msra.mxu0 0.0
  %1359 = vmatprep.mubr.f32.mxu0 0.0
  %1360 = vmatmul.mubr.f32.gmra.mxu0 %v1153
  %v1361 = vpop.f32.mrf.mxu0
  %v1362 = vadd.f32 %v63, %v1361
  %v1363 = vpop.f32.mrf.mxu0
  %1364 = vdwg.mxu0
  %v1365 = vadd.f32 %v190, %v1222
  %v1366 = vxor.u32 %v1365, 2147483648
  %v1367 = vmul.f32 %v1366, 1.442695
  %v1368 = vpow.pop %v1367
  %v1369 = vadd.f32 %v1368, 1.0
  %v1370 = vrcp.pop %v1369
  %v1371 = vmul.f32 1.0, %v1370
  %v1372 = vadd.f32 %v304, %v1292
  %v1373 = vxor.u32 %v1372, 2147483648
  %v1374 = vmul.f32 %v1373, 1.442695
  %v1375 = vpow.pop %v1374
  %v1376 = vadd.f32 %v1375, 1.0
  %v1377 = vrcp.pop %v1376
  %v1378 = vmul.f32 1.0, %v1377
  %v1379 = vmul.f32 %v1371, %v1362
  %v1380 = vadd.f32 %v418, %v1379
  %v1381 = vtanh.pop %v1380
  %v1382 = vsub.f32 1.0, %v1378
  %v1383 = vmul.f32 %v1382, %v1381
  %v1384 = vmul.f32 %v1378, %v1148
  %v1385 = vadd.f32 %v1383, %v1384
  %v1386 = vmax.f32 %v1385, 0.0
  %s1387 = scalar_lea.vmem [#allocation2], 24
  %1388 = vst.msk [vmem:[%s1387] sm:$0xff] %vm441, %v1386
  %v1390 = vsel %vm441, %v1385, 0
  %1392 = vmatprep.subr.mxu0 0.0
  %1393 = vmatpush1.msra.mxu0 0.0
  %1394 = vmatprep.subr.mxu0 0.0
  %1395 = vmatpush1.msra.mxu0 0.0
  %1396 = vmatprep.subr.mxu0 0.0
  %1397 = vmatpush1.msra.mxu0 0.0
  %1398 = vmatprep.subr.mxu0 0.0
  %1399 = vmatpush1.msra.mxu0 0.0
  %1400 = vmatprep.subr.mxu0 0.0
  %1401 = vmatpush1.msra.mxu0 0.0
  %1402 = vmatprep.subr.mxu0 0.0
  %1403 = vmatpush1.msra.mxu0 0.0
  %1404 = vmatprep.subr.mxu0 0.0
  %1405 = vmatpush1.msra.mxu0 0.0
  %1406 = vmatprep.subr.mxu0 0.0
  %1407 = vmatpush1.msra.mxu0 0.0
  %1408 = vmatprep.subr.mxu0 0.0
  %1409 = vmatpush1.msra.mxu0 0.0
  %1410 = vmatprep.subr.mxu0 0.0
  %1411 = vmatpush1.msra.mxu0 0.0
  %1412 = vmatprep.subr.mxu0 0.0
  %1413 = vmatpush1.msra.mxu0 0.0
  %1414 = vmatprep.subr.mxu0 0.0
  %1415 = vmatpush1.msra.mxu0 0.0
  %1416 = vmatprep.subr.mxu0 0.0
  %1417 = vmatpush1.msra.mxu0 %v36
  %1418 = vmatprep.subr.mxu0 0.0
  %1419 = vmatpush1.msra.mxu0 %v35
  %1420 = vmatprep.subr.mxu0 0.0
  %1421 = vmatpush1.msra.mxu0 %v34
  %1422 = vmatprep.subr.mxu0 0.0
  %1423 = vmatpush1.msra.mxu0 %v33
  %1424 = vmatprep.subr.mxu0 0.0
  %1425 = vmatpush2.msra.mxu0 0.0
  %1426 = vmatprep.subr.mxu0 0.0
  %1427 = vmatpush2.msra.mxu0 0.0
  %1428 = vmatprep.subr.mxu0 0.0
  %1429 = vmatpush2.msra.mxu0 0.0
  %1430 = vmatprep.subr.mxu0 0.0
  %1431 = vmatpush2.msra.mxu0 0.0
  %1432 = vmatprep.subr.mxu0 0.0
  %1433 = vmatpush2.msra.mxu0 0.0
  %1434 = vmatprep.subr.mxu0 0.0
  %1435 = vmatpush2.msra.mxu0 0.0
  %1436 = vmatprep.subr.mxu0 0.0
  %1437 = vmatpush2.msra.mxu0 0.0
  %1438 = vmatprep.subr.mxu0 0.0
  %1439 = vmatpush2.msra.mxu0 0.0
  %1440 = vmatprep.subr.mxu0 0.0
  %1441 = vmatpush2.msra.mxu0 0.0
  %1442 = vmatprep.subr.mxu0 0.0
  %1443 = vmatpush2.msra.mxu0 0.0
  %1444 = vmatprep.subr.mxu0 0.0
  %1445 = vmatpush2.msra.mxu0 0.0
  %1446 = vmatprep.subr.mxu0 0.0
  %1447 = vmatpush2.msra.mxu0 0.0
  %1448 = vmatprep.subr.mxu0 0.0
  %1449 = vmatpush2.msra.mxu0 0.0
  %1450 = vmatprep.subr.mxu0 0.0
  %1451 = vmatpush2.msra.mxu0 0.0
  %1452 = vmatprep.subr.mxu0 0.0
  %1453 = vmatpush2.msra.mxu0 0.0
  %1454 = vmatprep.subr.mxu0 0.0
  %1455 = vmatpush2.msra.mxu0 0.0
  %1456 = vmatprep.mubr.f32.mxu0 0.0
  %1457 = vmatmul.mubr.f32.gmra.mxu0 %v1390
  %v1458 = vpop.f32.mrf.mxu0
  %v1459 = vadd.f32 0.0, %v1458
  %v1460 = vpop.f32.mrf.mxu0
  %1461 = vdwg.mxu0
  %1462 = vmatprep.subr.mxu0 0.0
  %1463 = vmatpush1.msra.mxu0 0.0
  %1464 = vmatprep.subr.mxu0 0.0
  %1465 = vmatpush1.msra.mxu0 0.0
  %1466 = vmatprep.subr.mxu0 0.0
  %1467 = vmatpush1.msra.mxu0 0.0
  %1468 = vmatprep.subr.mxu0 0.0
  %1469 = vmatpush1.msra.mxu0 0.0
  %1470 = vmatprep.subr.mxu0 0.0
  %1471 = vmatpush1.msra.mxu0 0.0
  %1472 = vmatprep.subr.mxu0 0.0
  %1473 = vmatpush1.msra.mxu0 0.0
  %1474 = vmatprep.subr.mxu0 0.0
  %1475 = vmatpush1.msra.mxu0 0.0
  %1476 = vmatprep.subr.mxu0 0.0
  %1477 = vmatpush1.msra.mxu0 0.0
  %1478 = vmatprep.subr.mxu0 0.0
  %1479 = vmatpush1.msra.mxu0 0.0
  %1480 = vmatprep.subr.mxu0 0.0
  %1481 = vmatpush1.msra.mxu0 0.0
  %1482 = vmatprep.subr.mxu0 0.0
  %1483 = vmatpush1.msra.mxu0 0.0
  %1484 = vmatprep.subr.mxu0 0.0
  %1485 = vmatpush1.msra.mxu0 0.0
  %1486 = vmatprep.subr.mxu0 0.0
  %1487 = vmatpush1.msra.mxu0 %v41
  %1488 = vmatprep.subr.mxu0 0.0
  %1489 = vmatpush1.msra.mxu0 %v40
  %1490 = vmatprep.subr.mxu0 0.0
  %1491 = vmatpush1.msra.mxu0 %v39
  %1492 = vmatprep.subr.mxu0 0.0
  %1493 = vmatpush1.msra.mxu0 %v38
  %1494 = vmatprep.subr.mxu0 0.0
  %1495 = vmatpush2.msra.mxu0 0.0
  %1496 = vmatprep.subr.mxu0 0.0
  %1497 = vmatpush2.msra.mxu0 0.0
  %1498 = vmatprep.subr.mxu0 0.0
  %1499 = vmatpush2.msra.mxu0 0.0
  %1500 = vmatprep.subr.mxu0 0.0
  %1501 = vmatpush2.msra.mxu0 0.0
  %1502 = vmatprep.subr.mxu0 0.0
  %1503 = vmatpush2.msra.mxu0 0.0
  %1504 = vmatprep.subr.mxu0 0.0
  %1505 = vmatpush2.msra.mxu0 0.0
  %1506 = vmatprep.subr.mxu0 0.0
  %1507 = vmatpush2.msra.mxu0 0.0
  %1508 = vmatprep.subr.mxu0 0.0
  %1509 = vmatpush2.msra.mxu0 0.0
  %1510 = vmatprep.subr.mxu0 0.0
  %1511 = vmatpush2.msra.mxu0 0.0
  %1512 = vmatprep.subr.mxu0 0.0
  %1513 = vmatpush2.msra.mxu0 0.0
  %1514 = vmatprep.subr.mxu0 0.0
  %1515 = vmatpush2.msra.mxu0 0.0
  %1516 = vmatprep.subr.mxu0 0.0
  %1517 = vmatpush2.msra.mxu0 0.0
  %1518 = vmatprep.subr.mxu0 0.0
  %1519 = vmatpush2.msra.mxu0 0.0
  %1520 = vmatprep.subr.mxu0 0.0
  %1521 = vmatpush2.msra.mxu0 0.0
  %1522 = vmatprep.subr.mxu0 0.0
  %1523 = vmatpush2.msra.mxu0 0.0
  %1524 = vmatprep.subr.mxu0 0.0
  %1525 = vmatpush2.msra.mxu0 0.0
  %1526 = vmatprep.mubr.f32.mxu0 0.0
  %1527 = vmatmul.mubr.f32.gmra.mxu0 %v1390
  %v1528 = vpop.f32.mrf.mxu0
  %v1529 = vadd.f32 0.0, %v1528
  %v1530 = vpop.f32.mrf.mxu0
  %1531 = vdwg.mxu0
  %1532 = vmatprep.subr.mxu0 0.0
  %1533 = vmatpush1.msra.mxu0 0.0
  %1534 = vmatprep.subr.mxu0 0.0
  %1535 = vmatpush1.msra.mxu0 0.0
  %1536 = vmatprep.subr.mxu0 0.0
  %1537 = vmatpush1.msra.mxu0 0.0
  %1538 = vmatprep.subr.mxu0 0.0
  %1539 = vmatpush1.msra.mxu0 0.0
  %1540 = vmatprep.subr.mxu0 0.0
  %1541 = vmatpush1.msra.mxu0 0.0
  %1542 = vmatprep.subr.mxu0 0.0
  %1543 = vmatpush1.msra.mxu0 0.0
  %1544 = vmatprep.subr.mxu0 0.0
  %1545 = vmatpush1.msra.mxu0 0.0
  %1546 = vmatprep.subr.mxu0 0.0
  %1547 = vmatpush1.msra.mxu0 0.0
  %1548 = vmatprep.subr.mxu0 0.0
  %1549 = vmatpush1.msra.mxu0 0.0
  %1550 = vmatprep.subr.mxu0 0.0
  %1551 = vmatpush1.msra.mxu0 0.0
  %1552 = vmatprep.subr.mxu0 0.0
  %1553 = vmatpush1.msra.mxu0 0.0
  %1554 = vmatprep.subr.mxu0 0.0
  %1555 = vmatpush1.msra.mxu0 0.0
  %1556 = vmatprep.subr.mxu0 0.0
  %1557 = vmatpush1.msra.mxu0 %v46
  %1558 = vmatprep.subr.mxu0 0.0
  %1559 = vmatpush1.msra.mxu0 %v45
  %1560 = vmatprep.subr.mxu0 0.0
  %1561 = vmatpush1.msra.mxu0 %v44
  %1562 = vmatprep.subr.mxu0 0.0
  %1563 = vmatpush1.msra.mxu0 %v43
  %1564 = vmatprep.subr.mxu0 0.0
  %1565 = vmatpush2.msra.mxu0 0.0
  %1566 = vmatprep.subr.mxu0 0.0
  %1567 = vmatpush2.msra.mxu0 0.0
  %1568 = vmatprep.subr.mxu0 0.0
  %1569 = vmatpush2.msra.mxu0 0.0
  %1570 = vmatprep.subr.mxu0 0.0
  %1571 = vmatpush2.msra.mxu0 0.0
  %1572 = vmatprep.subr.mxu0 0.0
  %1573 = vmatpush2.msra.mxu0 0.0
  %1574 = vmatprep.subr.mxu0 0.0
  %1575 = vmatpush2.msra.mxu0 0.0
  %1576 = vmatprep.subr.mxu0 0.0
  %1577 = vmatpush2.msra.mxu0 0.0
  %1578 = vmatprep.subr.mxu0 0.0
  %1579 = vmatpush2.msra.mxu0 0.0
  %1580 = vmatprep.subr.mxu0 0.0
  %1581 = vmatpush2.msra.mxu0 0.0
  %1582 = vmatprep.subr.mxu0 0.0
  %1583 = vmatpush2.msra.mxu0 0.0
  %1584 = vmatprep.subr.mxu0 0.0
  %1585 = vmatpush2.msra.mxu0 0.0
  %1586 = vmatprep.subr.mxu0 0.0
  %1587 = vmatpush2.msra.mxu0 0.0
  %1588 = vmatprep.subr.mxu0 0.0
  %1589 = vmatpush2.msra.mxu0 0.0
  %1590 = vmatprep.subr.mxu0 0.0
  %1591 = vmatpush2.msra.mxu0 0.0
  %1592 = vmatprep.subr.mxu0 0.0
  %1593 = vmatpush2.msra.mxu0 0.0
  %1594 = vmatprep.subr.mxu0 0.0
  %1595 = vmatpush2.msra.mxu0 0.0
  %1596 = vmatprep.mubr.f32.mxu0 0.0
  %1597 = vmatmul.mubr.f32.gmra.mxu0 %v1390
  %v1598 = vpop.f32.mrf.mxu0
  %v1599 = vadd.f32 %v63, %v1598
  %v1600 = vpop.f32.mrf.mxu0
  %1601 = vdwg.mxu0
  %v1602 = vadd.f32 %v195, %v1459
  %v1603 = vxor.u32 %v1602, 2147483648
  %v1604 = vmul.f32 %v1603, 1.442695
  %v1605 = vpow.pop %v1604
  %v1606 = vadd.f32 %v1605, 1.0
  %v1607 = vrcp.pop %v1606
  %v1608 = vmul.f32 1.0, %v1607
  %v1609 = vadd.f32 %v309, %v1529
  %v1610 = vxor.u32 %v1609, 2147483648
  %v1611 = vmul.f32 %v1610, 1.442695
  %v1612 = vpow.pop %v1611
  %v1613 = vadd.f32 %v1612, 1.0
  %v1614 = vrcp.pop %v1613
  %v1615 = vmul.f32 1.0, %v1614
  %v1616 = vmul.f32 %v1608, %v1599
  %v1617 = vadd.f32 %v423, %v1616
  %v1618 = vtanh.pop %v1617
  %v1619 = vsub.f32 1.0, %v1615
  %v1620 = vmul.f32 %v1619, %v1618
  %v1621 = vmul.f32 %v1615, %v1385
  %v1622 = vadd.f32 %v1620, %v1621
  %v1623 = vmax.f32 %v1622, 0.0
  %s1624 = scalar_lea.vmem [#allocation2], 32
  %1625 = vst.msk [vmem:[%s1624] sm:$0xff] %vm441, %v1623
  %v1627 = vsel %vm441, %v1622, 0
  %1629 = vmatprep.subr.mxu0 0.0
  %1630 = vmatpush1.msra.mxu0 0.0
  %1631 = vmatprep.subr.mxu0 0.0
  %1632 = vmatpush1.msra.mxu0 0.0
  %1633 = vmatprep.subr.mxu0 0.0
  %1634 = vmatpush1.msra.mxu0 0.0
  %1635 = vmatprep.subr.mxu0 0.0
  %1636 = vmatpush1.msra.mxu0 0.0
  %1637 = vmatprep.subr.mxu0 0.0
  %1638 = vmatpush1.msra.mxu0 0.0
  %1639 = vmatprep.subr.mxu0 0.0
  %1640 = vmatpush1.msra.mxu0 0.0
  %1641 = vmatprep.subr.mxu0 0.0
  %1642 = vmatpush1.msra.mxu0 0.0
  %1643 = vmatprep.subr.mxu0 0.0
  %1644 = vmatpush1.msra.mxu0 0.0
  %1645 = vmatprep.subr.mxu0 0.0
  %1646 = vmatpush1.msra.mxu0 0.0
  %1647 = vmatprep.subr.mxu0 0.0
  %1648 = vmatpush1.msra.mxu0 0.0
  %1649 = vmatprep.subr.mxu0 0.0
  %1650 = vmatpush1.msra.mxu0 0.0
  %1651 = vmatprep.subr.mxu0 0.0
  %1652 = vmatpush1.msra.mxu0 0.0
  %1653 = vmatprep.subr.mxu0 0.0
  %1654 = vmatpush1.msra.mxu0 %v36
  %1655 = vmatprep.subr.mxu0 0.0
  %1656 = vmatpush1.msra.mxu0 %v35
  %1657 = vmatprep.subr.mxu0 0.0
  %1658 = vmatpush1.msra.mxu0 %v34
  %1659 = vmatprep.subr.mxu0 0.0
  %1660 = vmatpush1.msra.mxu0 %v33
  %1661 = vmatprep.subr.mxu0 0.0
  %1662 = vmatpush2.msra.mxu0 0.0
  %1663 = vmatprep.subr.mxu0 0.0
  %1664 = vmatpush2.msra.mxu0 0.0
  %1665 = vmatprep.subr.mxu0 0.0
  %1666 = vmatpush2.msra.mxu0 0.0
  %1667 = vmatprep.subr.mxu0 0.0
  %1668 = vmatpush2.msra.mxu0 0.0
  %1669 = vmatprep.subr.mxu0 0.0
  %1670 = vmatpush2.msra.mxu0 0.0
  %1671 = vmatprep.subr.mxu0 0.0
  %1672 = vmatpush2.msra.mxu0 0.0
  %1673 = vmatprep.subr.mxu0 0.0
  %1674 = vmatpush2.msra.mxu0 0.0
  %1675 = vmatprep.subr.mxu0 0.0
  %1676 = vmatpush2.msra.mxu0 0.0
  %1677 = vmatprep.subr.mxu0 0.0
  %1678 = vmatpush2.msra.mxu0 0.0
  %1679 = vmatprep.subr.mxu0 0.0
  %1680 = vmatpush2.msra.mxu0 0.0
  %1681 = vmatprep.subr.mxu0 0.0
  %1682 = vmatpush2.msra.mxu0 0.0
  %1683 = vmatprep.subr.mxu0 0.0
  %1684 = vmatpush2.msra.mxu0 0.0
  %1685 = vmatprep.subr.mxu0 0.0
  %1686 = vmatpush2.msra.mxu0 0.0
  %1687 = vmatprep.subr.mxu0 0.0
  %1688 = vmatpush2.msra.mxu0 0.0
  %1689 = vmatprep.subr.mxu0 0.0
  %1690 = vmatpush2.msra.mxu0 0.0
  %1691 = vmatprep.subr.mxu0 0.0
  %1692 = vmatpush2.msra.mxu0 0.0
  %1693 = vmatprep.mubr.f32.mxu0 0.0
  %1694 = vmatmul.mubr.f32.gmra.mxu0 %v1627
  %v1695 = vpop.f32.mrf.mxu0
  %v1696 = vadd.f32 0.0, %v1695
  %v1697 = vpop.f32.mrf.mxu0
  %1698 = vdwg.mxu0
  %1699 = vmatprep.subr.mxu0 0.0
  %1700 = vmatpush1.msra.mxu0 0.0
  %1701 = vmatprep.subr.mxu0 0.0
  %1702 = vmatpush1.msra.mxu0 0.0
  %1703 = vmatprep.subr.mxu0 0.0
  %1704 = vmatpush1.msra.mxu0 0.0
  %1705 = vmatprep.subr.mxu0 0.0
  %1706 = vmatpush1.msra.mxu0 0.0
  %1707 = vmatprep.subr.mxu0 0.0
  %1708 = vmatpush1.msra.mxu0 0.0
  %1709 = vmatprep.subr.mxu0 0.0
  %1710 = vmatpush1.msra.mxu0 0.0
  %1711 = vmatprep.subr.mxu0 0.0
  %1712 = vmatpush1.msra.mxu0 0.0
  %1713 = vmatprep.subr.mxu0 0.0
  %1714 = vmatpush1.msra.mxu0 0.0
  %1715 = vmatprep.subr.mxu0 0.0
  %1716 = vmatpush1.msra.mxu0 0.0
  %1717 = vmatprep.subr.mxu0 0.0
  %1718 = vmatpush1.msra.mxu0 0.0
  %1719 = vmatprep.subr.mxu0 0.0
  %1720 = vmatpush1.msra.mxu0 0.0
  %1721 = vmatprep.subr.mxu0 0.0
  %1722 = vmatpush1.msra.mxu0 0.0
  %1723 = vmatprep.subr.mxu0 0.0
  %1724 = vmatpush1.msra.mxu0 %v41
  %1725 = vmatprep.subr.mxu0 0.0
  %1726 = vmatpush1.msra.mxu0 %v40
  %1727 = vmatprep.subr.mxu0 0.0
  %1728 = vmatpush1.msra.mxu0 %v39
  %1729 = vmatprep.subr.mxu0 0.0
  %1730 = vmatpush1.msra.mxu0 %v38
  %1731 = vmatprep.subr.mxu0 0.0
  %1732 = vmatpush2.msra.mxu0 0.0
  %1733 = vmatprep.subr.mxu0 0.0
  %1734 = vmatpush2.msra.mxu0 0.0
  %1735 = vmatprep.subr.mxu0 0.0
  %1736 = vmatpush2.msra.mxu0 0.0
  %1737 = vmatprep.subr.mxu0 0.0
  %1738 = vmatpush2.msra.mxu0 0.0
  %1739 = vmatprep.subr.mxu0 0.0
  %1740 = vmatpush2.msra.mxu0 0.0
  %1741 = vmatprep.subr.mxu0 0.0
  %1742 = vmatpush2.msra.mxu0 0.0
  %1743 = vmatprep.subr.mxu0 0.0
  %1744 = vmatpush2.msra.mxu0 0.0
  %1745 = vmatprep.subr.mxu0 0.0
  %1746 = vmatpush2.msra.mxu0 0.0
  %1747 = vmatprep.subr.mxu0 0.0
  %1748 = vmatpush2.msra.mxu0 0.0
  %1749 = vmatprep.subr.mxu0 0.0
  %1750 = vmatpush2.msra.mxu0 0.0
  %1751 = vmatprep.subr.mxu0 0.0
  %1752 = vmatpush2.msra.mxu0 0.0
  %1753 = vmatprep.subr.mxu0 0.0
  %1754 = vmatpush2.msra.mxu0 0.0
  %1755 = vmatprep.subr.mxu0 0.0
  %1756 = vmatpush2.msra.mxu0 0.0
  %1757 = vmatprep.subr.mxu0 0.0
  %1758 = vmatpush2.msra.mxu0 0.0
  %1759 = vmatprep.subr.mxu0 0.0
  %1760 = vmatpush2.msra.mxu0 0.0
  %1761 = vmatprep.subr.mxu0 0.0
  %1762 = vmatpush2.msra.mxu0 0.0
  %1763 = vmatprep.mubr.f32.mxu0 0.0
  %1764 = vmatmul.mubr.f32.gmra.mxu0 %v1627
  %v1765 = vpop.f32.mrf.mxu0
  %v1766 = vadd.f32 0.0, %v1765
  %v1767 = vpop.f32.mrf.mxu0
  %1768 = vdwg.mxu0
  %1769 = vmatprep.subr.mxu0 0.0
  %1770 = vmatpush1.msra.mxu0 0.0
  %1771 = vmatprep.subr.mxu0 0.0
  %1772 = vmatpush1.msra.mxu0 0.0
  %1773 = vmatprep.subr.mxu0 0.0
  %1774 = vmatpush1.msra.mxu0 0.0
  %1775 = vmatprep.subr.mxu0 0.0
  %1776 = vmatpush1.msra.mxu0 0.0
  %1777 = vmatprep.subr.mxu0 0.0
  %1778 = vmatpush1.msra.mxu0 0.0
  %1779 = vmatprep.subr.mxu0 0.0
  %1780 = vmatpush1.msra.mxu0 0.0
  %1781 = vmatprep.subr.mxu0 0.0
  %1782 = vmatpush1.msra.mxu0 0.0
  %1783 = vmatprep.subr.mxu0 0.0
  %1784 = vmatpush1.msra.mxu0 0.0
  %1785 = vmatprep.subr.mxu0 0.0
  %1786 = vmatpush1.msra.mxu0 0.0
  %1787 = vmatprep.subr.mxu0 0.0
  %1788 = vmatpush1.msra.mxu0 0.0
  %1789 = vmatprep.subr.mxu0 0.0
  %1790 = vmatpush1.msra.mxu0 0.0
  %1791 = vmatprep.subr.mxu0 0.0
  %1792 = vmatpush1.msra.mxu0 0.0
  %1793 = vmatprep.subr.mxu0 0.0
  %1794 = vmatpush1.msra.mxu0 %v46
  %1795 = vmatprep.subr.mxu0 0.0
  %1796 = vmatpush1.msra.mxu0 %v45
  %1797 = vmatprep.subr.mxu0 0.0
  %1798 = vmatpush1.msra.mxu0 %v44
  %1799 = vmatprep.subr.mxu0 0.0
  %1800 = vmatpush1.msra.mxu0 %v43
  %1801 = vmatprep.subr.mxu0 0.0
  %1802 = vmatpush2.msra.mxu0 0.0
  %1803 = vmatprep.subr.mxu0 0.0
  %1804 = vmatpush2.msra.mxu0 0.0
  %1805 = vmatprep.subr.mxu0 0.0
  %1806 = vmatpush2.msra.mxu0 0.0
  %1807 = vmatprep.subr.mxu0 0.0
  %1808 = vmatpush2.msra.mxu0 0.0
  %1809 = vmatprep.subr.mxu0 0.0
  %1810 = vmatpush2.msra.mxu0 0.0
  %1811 = vmatprep.subr.mxu0 0.0
  %1812 = vmatpush2.msra.mxu0 0.0
  %1813 = vmatprep.subr.mxu0 0.0
  %1814 = vmatpush2.msra.mxu0 0.0
  %1815 = vmatprep.subr.mxu0 0.0
  %1816 = vmatpush2.msra.mxu0 0.0
  %1817 = vmatprep.subr.mxu0 0.0
  %1818 = vmatpush2.msra.mxu0 0.0
  %1819 = vmatprep.subr.mxu0 0.0
  %1820 = vmatpush2.msra.mxu0 0.0
  %1821 = vmatprep.subr.mxu0 0.0
  %1822 = vmatpush2.msra.mxu0 0.0
  %1823 = vmatprep.subr.mxu0 0.0
  %1824 = vmatpush2.msra.mxu0 0.0
  %1825 = vmatprep.subr.mxu0 0.0
  %1826 = vmatpush2.msra.mxu0 0.0
  %1827 = vmatprep.subr.mxu0 0.0
  %1828 = vmatpush2.msra.mxu0 0.0
  %1829 = vmatprep.subr.mxu0 0.0
  %1830 = vmatpush2.msra.mxu0 0.0
  %1831 = vmatprep.subr.mxu0 0.0
  %1832 = vmatpush2.msra.mxu0 0.0
  %1833 = vmatprep.mubr.f32.mxu0 0.0
  %1834 = vmatmul.mubr.f32.gmra.mxu0 %v1627
  %v1835 = vpop.f32.mrf.mxu0
  %v1836 = vadd.f32 %v63, %v1835
  %v1837 = vpop.f32.mrf.mxu0
  %1838 = vdwg.mxu0
  %v1839 = vadd.f32 %v200, %v1696
  %v1840 = vxor.u32 %v1839, 2147483648
  %v1841 = vmul.f32 %v1840, 1.442695
  %v1842 = vpow.pop %v1841
  %v1843 = vadd.f32 %v1842, 1.0
  %v1844 = vrcp.pop %v1843
  %v1845 = vmul.f32 1.0, %v1844
  %v1846 = vadd.f32 %v314, %v1766
  %v1847 = vxor.u32 %v1846, 2147483648
  %v1848 = vmul.f32 %v1847, 1.442695
  %v1849 = vpow.pop %v1848
  %v1850 = vadd.f32 %v1849, 1.0
  %v1851 = vrcp.pop %v1850
  %v1852 = vmul.f32 1.0, %v1851
  %v1853 = vmul.f32 %v1845, %v1836
  %v1854 = vadd.f32 %v428, %v1853
  %v1855 = vtanh.pop %v1854
  %v1856 = vsub.f32 1.0, %v1852
  %v1857 = vmul.f32 %v1856, %v1855
  %v1858 = vmul.f32 %v1852, %v1622
  %v1859 = vadd.f32 %v1857, %v1858
  %v1860 = vmax.f32 %v1859, 0.0
  %s1861 = scalar_lea.vmem [#allocation2], 40
  %1862 = vst.msk [vmem:[%s1861] sm:$0xff] %vm441, %v1860
  %v1864 = vsel %vm441, %v1859, 0
  %1866 = vmatprep.subr.mxu0 0.0
  %1867 = vmatpush1.msra.mxu0 0.0
  %1868 = vmatprep.subr.mxu0 0.0
  %1869 = vmatpush1.msra.mxu0 0.0
  %1870 = vmatprep.subr.mxu0 0.0
  %1871 = vmatpush1.msra.mxu0 0.0
  %1872 = vmatprep.subr.mxu0 0.0
  %1873 = vmatpush1.msra.mxu0 0.0
  %1874 = vmatprep.subr.mxu0 0.0
  %1875 = vmatpush1.msra.mxu0 0.0
  %1876 = vmatprep.subr.mxu0 0.0
  %1877 = vmatpush1.msra.mxu0 0.0
  %1878 = vmatprep.subr.mxu0 0.0
  %1879 = vmatpush1.msra.mxu0 0.0
  %1880 = vmatprep.subr.mxu0 0.0
  %1881 = vmatpush1.msra.mxu0 0.0
  %1882 = vmatprep.subr.mxu0 0.0
  %1883 = vmatpush1.msra.mxu0 0.0
  %1884 = vmatprep.subr.mxu0 0.0
  %1885 = vmatpush1.msra.mxu0 0.0
  %1886 = vmatprep.subr.mxu0 0.0
  %1887 = vmatpush1.msra.mxu0 0.0
  %1888 = vmatprep.subr.mxu0 0.0
  %1889 = vmatpush1.msra.mxu0 0.0
  %1890 = vmatprep.subr.mxu0 0.0
  %1891 = vmatpush1.msra.mxu0 %v36
  %1892 = vmatprep.subr.mxu0 0.0
  %1893 = vmatpush1.msra.mxu0 %v35
  %1894 = vmatprep.subr.mxu0 0.0
  %1895 = vmatpush1.msra.mxu0 %v34
  %1896 = vmatprep.subr.mxu0 0.0
  %1897 = vmatpush1.msra.mxu0 %v33
  %1898 = vmatprep.subr.mxu0 0.0
  %1899 = vmatpush2.msra.mxu0 0.0
  %1900 = vmatprep.subr.mxu0 0.0
  %1901 = vmatpush2.msra.mxu0 0.0
  %1902 = vmatprep.subr.mxu0 0.0
  %1903 = vmatpush2.msra.mxu0 0.0
  %1904 = vmatprep.subr.mxu0 0.0
  %1905 = vmatpush2.msra.mxu0 0.0
  %1906 = vmatprep.subr.mxu0 0.0
  %1907 = vmatpush2.msra.mxu0 0.0
  %1908 = vmatprep.subr.mxu0 0.0
  %1909 = vmatpush2.msra.mxu0 0.0
  %1910 = vmatprep.subr.mxu0 0.0
  %1911 = vmatpush2.msra.mxu0 0.0
  %1912 = vmatprep.subr.mxu0 0.0
  %1913 = vmatpush2.msra.mxu0 0.0
  %1914 = vmatprep.subr.mxu0 0.0
  %1915 = vmatpush2.msra.mxu0 0.0
  %1916 = vmatprep.subr.mxu0 0.0
  %1917 = vmatpush2.msra.mxu0 0.0
  %1918 = vmatprep.subr.mxu0 0.0
  %1919 = vmatpush2.msra.mxu0 0.0
  %1920 = vmatprep.subr.mxu0 0.0
  %1921 = vmatpush2.msra.mxu0 0.0
  %1922 = vmatprep.subr.mxu0 0.0
  %1923 = vmatpush2.msra.mxu0 0.0
  %1924 = vmatprep.subr.mxu0 0.0
  %1925 = vmatpush2.msra.mxu0 0.0
  %1926 = vmatprep.subr.mxu0 0.0
  %1927 = vmatpush2.msra.mxu0 0.0
  %1928 = vmatprep.subr.mxu0 0.0
  %1929 = vmatpush2.msra.mxu0 0.0
  %1930 = vmatprep.mubr.f32.mxu0 0.0
  %1931 = vmatmul.mubr.f32.gmra.mxu0 %v1864
  %v1932 = vpop.f32.mrf.mxu0
  %v1933 = vadd.f32 0.0, %v1932
  %v1934 = vpop.f32.mrf.mxu0
  %1935 = vdwg.mxu0
  %1936 = vmatprep.subr.mxu0 0.0
  %1937 = vmatpush1.msra.mxu0 0.0
  %1938 = vmatprep.subr.mxu0 0.0
  %1939 = vmatpush1.msra.mxu0 0.0
  %1940 = vmatprep.subr.mxu0 0.0
  %1941 = vmatpush1.msra.mxu0 0.0
  %1942 = vmatprep.subr.mxu0 0.0
  %1943 = vmatpush1.msra.mxu0 0.0
  %1944 = vmatprep.subr.mxu0 0.0
  %1945 = vmatpush1.msra.mxu0 0.0
  %1946 = vmatprep.subr.mxu0 0.0
  %1947 = vmatpush1.msra.mxu0 0.0
  %1948 = vmatprep.subr.mxu0 0.0
  %1949 = vmatpush1.msra.mxu0 0.0
  %1950 = vmatprep.subr.mxu0 0.0
  %1951 = vmatpush1.msra.mxu0 0.0
  %1952 = vmatprep.subr.mxu0 0.0
  %1953 = vmatpush1.msra.mxu0 0.0
  %1954 = vmatprep.subr.mxu0 0.0
  %1955 = vmatpush1.msra.mxu0 0.0
  %1956 = vmatprep.subr.mxu0 0.0
  %1957 = vmatpush1.msra.mxu0 0.0
  %1958 = vmatprep.subr.mxu0 0.0
  %1959 = vmatpush1.msra.mxu0 0.0
  %1960 = vmatprep.subr.mxu0 0.0
  %1961 = vmatpush1.msra.mxu0 %v41
  %1962 = vmatprep.subr.mxu0 0.0
  %1963 = vmatpush1.msra.mxu0 %v40
  %1964 = vmatprep.subr.mxu0 0.0
  %1965 = vmatpush1.msra.mxu0 %v39
  %1966 = vmatprep.subr.mxu0 0.0
  %1967 = vmatpush1.msra.mxu0 %v38
  %1968 = vmatprep.subr.mxu0 0.0
  %1969 = vmatpush2.msra.mxu0 0.0
  %1970 = vmatprep.subr.mxu0 0.0
  %1971 = vmatpush2.msra.mxu0 0.0
  %1972 = vmatprep.subr.mxu0 0.0
  %1973 = vmatpush2.msra.mxu0 0.0
  %1974 = vmatprep.subr.mxu0 0.0
  %1975 = vmatpush2.msra.mxu0 0.0
  %1976 = vmatprep.subr.mxu0 0.0
  %1977 = vmatpush2.msra.mxu0 0.0
  %1978 = vmatprep.subr.mxu0 0.0
  %1979 = vmatpush2.msra.mxu0 0.0
  %1980 = vmatprep.subr.mxu0 0.0
  %1981 = vmatpush2.msra.mxu0 0.0
  %1982 = vmatprep.subr.mxu0 0.0
  %1983 = vmatpush2.msra.mxu0 0.0
  %1984 = vmatprep.subr.mxu0 0.0
  %1985 = vmatpush2.msra.mxu0 0.0
  %1986 = vmatprep.subr.mxu0 0.0
  %1987 = vmatpush2.msra.mxu0 0.0
  %1988 = vmatprep.subr.mxu0 0.0
  %1989 = vmatpush2.msra.mxu0 0.0
  %1990 = vmatprep.subr.mxu0 0.0
  %1991 = vmatpush2.msra.mxu0 0.0
  %1992 = vmatprep.subr.mxu0 0.0
  %1993 = vmatpush2.msra.mxu0 0.0
  %1994 = vmatprep.subr.mxu0 0.0
  %1995 = vmatpush2.msra.mxu0 0.0
  %1996 = vmatprep.subr.mxu0 0.0
  %1997 = vmatpush2.msra.mxu0 0.0
  %1998 = vmatprep.subr.mxu0 0.0
  %1999 = vmatpush2.msra.mxu0 0.0
  %2000 = vmatprep.mubr.f32.mxu0 0.0
  %2001 = vmatmul.mubr.f32.gmra.mxu0 %v1864
  %v2002 = vpop.f32.mrf.mxu0
  %v2003 = vadd.f32 0.0, %v2002
  %v2004 = vpop.f32.mrf.mxu0
  %2005 = vdwg.mxu0
  %2006 = vmatprep.subr.mxu0 0.0
  %2007 = vmatpush1.msra.mxu0 0.0
  %2008 = vmatprep.subr.mxu0 0.0
  %2009 = vmatpush1.msra.mxu0 0.0
  %2010 = vmatprep.subr.mxu0 0.0
  %2011 = vmatpush1.msra.mxu0 0.0
  %2012 = vmatprep.subr.mxu0 0.0
  %2013 = vmatpush1.msra.mxu0 0.0
  %2014 = vmatprep.subr.mxu0 0.0
  %2015 = vmatpush1.msra.mxu0 0.0
  %2016 = vmatprep.subr.mxu0 0.0
  %2017 = vmatpush1.msra.mxu0 0.0
  %2018 = vmatprep.subr.mxu0 0.0
  %2019 = vmatpush1.msra.mxu0 0.0
  %2020 = vmatprep.subr.mxu0 0.0
  %2021 = vmatpush1.msra.mxu0 0.0
  %2022 = vmatprep.subr.mxu0 0.0
  %2023 = vmatpush1.msra.mxu0 0.0
  %2024 = vmatprep.subr.mxu0 0.0
  %2025 = vmatpush1.msra.mxu0 0.0
  %2026 = vmatprep.subr.mxu0 0.0
  %2027 = vmatpush1.msra.mxu0 0.0
  %2028 = vmatprep.subr.mxu0 0.0
  %2029 = vmatpush1.msra.mxu0 0.0
  %2030 = vmatprep.subr.mxu0 0.0
  %2031 = vmatpush1.msra.mxu0 %v46
  %2032 = vmatprep.subr.mxu0 0.0
  %2033 = vmatpush1.msra.mxu0 %v45
  %2034 = vmatprep.subr.mxu0 0.0
  %2035 = vmatpush1.msra.mxu0 %v44
  %2036 = vmatprep.subr.mxu0 0.0
  %2037 = vmatpush1.msra.mxu0 %v43
  %2038 = vmatprep.subr.mxu0 0.0
  %2039 = vmatpush2.msra.mxu0 0.0
  %2040 = vmatprep.subr.mxu0 0.0
  %2041 = vmatpush2.msra.mxu0 0.0
  %2042 = vmatprep.subr.mxu0 0.0
  %2043 = vmatpush2.msra.mxu0 0.0
  %2044 = vmatprep.subr.mxu0 0.0
  %2045 = vmatpush2.msra.mxu0 0.0
  %2046 = vmatprep.subr.mxu0 0.0
  %2047 = vmatpush2.msra.mxu0 0.0
  %2048 = vmatprep.subr.mxu0 0.0
  %2049 = vmatpush2.msra.mxu0 0.0
  %2050 = vmatprep.subr.mxu0 0.0
  %2051 = vmatpush2.msra.mxu0 0.0
  %2052 = vmatprep.subr.mxu0 0.0
  %2053 = vmatpush2.msra.mxu0 0.0
  %2054 = vmatprep.subr.mxu0 0.0
  %2055 = vmatpush2.msra.mxu0 0.0
  %2056 = vmatprep.subr.mxu0 0.0
  %2057 = vmatpush2.msra.mxu0 0.0
  %2058 = vmatprep.subr.mxu0 0.0
  %2059 = vmatpush2.msra.mxu0 0.0
  %2060 = vmatprep.subr.mxu0 0.0
  %2061 = vmatpush2.msra.mxu0 0.0
  %2062 = vmatprep.subr.mxu0 0.0
  %2063 = vmatpush2.msra.mxu0 0.0
  %2064 = vmatprep.subr.mxu0 0.0
  %2065 = vmatpush2.msra.mxu0 0.0
  %2066 = vmatprep.subr.mxu0 0.0
  %2067 = vmatpush2.msra.mxu0 0.0
  %2068 = vmatprep.subr.mxu0 0.0
  %2069 = vmatpush2.msra.mxu0 0.0
  %2070 = vmatprep.mubr.f32.mxu0 0.0
  %2071 = vmatmul.mubr.f32.gmra.mxu0 %v1864
  %v2072 = vpop.f32.mrf.mxu0
  %v2073 = vadd.f32 %v63, %v2072
  %v2074 = vpop.f32.mrf.mxu0
  %2075 = vdwg.mxu0
  %v2076 = vadd.f32 %v205, %v1933
  %v2077 = vxor.u32 %v2076, 2147483648
  %v2078 = vmul.f32 %v2077, 1.442695
  %v2079 = vpow.pop %v2078
  %v2080 = vadd.f32 %v2079, 1.0
  %v2081 = vrcp.pop %v2080
  %v2082 = vmul.f32 1.0, %v2081
  %v2083 = vadd.f32 %v319, %v2003
  %v2084 = vxor.u32 %v2083, 2147483648
  %v2085 = vmul.f32 %v2084, 1.442695
  %v2086 = vpow.pop %v2085
  %v2087 = vadd.f32 %v2086, 1.0
  %v2088 = vrcp.pop %v2087
  %v2089 = vmul.f32 1.0, %v2088
  %v2090 = vmul.f32 %v2082, %v2073
  %v2091 = vadd.f32 %v433, %v2090
  %v2092 = vtanh.pop %v2091
  %v2093 = vsub.f32 1.0, %v2089
  %v2094 = vmul.f32 %v2093, %v2092
  %v2095 = vmul.f32 %v2089, %v1859
  %v2096 = vadd.f32 %v2094, %v2095
  %v2097 = vmax.f32 %v2096, 0.0
  %s2098 = scalar_lea.vmem [#allocation2], 48
  %2099 = vst.msk [vmem:[%s2098] sm:$0xff] %vm441, %v2097
  %v2101 = vsel %vm441, %v2096, 0
  %2103 = vmatprep.subr.mxu0 0.0
  %2104 = vmatpush1.msra.mxu0 0.0
  %2105 = vmatprep.subr.mxu0 0.0
  %2106 = vmatpush1.msra.mxu0 0.0
  %2107 = vmatprep.subr.mxu0 0.0
  %2108 = vmatpush1.msra.mxu0 0.0
  %2109 = vmatprep.subr.mxu0 0.0
  %2110 = vmatpush1.msra.mxu0 0.0
  %2111 = vmatprep.subr.mxu0 0.0
  %2112 = vmatpush1.msra.mxu0 0.0
  %2113 = vmatprep.subr.mxu0 0.0
  %2114 = vmatpush1.msra.mxu0 0.0
  %2115 = vmatprep.subr.mxu0 0.0
  %2116 = vmatpush1.msra.mxu0 0.0
  %2117 = vmatprep.subr.mxu0 0.0
  %2118 = vmatpush1.msra.mxu0 0.0
  %2119 = vmatprep.subr.mxu0 0.0
  %2120 = vmatpush1.msra.mxu0 0.0
  %2121 = vmatprep.subr.mxu0 0.0
  %2122 = vmatpush1.msra.mxu0 0.0
  %2123 = vmatprep.subr.mxu0 0.0
  %2124 = vmatpush1.msra.mxu0 0.0
  %2125 = vmatprep.subr.mxu0 0.0
  %2126 = vmatpush1.msra.mxu0 0.0
  %2127 = vmatprep.subr.mxu0 0.0
  %2128 = vmatpush1.msra.mxu0 %v36
  %2129 = vmatprep.subr.mxu0 0.0
  %2130 = vmatpush1.msra.mxu0 %v35
  %2131 = vmatprep.subr.mxu0 0.0
  %2132 = vmatpush1.msra.mxu0 %v34
  %2133 = vmatprep.subr.mxu0 0.0
  %2134 = vmatpush1.msra.mxu0 %v33
  %2135 = vmatprep.subr.mxu0 0.0
  %2136 = vmatpush2.msra.mxu0 0.0
  %2137 = vmatprep.subr.mxu0 0.0
  %2138 = vmatpush2.msra.mxu0 0.0
  %2139 = vmatprep.subr.mxu0 0.0
  %2140 = vmatpush2.msra.mxu0 0.0
  %2141 = vmatprep.subr.mxu0 0.0
  %2142 = vmatpush2.msra.mxu0 0.0
  %2143 = vmatprep.subr.mxu0 0.0
  %2144 = vmatpush2.msra.mxu0 0.0
  %2145 = vmatprep.subr.mxu0 0.0
  %2146 = vmatpush2.msra.mxu0 0.0
  %2147 = vmatprep.subr.mxu0 0.0
  %2148 = vmatpush2.msra.mxu0 0.0
  %2149 = vmatprep.subr.mxu0 0.0
  %2150 = vmatpush2.msra.mxu0 0.0
  %2151 = vmatprep.subr.mxu0 0.0
  %2152 = vmatpush2.msra.mxu0 0.0
  %2153 = vmatprep.subr.mxu0 0.0
  %2154 = vmatpush2.msra.mxu0 0.0
  %2155 = vmatprep.subr.mxu0 0.0
  %2156 = vmatpush2.msra.mxu0 0.0
  %2157 = vmatprep.subr.mxu0 0.0
  %2158 = vmatpush2.msra.mxu0 0.0
  %2159 = vmatprep.subr.mxu0 0.0
  %2160 = vmatpush2.msra.mxu0 0.0
  %2161 = vmatprep.subr.mxu0 0.0
  %2162 = vmatpush2.msra.mxu0 0.0
  %2163 = vmatprep.subr.mxu0 0.0
  %2164 = vmatpush2.msra.mxu0 0.0
  %2165 = vmatprep.subr.mxu0 0.0
  %2166 = vmatpush2.msra.mxu0 0.0
  %2167 = vmatprep.mubr.f32.mxu0 0.0
  %2168 = vmatmul.mubr.f32.gmra.mxu0 %v2101
  %v2169 = vpop.f32.mrf.mxu0
  %v2170 = vadd.f32 0.0, %v2169
  %v2171 = vpop.f32.mrf.mxu0
  %2172 = vdwg.mxu0
  %2173 = vmatprep.subr.mxu0 0.0
  %2174 = vmatpush1.msra.mxu0 0.0
  %2175 = vmatprep.subr.mxu0 0.0
  %2176 = vmatpush1.msra.mxu0 0.0
  %2177 = vmatprep.subr.mxu0 0.0
  %2178 = vmatpush1.msra.mxu0 0.0
  %2179 = vmatprep.subr.mxu0 0.0
  %2180 = vmatpush1.msra.mxu0 0.0
  %2181 = vmatprep.subr.mxu0 0.0
  %2182 = vmatpush1.msra.mxu0 0.0
  %2183 = vmatprep.subr.mxu0 0.0
  %2184 = vmatpush1.msra.mxu0 0.0
  %2185 = vmatprep.subr.mxu0 0.0
  %2186 = vmatpush1.msra.mxu0 0.0
  %2187 = vmatprep.subr.mxu0 0.0
  %2188 = vmatpush1.msra.mxu0 0.0
  %2189 = vmatprep.subr.mxu0 0.0
  %2190 = vmatpush1.msra.mxu0 0.0
  %2191 = vmatprep.subr.mxu0 0.0
  %2192 = vmatpush1.msra.mxu0 0.0
  %2193 = vmatprep.subr.mxu0 0.0
  %2194 = vmatpush1.msra.mxu0 0.0
  %2195 = vmatprep.subr.mxu0 0.0
  %2196 = vmatpush1.msra.mxu0 0.0
  %2197 = vmatprep.subr.mxu0 0.0
  %2198 = vmatpush1.msra.mxu0 %v41
  %2199 = vmatprep.subr.mxu0 0.0
  %2200 = vmatpush1.msra.mxu0 %v40
  %2201 = vmatprep.subr.mxu0 0.0
  %2202 = vmatpush1.msra.mxu0 %v39
  %2203 = vmatprep.subr.mxu0 0.0
  %2204 = vmatpush1.msra.mxu0 %v38
  %2205 = vmatprep.subr.mxu0 0.0
  %2206 = vmatpush2.msra.mxu0 0.0
  %2207 = vmatprep.subr.mxu0 0.0
  %2208 = vmatpush2.msra.mxu0 0.0
  %2209 = vmatprep.subr.mxu0 0.0
  %2210 = vmatpush2.msra.mxu0 0.0
  %2211 = vmatprep.subr.mxu0 0.0
  %2212 = vmatpush2.msra.mxu0 0.0
  %2213 = vmatprep.subr.mxu0 0.0
  %2214 = vmatpush2.msra.mxu0 0.0
  %2215 = vmatprep.subr.mxu0 0.0
  %2216 = vmatpush2.msra.mxu0 0.0
  %2217 = vmatprep.subr.mxu0 0.0
  %2218 = vmatpush2.msra.mxu0 0.0
  %2219 = vmatprep.subr.mxu0 0.0
  %2220 = vmatpush2.msra.mxu0 0.0
  %2221 = vmatprep.subr.mxu0 0.0
  %2222 = vmatpush2.msra.mxu0 0.0
  %2223 = vmatprep.subr.mxu0 0.0
  %2224 = vmatpush2.msra.mxu0 0.0
  %2225 = vmatprep.subr.mxu0 0.0
  %2226 = vmatpush2.msra.mxu0 0.0
  %2227 = vmatprep.subr.mxu0 0.0
  %2228 = vmatpush2.msra.mxu0 0.0
  %2229 = vmatprep.subr.mxu0 0.0
  %2230 = vmatpush2.msra.mxu0 0.0
  %2231 = vmatprep.subr.mxu0 0.0
  %2232 = vmatpush2.msra.mxu0 0.0
  %2233 = vmatprep.subr.mxu0 0.0
  %2234 = vmatpush2.msra.mxu0 0.0
  %2235 = vmatprep.subr.mxu0 0.0
  %2236 = vmatpush2.msra.mxu0 0.0
  %2237 = vmatprep.mubr.f32.mxu0 0.0
  %2238 = vmatmul.mubr.f32.gmra.mxu0 %v2101
  %v2239 = vpop.f32.mrf.mxu0
  %v2240 = vadd.f32 0.0, %v2239
  %v2241 = vpop.f32.mrf.mxu0
  %2242 = vdwg.mxu0
  %2243 = vmatprep.subr.mxu0 0.0
  %2244 = vmatpush1.msra.mxu0 0.0
  %2245 = vmatprep.subr.mxu0 0.0
  %2246 = vmatpush1.msra.mxu0 0.0
  %2247 = vmatprep.subr.mxu0 0.0
  %2248 = vmatpush1.msra.mxu0 0.0
  %2249 = vmatprep.subr.mxu0 0.0
  %2250 = vmatpush1.msra.mxu0 0.0
  %2251 = vmatprep.subr.mxu0 0.0
  %2252 = vmatpush1.msra.mxu0 0.0
  %2253 = vmatprep.subr.mxu0 0.0
  %2254 = vmatpush1.msra.mxu0 0.0
  %2255 = vmatprep.subr.mxu0 0.0
  %2256 = vmatpush1.msra.mxu0 0.0
  %2257 = vmatprep.subr.mxu0 0.0
  %2258 = vmatpush1.msra.mxu0 0.0
  %2259 = vmatprep.subr.mxu0 0.0
  %2260 = vmatpush1.msra.mxu0 0.0
  %2261 = vmatprep.subr.mxu0 0.0
  %2262 = vmatpush1.msra.mxu0 0.0
  %2263 = vmatprep.subr.mxu0 0.0
  %2264 = vmatpush1.msra.mxu0 0.0
  %2265 = vmatprep.subr.mxu0 0.0
  %2266 = vmatpush1.msra.mxu0 0.0
  %2267 = vmatprep.subr.mxu0 0.0
  %2268 = vmatpush1.msra.mxu0 %v46
  %2269 = vmatprep.subr.mxu0 0.0
  %2270 = vmatpush1.msra.mxu0 %v45
  %2271 = vmatprep.subr.mxu0 0.0
  %2272 = vmatpush1.msra.mxu0 %v44
  %2273 = vmatprep.subr.mxu0 0.0
  %2274 = vmatpush1.msra.mxu0 %v43
  %2275 = vmatprep.subr.mxu0 0.0
  %2276 = vmatpush2.msra.mxu0 0.0
  %2277 = vmatprep.subr.mxu0 0.0
  %2278 = vmatpush2.msra.mxu0 0.0
  %2279 = vmatprep.subr.mxu0 0.0
  %2280 = vmatpush2.msra.mxu0 0.0
  %2281 = vmatprep.subr.mxu0 0.0
  %2282 = vmatpush2.msra.mxu0 0.0
  %2283 = vmatprep.subr.mxu0 0.0
  %2284 = vmatpush2.msra.mxu0 0.0
  %2285 = vmatprep.subr.mxu0 0.0
  %2286 = vmatpush2.msra.mxu0 0.0
  %2287 = vmatprep.subr.mxu0 0.0
  %2288 = vmatpush2.msra.mxu0 0.0
  %2289 = vmatprep.subr.mxu0 0.0
  %2290 = vmatpush2.msra.mxu0 0.0
  %2291 = vmatprep.subr.mxu0 0.0
  %2292 = vmatpush2.msra.mxu0 0.0
  %2293 = vmatprep.subr.mxu0 0.0
  %2294 = vmatpush2.msra.mxu0 0.0
  %2295 = vmatprep.subr.mxu0 0.0
  %2296 = vmatpush2.msra.mxu0 0.0
  %2297 = vmatprep.subr.mxu0 0.0
  %2298 = vmatpush2.msra.mxu0 0.0
  %2299 = vmatprep.subr.mxu0 0.0
  %2300 = vmatpush2.msra.mxu0 0.0
  %2301 = vmatprep.subr.mxu0 0.0
  %2302 = vmatpush2.msra.mxu0 0.0
  %2303 = vmatprep.subr.mxu0 0.0
  %2304 = vmatpush2.msra.mxu0 0.0
  %2305 = vmatprep.subr.mxu0 0.0
  %2306 = vmatpush2.msra.mxu0 0.0
  %2307 = vmatprep.mubr.f32.mxu0 0.0
  %2308 = vmatmul.mubr.f32.gmra.mxu0 %v2101
  %v2309 = vpop.f32.mrf.mxu0
  %v2310 = vadd.f32 %v63, %v2309
  %v2311 = vpop.f32.mrf.mxu0
  %2312 = vdwg.mxu0
  %v2313 = vadd.f32 %v210, %v2170
  %v2314 = vxor.u32 %v2313, 2147483648
  %v2315 = vmul.f32 %v2314, 1.442695
  %v2316 = vpow.pop %v2315
  %v2317 = vadd.f32 %v2316, 1.0
  %v2318 = vrcp.pop %v2317
  %v2319 = vmul.f32 1.0, %v2318
  %v2320 = vadd.f32 %v324, %v2240
  %v2321 = vxor.u32 %v2320, 2147483648
  %v2322 = vmul.f32 %v2321, 1.442695
  %v2323 = vpow.pop %v2322
  %v2324 = vadd.f32 %v2323, 1.0
  %v2325 = vrcp.pop %v2324
  %v2326 = vmul.f32 1.0, %v2325
  %v2327 = vmul.f32 %v2319, %v2310
  %v2328 = vadd.f32 %v438, %v2327
  %v2329 = vtanh.pop %v2328
  %v2330 = vsub.f32 1.0, %v2326
  %v2331 = vmul.f32 %v2330, %v2329
  %v2332 = vmul.f32 %v2326, %v2096
  %v2333 = vadd.f32 %v2331, %v2332
  %v2334 = vmax.f32 %v2333, 0.0
  %s2335 = scalar_lea.vmem [#allocation2], 56
  %2336 = vst.msk [vmem:[%s2335] sm:$0xff] %vm441, %v2334
  %2337 = vst.msk [vmem:[%s8] sm:$0xff] %vm441, %v2333
  %v2338 = vld [vmem:[#allocation2] sm:$0xff]
  %v2339 = vld [vmem:[#allocation2 + $0x8] sm:$0xff]
  %v2340 = vld [vmem:[#allocation2 + $0x10] sm:$0xff]
  %v2341 = vld [vmem:[#allocation2 + $0x18] sm:$0xff]
  %v2342 = vld [vmem:[#allocation2 + $0x20] sm:$0xff]
  %v2343 = vld [vmem:[#allocation2 + $0x28] sm:$0xff]
  %v2344 = vld [vmem:[#allocation2 + $0x30] sm:$0xff]
  %v2345 = vld [vmem:[#allocation2 + $0x38] sm:$0xff]
  %v2346 = vld [vmem:[%s5] sm:$0xff]
  %v2347 = vld [vmem:[%s5 + $0x8] sm:$0xff]
  %v2348 = vld [vmem:[%s5 + $0x10] sm:$0xff]
  %v2349 = vld [vmem:[%s5 + $0x18] sm:$0xff]
  %v2350 = vld [vmem:[%s6] sm:$0x1]
  %v2352 = vlaneseq
  %v2353 = vshrl.u32 %v2352, 7
  %v2354 = vsub.s32 0, %v2353
  %v2355 = vrot.slane %v2350, %v2354
  %v2358 = vsel %vm441, %v2338, 0
  %v2361 = vsel %vm441, %v2339, 0
  %v2364 = vsel %vm441, %v2340, 0
  %v2367 = vsel %vm441, %v2341, 0
  %v2370 = vsel %vm441, %v2342, 0
  %v2373 = vsel %vm441, %v2343, 0
  %v2376 = vsel %vm441, %v2344, 0
  %v2379 = vsel %vm441, %v2345, 0
  %2381 = vmatprep.subr.mxu0 0.0
  %2382 = vmatpush1.msra.mxu0 0.0
  %2383 = vmatprep.subr.mxu0 0.0
  %2384 = vmatpush1.msra.mxu0 0.0
  %2385 = vmatprep.subr.mxu0 0.0
  %2386 = vmatpush1.msra.mxu0 0.0
  %2387 = vmatprep.subr.mxu0 0.0
  %2388 = vmatpush1.msra.mxu0 0.0
  %2389 = vmatprep.subr.mxu0 0.0
  %2390 = vmatpush1.msra.mxu0 0.0
  %2391 = vmatprep.subr.mxu0 0.0
  %2392 = vmatpush1.msra.mxu0 0.0
  %2393 = vmatprep.subr.mxu0 0.0
  %2394 = vmatpush1.msra.mxu0 0.0
  %2395 = vmatprep.subr.mxu0 0.0
  %2396 = vmatpush1.msra.mxu0 0.0
  %2397 = vmatprep.subr.mxu0 0.0
  %2398 = vmatpush1.msra.mxu0 0.0
  %2399 = vmatprep.subr.mxu0 0.0
  %2400 = vmatpush1.msra.mxu0 0.0
  %2401 = vmatprep.subr.mxu0 0.0
  %2402 = vmatpush1.msra.mxu0 0.0
  %2403 = vmatprep.subr.mxu0 0.0
  %2404 = vmatpush1.msra.mxu0 0.0
  %2405 = vmatprep.subr.mxu0 0.0
  %2406 = vmatpush1.msra.mxu0 %v2349
  %2407 = vmatprep.subr.mxu0 0.0
  %2408 = vmatpush1.msra.mxu0 %v2348
  %2409 = vmatprep.subr.mxu0 0.0
  %2410 = vmatpush1.msra.mxu0 %v2347
  %2411 = vmatprep.subr.mxu0 0.0
  %2412 = vmatpush1.msra.mxu0 %v2346
  %2413 = vmatprep.subr.mxu0 0.0
  %2414 = vmatpush2.msra.mxu0 0.0
  %2415 = vmatprep.subr.mxu0 0.0
  %2416 = vmatpush2.msra.mxu0 0.0
  %2417 = vmatprep.subr.mxu0 0.0
  %2418 = vmatpush2.msra.mxu0 0.0
  %2419 = vmatprep.subr.mxu0 0.0
  %2420 = vmatpush2.msra.mxu0 0.0
  %2421 = vmatprep.subr.mxu0 0.0
  %2422 = vmatpush2.msra.mxu0 0.0
  %2423 = vmatprep.subr.mxu0 0.0
  %2424 = vmatpush2.msra.mxu0 0.0
  %2425 = vmatprep.subr.mxu0 0.0
  %2426 = vmatpush2.msra.mxu0 0.0
  %2427 = vmatprep.subr.mxu0 0.0
  %2428 = vmatpush2.msra.mxu0 0.0
  %2429 = vmatprep.subr.mxu0 0.0
  %2430 = vmatpush2.msra.mxu0 0.0
  %2431 = vmatprep.subr.mxu0 0.0
  %2432 = vmatpush2.msra.mxu0 0.0
  %2433 = vmatprep.subr.mxu0 0.0
  %2434 = vmatpush2.msra.mxu0 0.0
  %2435 = vmatprep.subr.mxu0 0.0
  %2436 = vmatpush2.msra.mxu0 0.0
  %2437 = vmatprep.subr.mxu0 0.0
  %2438 = vmatpush2.msra.mxu0 0.0
  %2439 = vmatprep.subr.mxu0 0.0
  %2440 = vmatpush2.msra.mxu0 0.0
  %2441 = vmatprep.subr.mxu0 0.0
  %2442 = vmatpush2.msra.mxu0 0.0
  %2443 = vmatprep.subr.mxu0 0.0
  %2444 = vmatpush2.msra.mxu0 0.0
  %2445 = vmatprep.mubr.f32.mxu0 0.0
  %2446 = vmatmul.mubr.f32.gmra.mxu0 %v2358
  %v2447 = vpop.f32.mrf.mxu0
  %v2448 = vadd.f32 %v2355, %v2447
  %v2449 = vpop.f32.mrf.mxu0
  %2450 = vmatprep.mubr.f32.mxu0 0.0
  %2451 = vmatmul.mubr.f32.gmra.mxu0 %v2361
  %v2452 = vpop.f32.mrf.mxu0
  %v2453 = vadd.f32 %v2355, %v2452
  %v2454 = vpop.f32.mrf.mxu0
  %2455 = vmatprep.mubr.f32.mxu0 0.0
  %2456 = vmatmul.mubr.f32.gmra.mxu0 %v2364
  %v2457 = vpop.f32.mrf.mxu0
  %v2458 = vadd.f32 %v2355, %v2457
  %v2459 = vpop.f32.mrf.mxu0
  %2460 = vmatprep.mubr.f32.mxu0 0.0
  %2461 = vmatmul.mubr.f32.gmra.mxu0 %v2367
  %v2462 = vpop.f32.mrf.mxu0
  %v2463 = vadd.f32 %v2355, %v2462
  %v2464 = vpop.f32.mrf.mxu0
  %2465 = vmatprep.mubr.f32.mxu0 0.0
  %2466 = vmatmul.mubr.f32.gmra.mxu0 %v2370
  %v2467 = vpop.f32.mrf.mxu0
  %v2468 = vadd.f32 %v2355, %v2467
  %v2469 = vpop.f32.mrf.mxu0
  %2470 = vmatprep.mubr.f32.mxu0 0.0
  %2471 = vmatmul.mubr.f32.gmra.mxu0 %v2373
  %v2472 = vpop.f32.mrf.mxu0
  %v2473 = vadd.f32 %v2355, %v2472
  %v2474 = vpop.f32.mrf.mxu0
  %2475 = vmatprep.mubr.f32.mxu0 0.0
  %2476 = vmatmul.mubr.f32.gmra.mxu0 %v2376
  %v2477 = vpop.f32.mrf.mxu0
  %v2478 = vadd.f32 %v2355, %v2477
  %v2479 = vpop.f32.mrf.mxu0
  %2480 = vmatprep.mubr.f32.mxu0 0.0
  %2481 = vmatmul.mubr.f32.gmra.mxu0 %v2379
  %v2482 = vpop.f32.mrf.mxu0
  %v2483 = vadd.f32 %v2355, %v2482
  %v2484 = vpop.f32.mrf.mxu0
  %2485 = vdwg.mxu0
  %2486 = vst [vmem:[%s7] sm:$0xff] %v2448
  %2487 = vst [vmem:[%s7 + $0x8] sm:$0xff] %v2453
  %2488 = vst [vmem:[%s7 + $0x10] sm:$0xff] %v2458
  %2489 = vst [vmem:[%s7 + $0x18] sm:$0xff] %v2463
  %2490 = vst [vmem:[%s7 + $0x20] sm:$0xff] %v2468
  %2491 = vst [vmem:[%s7 + $0x28] sm:$0xff] %v2473
  %2492 = vst [vmem:[%s7 + $0x30] sm:$0xff] %v2478
  %2493 = vst [vmem:[%s7 + $0x38] sm:$0xff] %v2483
  // Predicated region
  $region30: #{recovery_net_forward.1} parent=0 // pred_check
    _
  $region31: #{recovery_net_forward.1} parent=0 // pred_check_branch
    %2495 = sbr.rel (0) target = $region33
  $region32: #{recovery_net_forward.1} parent=0 // pred_region
    _
  $region33: #{recovery_net_forward.1} parent=0 // pred_fallthru
    _
  // Predicated region
  $region34: #{recovery_net_forward.1} parent=0 // pred_check
    _
  $region35: #{recovery_net_forward.1} parent=0 // pred_check_branch
    %2497 = sbr.rel (0) target = $region37
  $region36: #{recovery_net_forward.1} parent=0 // pred_region
    _
  $region37: #{recovery_net_forward.1} parent=0 // pred_fallthru
    _
  // Predicated region
  $region38: #{recovery_net_forward.1} parent=0 // pred_check
    _
  $region39: #{recovery_net_forward.1} parent=0 // pred_check_branch
    %2499 = sbr.rel (0) target = $region41
  $region40: #{recovery_net_forward.1} parent=0 // pred_region
    _
  $region41: #{recovery_net_forward.1} parent=0 // pred_fallthru
    _
  // Predicated region
  $region42: #{recovery_net_forward.1} parent=0 // pred_check
    _
  $region43: #{recovery_net_forward.1} parent=0 // pred_check_branch
    %2501 = sbr.rel (0) target = $region45
  $region44: #{recovery_net_forward.1} parent=0 // pred_region
    _
  $region45: #{recovery_net_forward.1} parent=0 // pred_fallthru
    _

</llo_original>
